<compile_context>
chip_gen: v7x
topology: tpu7x:2x2x1
jax: 0.10.0
libtpu: 0.0.40
codegen_flags: <defaults>
</compile_context>

<pallas_src>
import jax
import jax.numpy as jnp
from jax import lax
from jax.experimental import pallas as pl
from jax.experimental.pallas import tpu as pltpu


def crf_kernel(em_ref, tags_ref, start_ref, trans_ref, end_ref, out_ref):
    """One batch tile.

    em_ref:    (T, K, TB) emissions (any float dtype; upcast here).
    tags_ref:  (T, TB) int32 gold tags.
    start_ref: (K, 1) ; end_ref: (K, 1) ; trans_ref: (K, K) [prev, cur].
    out_ref:   (1, 1, TB) -- per-batch (log Z_b - gold_score_b).
    """
    T, K, TB = em_ref.shape

    start = start_ref[...]                                      # (K, 1)
    trans = trans_ref[...]                                      # (K, K)
    end = end_ref[...]                                          # (K, 1)

    # ---- loop-invariant hoists (JAX does not CSE broadcast_in_dim) ---------
    iota_k = lax.broadcasted_iota(jnp.int32, (K, TB), 0)        # (K, TB)
    trans_t = jnp.transpose(trans)                              # (cur, prev)
    trans3 = jnp.broadcast_to(trans[:, :, None], (K, K, TB))    # (prev,cur,lane)

    def onehot(t):
        row = tags_ref[pl.ds(t, 1), :]                          # (1, TB) i32
        return (row == iota_k).astype(jnp.float32)              # (K, TB)

    # ---- t = 0 --------------------------------------------------------------
    e0 = em_ref[0].astype(jnp.float32)                          # (K, TB)
    oh0 = onehot(0)                                             # (K, TB)
    numv0 = oh0 * (start + e0)                                  # (K, TB) gold acc
    score0 = start + e0                                         # (K, TB)

    # ---- fused time loop: gold-path score + forward (logsumexp) recursion ---
    def body(t, carry):
        score, numv, oh_prev = carry
        e_t = em_ref[t].astype(jnp.float32)                     # (K, TB)
        oh_t = onehot(t)                                        # (K, TB)

        # gold path: transitions[tags[t-1], tags[t]] + emissions[t, tags[t]]
        # row[cur, b] = trans[tags[t-1, b], cur]   (MXU contraction)
        row = jnp.dot(trans_t, oh_prev,
                      precision=lax.Precision.HIGHEST,
                      preferred_element_type=jnp.float32)       # (K, TB)
        numv = numv + oh_t * (row + e_t)                        # (K, TB)

        # forward recursion: logsumexp over previous tag (axis 0); reductions
        # hit the sublane axis -> XLU work overlapping the VPU exp/add stream.
        b3 = score[:, None, :] + trans3                         # (Kprev,Kcur,TB)
        m = jnp.max(b3, axis=0)                                 # (Kcur, TB)
        lse = m + jnp.log(jnp.sum(jnp.exp(b3 - m[None, :, :]), axis=0))
        score = lse + e_t                                       # (K, TB)
        return score, numv, oh_t

    unroll = True if T <= 32 else 8
    score, numv, oh_last = lax.fori_loop(1, T, body, (score0, numv0, oh0),
                                         unroll=unroll)

    # gold end transitions, then a single cross-sublane reduction.
    numv = numv + oh_last * end                                 # (K, TB)
    num = jnp.sum(numv, axis=0, keepdims=True)                  # (1, TB)

    # log partition
    final = score + end                                         # (K, TB)
    m = jnp.max(final, axis=0, keepdims=True)                   # (1, TB)
    den = m + jnp.log(jnp.sum(jnp.exp(final - m), axis=0, keepdims=True))

    out_ref[0] = den - num                                      # (1, TB)


def crf_model_forward(emissions, tags, start_trans, transitions, end_trans,
                      *, batch_tile=None):
    """Returns -CRF(features, tags_true), a scalar float32.

    emissions: (T, B, K) float (f32 or bf16 -- upcast happens per-tile in the
    kernel, so bf16 inputs halve the HBM->VMEM DMA traffic).
    tags: (T, B) int.
    """
    T, B, K = emissions.shape

    if batch_tile is None:
        # small batches: one lane-resident tile; large batches: 128-lane tiles.
        batch_tile = B if B <= 128 else 128
    nb = pl.cdiv(B, batch_tile)
    B_pad = nb * batch_tile

    # batch-last, lane-dense layout: (T, K, B)
    em = jnp.transpose(emissions, (0, 2, 1))
    tg = tags.astype(jnp.int32)
    if B_pad != B:
        em = jnp.pad(em, ((0, 0), (0, 0), (0, B_pad - B)))
        tg = jnp.pad(tg, ((0, 0), (0, B_pad - B)))

    start2 = start_trans.reshape(K, 1).astype(jnp.float32)
    end2 = end_trans.reshape(K, 1).astype(jnp.float32)
    trans2 = transitions.astype(jnp.float32)

    per_batch = pl.pallas_call(
        crf_kernel,
        out_shape=jax.ShapeDtypeStruct((nb, 1, batch_tile), jnp.float32),
        grid=(nb,),
        in_specs=[
            pl.BlockSpec((T, K, batch_tile), lambda b: (0, 0, b)),   # emissions
            pl.BlockSpec((T, batch_tile), lambda b: (0, b)),         # tags
            pl.BlockSpec((K, 1), lambda b: (0, 0)),                  # start
            pl.BlockSpec((K, K), lambda b: (0, 0)),                  # transitions
            pl.BlockSpec((K, 1), lambda b: (0, 0)),                  # end
        ],
        out_specs=pl.BlockSpec((1, 1, batch_tile), lambda b: (b, 0, 0)),
        compiler_params=pltpu.CompilerParams(
            dimension_semantics=("parallel",)),
    )(em, tg, start2, trans2, end2)

    # partial per-batch (log Z_b - gold_b); drop padding, reduce outside.
    per_batch = per_batch.reshape(B_pad)[:B]
    return jnp.sum(per_batch)


def crf_reference(emissions, tags, start_trans, transitions, end_trans):
    """Pure-JAX reference (torchcrf semantics, mask=None, reduction='sum')."""
    T, B, K = emissions.shape
    bidx = jnp.arange(B)

    # numerator
    num = start_trans[tags[0]] + emissions[0, bidx, tags[0]]
    for t in range(1, T):
        num = num + transitions[tags[t - 1], tags[t]] + emissions[t, bidx, tags[t]]
    num = num + end_trans[tags[T - 1]]

    # denominator
    score = start_trans[None, :] + emissions[0]
    for t in range(1, T):
        b = score[:, :, None] + transitions[None, :, :] + emissions[t][:, None, :]
        score = jax.scipy.special.logsumexp(b, axis=1)
    den = jax.scipy.special.logsumexp(score + end_trans[None, :], axis=-1)

    return -jnp.sum(num - den)


if __name__ == "__main__":
    T, B, K = 8, 8, 8  # seq_len, batch, num_tags

    key = jax.random.PRNGKey(0)
    k_em, k_tags, k_s, k_t, k_e = jax.random.split(key, 5)

    features = jax.random.normal(k_em, (T, B, K), dtype=jnp.float32)
    tags_true = jax.random.randint(k_tags, (T, B), 0, K, dtype=jnp.int32)

    # CRF parameters (torchcrf inits uniform(-0.1, 0.1))
    start_transitions = jax.random.uniform(k_s, (K,), jnp.float32, -0.1, 0.1)
    transitions = jax.random.uniform(k_t, (K, K), jnp.float32, -0.1, 0.1)
    end_transitions = jax.random.uniform(k_e, (K,), jnp.float32, -0.1, 0.1)

    out = crf_model_forward(features, tags_true, start_transitions,
                            transitions, end_transitions)
    out = jax.block_until_ready(out)

    ref = crf_reference(features, tags_true, start_transitions,
                        transitions, end_transitions)
    assert jnp.allclose(out, ref, atol=1e-3, rtol=1e-4), (out, ref)

    print("KERNEL_OK")
</pallas_src>

<mosaic_0001>
module attributes {stable_mosaic.version = 11 : i64} {
  func.func @crf_kernel(%arg0: i32, %arg1: memref<8x8x8xf32, #tpu.memory_space<vmem>>, %arg2: memref<8x8xi32, #tpu.memory_space<vmem>>, %arg3: memref<8x1xf32, #tpu.memory_space<vmem>>, %arg4: memref<8x8xf32, #tpu.memory_space<vmem>>, %arg5: memref<8x1xf32, #tpu.memory_space<vmem>>, %arg6: memref<1x1x8xf32, #tpu.memory_space<vmem>>) attributes {dimension_semantics = [#tpu.dimension_semantics<parallel>], iteration_bounds = array<i64: 1>, scalar_prefetch = 0 : i64, scratch_operands = 0 : i64, tpu.core_type = #tpu.core_type<tc>, window_params = [{transform_indices = @transform_0, window_bounds = array<i64: 8, 8, 8>}, {transform_indices = @transform_1, window_bounds = array<i64: 8, 8>}, {pipeline_mode = #tpu.pipeline_mode<synchronous>, transform_indices = @transform_2, window_bounds = array<i64: 8, 1>}, {pipeline_mode = #tpu.pipeline_mode<synchronous>, transform_indices = @transform_3, window_bounds = array<i64: 8, 8>}, {pipeline_mode = #tpu.pipeline_mode<synchronous>, transform_indices = @transform_4, window_bounds = array<i64: 8, 1>}, {transform_indices = @transform_5, window_bounds = array<i64: 1, 1, 8>}]} {
    %c0 = arith.constant 0 : index
    %c0_0 = arith.constant 0 : index
    %0 = vector.load %arg3[%c0, %c0_0] : memref<8x1xf32, #tpu.memory_space<vmem>>, vector<8x1xf32>
    %c0_1 = arith.constant 0 : index
    %c0_2 = arith.constant 0 : index
    %1 = vector.load %arg4[%c0_1, %c0_2] : memref<8x8xf32, #tpu.memory_space<vmem>>, vector<8x8xf32>
    %c0_3 = arith.constant 0 : index
    %c0_4 = arith.constant 0 : index
    %2 = vector.load %arg5[%c0_3, %c0_4] : memref<8x1xf32, #tpu.memory_space<vmem>>, vector<8x1xf32>
    %3 = tpu.iota {dimensions = array<i32: 0>} : vector<8x8xi32>
    %4 = tpu.transpose %1, [1, 0] : vector<8x8xf32> -> vector<8x8xf32>
    %5 = vector.shape_cast %1 : vector<8x8xf32> to vector<8x8x1xf32>
    %6 = vector.shape_cast %5 : vector<8x8x1xf32> to vector<8x8x1xf32>
    %7 = vector.broadcast %6 : vector<8x8x1xf32> to vector<8x8x8xf32>
    %c0_5 = arith.constant 0 : index
    %c0_6 = arith.constant 0 : index
    %c0_7 = arith.constant 0 : index
    %8 = vector.load %arg1[%c0_5, %c0_6, %c0_7] : memref<8x8x8xf32, #tpu.memory_space<vmem>>, vector<1x8x8xf32>
    %9 = vector.shape_cast %8 : vector<1x8x8xf32> to vector<8x8xf32>
    %c0_8 = arith.constant 0 : index
    %c0_9 = arith.constant 0 : index
    %10 = vector.load %arg2[%c0_8, %c0_9] : memref<8x8xi32, #tpu.memory_space<vmem>>, vector<1x8xi32>
    %11 = vector.broadcast %10 : vector<1x8xi32> to vector<8x8xi32>
    %12 = arith.cmpi eq, %11, %3 : vector<8x8xi32>
    %13 = arith.extui %12 : vector<8x8xi1> to vector<8x8xi32>
    %14 = arith.sitofp %13 : vector<8x8xi32> to vector<8x8xf32>
    %15 = vector.broadcast %0 : vector<8x1xf32> to vector<8x8xf32>
    %16 = arith.addf %15, %9 : vector<8x8xf32>
    %17 = arith.mulf %14, %16 : vector<8x8xf32>
    %18 = vector.broadcast %0 : vector<8x1xf32> to vector<8x8xf32>
    %19 = arith.addf %18, %9 : vector<8x8xf32>
    %c1_i32 = arith.constant 1 : i32
    %20 = arith.index_cast %c1_i32 : i32 to index
    %c0_10 = arith.constant 0 : index
    %c0_11 = arith.constant 0 : index
    %21 = vector.load %arg1[%20, %c0_10, %c0_11] : memref<8x8x8xf32, #tpu.memory_space<vmem>>, vector<1x8x8xf32>
    %22 = vector.shape_cast %21 : vector<1x8x8xf32> to vector<8x8xf32>
    %23 = arith.index_cast %c1_i32 : i32 to index
    %c0_12 = arith.constant 0 : index
    %24 = vector.load %arg2[%23, %c0_12] : memref<8x8xi32, #tpu.memory_space<vmem>>, vector<1x8xi32>
    %25 = vector.broadcast %24 : vector<1x8xi32> to vector<8x8xi32>
    %26 = arith.cmpi eq, %25, %3 : vector<8x8xi32>
    %27 = arith.extui %26 : vector<8x8xi1> to vector<8x8xi32>
    %28 = arith.sitofp %27 : vector<8x8xi32> to vector<8x8xf32>
    %cst = arith.constant dense<0.000000e+00> : vector<8x8xf32>
    %29 = tpu.matmul %4, %14, %cst {dimension_numbers = #tpu.dot_dimension_numbers<[1], [0], [0], [1], [0, 0, 1, 1], [], []>, precision = #tpu.contract_precision<fp32>} : vector<8x8xf32>, vector<8x8xf32>, vector<8x8xf32> -> vector<8x8xf32>
    %30 = arith.addf %29, %22 : vector<8x8xf32>
    %31 = arith.mulf %28, %30 : vector<8x8xf32>
    %32 = arith.addf %17, %31 : vector<8x8xf32>
    %33 = vector.shape_cast %19 : vector<8x8xf32> to vector<8x1x8xf32>
    %34 = vector.broadcast %33 : vector<8x1x8xf32> to vector<8x8x8xf32>
    %35 = arith.addf %34, %7 : vector<8x8x8xf32>
    %cst_13 = arith.constant dense<0xFF800000> : vector<8x8xf32>
    %36 = vector.multi_reduction <maximumf>, %35, %cst_13 [0] : vector<8x8x8xf32> to vector<8x8xf32>
    %37 = vector.shape_cast %36 : vector<8x8xf32> to vector<1x8x8xf32>
    %38 = vector.broadcast %37 : vector<1x8x8xf32> to vector<8x8x8xf32>
    %39 = arith.subf %35, %38 : vector<8x8x8xf32>
    %40 = math.exp %39 : vector<8x8x8xf32>
    %cst_14 = arith.constant dense<0.000000e+00> : vector<8x8xf32>
    %41 = vector.multi_reduction <add>, %40, %cst_14 [0] : vector<8x8x8xf32> to vector<8x8xf32>
    %42 = math.log %41 : vector<8x8xf32>
    %43 = arith.addf %36, %42 : vector<8x8xf32>
    %44 = arith.addf %43, %22 : vector<8x8xf32>
    %c2_i32 = arith.constant 2 : i32
    %45 = arith.index_cast %c2_i32 : i32 to index
    %c0_15 = arith.constant 0 : index
    %c0_16 = arith.constant 0 : index
    %46 = vector.load %arg1[%45, %c0_15, %c0_16] : memref<8x8x8xf32, #tpu.memory_space<vmem>>, vector<1x8x8xf32>
    %47 = vector.shape_cast %46 : vector<1x8x8xf32> to vector<8x8xf32>
    %48 = arith.index_cast %c2_i32 : i32 to index
    %c0_17 = arith.constant 0 : index
    %49 = vector.load %arg2[%48, %c0_17] : memref<8x8xi32, #tpu.memory_space<vmem>>, vector<1x8xi32>
    %50 = vector.broadcast %49 : vector<1x8xi32> to vector<8x8xi32>
    %51 = arith.cmpi eq, %50, %3 : vector<8x8xi32>
    %52 = arith.extui %51 : vector<8x8xi1> to vector<8x8xi32>
    %53 = arith.sitofp %52 : vector<8x8xi32> to vector<8x8xf32>
    %cst_18 = arith.constant dense<0.000000e+00> : vector<8x8xf32>
    %54 = tpu.matmul %4, %28, %cst_18 {dimension_numbers = #tpu.dot_dimension_numbers<[1], [0], [0], [1], [0, 0, 1, 1], [], []>, precision = #tpu.contract_precision<fp32>} : vector<8x8xf32>, vector<8x8xf32>, vector<8x8xf32> -> vector<8x8xf32>
    %55 = arith.addf %54, %47 : vector<8x8xf32>
    %56 = arith.mulf %53, %55 : vector<8x8xf32>
    %57 = arith.addf %32, %56 : vector<8x8xf32>
    %58 = vector.shape_cast %44 : vector<8x8xf32> to vector<8x1x8xf32>
    %59 = vector.broadcast %58 : vector<8x1x8xf32> to vector<8x8x8xf32>
    %60 = arith.addf %59, %7 : vector<8x8x8xf32>
    %cst_19 = arith.constant dense<0xFF800000> : vector<8x8xf32>
    %61 = vector.multi_reduction <maximumf>, %60, %cst_19 [0] : vector<8x8x8xf32> to vector<8x8xf32>
    %62 = vector.shape_cast %61 : vector<8x8xf32> to vector<1x8x8xf32>
    %63 = vector.broadcast %62 : vector<1x8x8xf32> to vector<8x8x8xf32>
    %64 = arith.subf %60, %63 : vector<8x8x8xf32>
    %65 = math.exp %64 : vector<8x8x8xf32>
    %cst_20 = arith.constant dense<0.000000e+00> : vector<8x8xf32>
    %66 = vector.multi_reduction <add>, %65, %cst_20 [0] : vector<8x8x8xf32> to vector<8x8xf32>
    %67 = math.log %66 : vector<8x8xf32>
    %68 = arith.addf %61, %67 : vector<8x8xf32>
    %69 = arith.addf %68, %47 : vector<8x8xf32>
    %c3_i32 = arith.constant 3 : i32
    %70 = arith.index_cast %c3_i32 : i32 to index
    %c0_21 = arith.constant 0 : index
    %c0_22 = arith.constant 0 : index
    %71 = vector.load %arg1[%70, %c0_21, %c0_22] : memref<8x8x8xf32, #tpu.memory_space<vmem>>, vector<1x8x8xf32>
    %72 = vector.shape_cast %71 : vector<1x8x8xf32> to vector<8x8xf32>
    %73 = arith.index_cast %c3_i32 : i32 to index
    %c0_23 = arith.constant 0 : index
    %74 = vector.load %arg2[%73, %c0_23] : memref<8x8xi32, #tpu.memory_space<vmem>>, vector<1x8xi32>
    %75 = vector.broadcast %74 : vector<1x8xi32> to vector<8x8xi32>
    %76 = arith.cmpi eq, %75, %3 : vector<8x8xi32>
    %77 = arith.extui %76 : vector<8x8xi1> to vector<8x8xi32>
    %78 = arith.sitofp %77 : vector<8x8xi32> to vector<8x8xf32>
    %cst_24 = arith.constant dense<0.000000e+00> : vector<8x8xf32>
    %79 = tpu.matmul %4, %53, %cst_24 {dimension_numbers = #tpu.dot_dimension_numbers<[1], [0], [0], [1], [0, 0, 1, 1], [], []>, precision = #tpu.contract_precision<fp32>} : vector<8x8xf32>, vector<8x8xf32>, vector<8x8xf32> -> vector<8x8xf32>
    %80 = arith.addf %79, %72 : vector<8x8xf32>
    %81 = arith.mulf %78, %80 : vector<8x8xf32>
    %82 = arith.addf %57, %81 : vector<8x8xf32>
    %83 = vector.shape_cast %69 : vector<8x8xf32> to vector<8x1x8xf32>
    %84 = vector.broadcast %83 : vector<8x1x8xf32> to vector<8x8x8xf32>
    %85 = arith.addf %84, %7 : vector<8x8x8xf32>
    %cst_25 = arith.constant dense<0xFF800000> : vector<8x8xf32>
    %86 = vector.multi_reduction <maximumf>, %85, %cst_25 [0] : vector<8x8x8xf32> to vector<8x8xf32>
    %87 = vector.shape_cast %86 : vector<8x8xf32> to vector<1x8x8xf32>
    %88 = vector.broadcast %87 : vector<1x8x8xf32> to vector<8x8x8xf32>
    %89 = arith.subf %85, %88 : vector<8x8x8xf32>
    %90 = math.exp %89 : vector<8x8x8xf32>
    %cst_26 = arith.constant dense<0.000000e+00> : vector<8x8xf32>
    %91 = vector.multi_reduction <add>, %90, %cst_26 [0] : vector<8x8x8xf32> to vector<8x8xf32>
    %92 = math.log %91 : vector<8x8xf32>
    %93 = arith.addf %86, %92 : vector<8x8xf32>
    %94 = arith.addf %93, %72 : vector<8x8xf32>
    %c4_i32 = arith.constant 4 : i32
    %95 = arith.index_cast %c4_i32 : i32 to index
    %c0_27 = arith.constant 0 : index
    %c0_28 = arith.constant 0 : index
    %96 = vector.load %arg1[%95, %c0_27, %c0_28] : memref<8x8x8xf32, #tpu.memory_space<vmem>>, vector<1x8x8xf32>
    %97 = vector.shape_cast %96 : vector<1x8x8xf32> to vector<8x8xf32>
    %98 = arith.index_cast %c4_i32 : i32 to index
    %c0_29 = arith.constant 0 : index
    %99 = vector.load %arg2[%98, %c0_29] : memref<8x8xi32, #tpu.memory_space<vmem>>, vector<1x8xi32>
    %100 = vector.broadcast %99 : vector<1x8xi32> to vector<8x8xi32>
    %101 = arith.cmpi eq, %100, %3 : vector<8x8xi32>
    %102 = arith.extui %101 : vector<8x8xi1> to vector<8x8xi32>
    %103 = arith.sitofp %102 : vector<8x8xi32> to vector<8x8xf32>
    %cst_30 = arith.constant dense<0.000000e+00> : vector<8x8xf32>
    %104 = tpu.matmul %4, %78, %cst_30 {dimension_numbers = #tpu.dot_dimension_numbers<[1], [0], [0], [1], [0, 0, 1, 1], [], []>, precision = #tpu.contract_precision<fp32>} : vector<8x8xf32>, vector<8x8xf32>, vector<8x8xf32> -> vector<8x8xf32>
    %105 = arith.addf %104, %97 : vector<8x8xf32>
    %106 = arith.mulf %103, %105 : vector<8x8xf32>
    %107 = arith.addf %82, %106 : vector<8x8xf32>
    %108 = vector.shape_cast %94 : vector<8x8xf32> to vector<8x1x8xf32>
    %109 = vector.broadcast %108 : vector<8x1x8xf32> to vector<8x8x8xf32>
    %110 = arith.addf %109, %7 : vector<8x8x8xf32>
    %cst_31 = arith.constant dense<0xFF800000> : vector<8x8xf32>
    %111 = vector.multi_reduction <maximumf>, %110, %cst_31 [0] : vector<8x8x8xf32> to vector<8x8xf32>
    %112 = vector.shape_cast %111 : vector<8x8xf32> to vector<1x8x8xf32>
    %113 = vector.broadcast %112 : vector<1x8x8xf32> to vector<8x8x8xf32>
    %114 = arith.subf %110, %113 : vector<8x8x8xf32>
    %115 = math.exp %114 : vector<8x8x8xf32>
    %cst_32 = arith.constant dense<0.000000e+00> : vector<8x8xf32>
    %116 = vector.multi_reduction <add>, %115, %cst_32 [0] : vector<8x8x8xf32> to vector<8x8xf32>
    %117 = math.log %116 : vector<8x8xf32>
    %118 = arith.addf %111, %117 : vector<8x8xf32>
    %119 = arith.addf %118, %97 : vector<8x8xf32>
    %c5_i32 = arith.constant 5 : i32
    %120 = arith.index_cast %c5_i32 : i32 to index
    %c0_33 = arith.constant 0 : index
    %c0_34 = arith.constant 0 : index
    %121 = vector.load %arg1[%120, %c0_33, %c0_34] : memref<8x8x8xf32, #tpu.memory_space<vmem>>, vector<1x8x8xf32>
    %122 = vector.shape_cast %121 : vector<1x8x8xf32> to vector<8x8xf32>
    %123 = arith.index_cast %c5_i32 : i32 to index
    %c0_35 = arith.constant 0 : index
    %124 = vector.load %arg2[%123, %c0_35] : memref<8x8xi32, #tpu.memory_space<vmem>>, vector<1x8xi32>
    %125 = vector.broadcast %124 : vector<1x8xi32> to vector<8x8xi32>
    %126 = arith.cmpi eq, %125, %3 : vector<8x8xi32>
    %127 = arith.extui %126 : vector<8x8xi1> to vector<8x8xi32>
    %128 = arith.sitofp %127 : vector<8x8xi32> to vector<8x8xf32>
    %cst_36 = arith.constant dense<0.000000e+00> : vector<8x8xf32>
    %129 = tpu.matmul %4, %103, %cst_36 {dimension_numbers = #tpu.dot_dimension_numbers<[1], [0], [0], [1], [0, 0, 1, 1], [], []>, precision = #tpu.contract_precision<fp32>} : vector<8x8xf32>, vector<8x8xf32>, vector<8x8xf32> -> vector<8x8xf32>
    %130 = arith.addf %129, %122 : vector<8x8xf32>
    %131 = arith.mulf %128, %130 : vector<8x8xf32>
    %132 = arith.addf %107, %131 : vector<8x8xf32>
    %133 = vector.shape_cast %119 : vector<8x8xf32> to vector<8x1x8xf32>
    %134 = vector.broadcast %133 : vector<8x1x8xf32> to vector<8x8x8xf32>
    %135 = arith.addf %134, %7 : vector<8x8x8xf32>
    %cst_37 = arith.constant dense<0xFF800000> : vector<8x8xf32>
    %136 = vector.multi_reduction <maximumf>, %135, %cst_37 [0] : vector<8x8x8xf32> to vector<8x8xf32>
    %137 = vector.shape_cast %136 : vector<8x8xf32> to vector<1x8x8xf32>
    %138 = vector.broadcast %137 : vector<1x8x8xf32> to vector<8x8x8xf32>
    %139 = arith.subf %135, %138 : vector<8x8x8xf32>
    %140 = math.exp %139 : vector<8x8x8xf32>
    %cst_38 = arith.constant dense<0.000000e+00> : vector<8x8xf32>
    %141 = vector.multi_reduction <add>, %140, %cst_38 [0] : vector<8x8x8xf32> to vector<8x8xf32>
    %142 = math.log %141 : vector<8x8xf32>
    %143 = arith.addf %136, %142 : vector<8x8xf32>
    %144 = arith.addf %143, %122 : vector<8x8xf32>
    %c6_i32 = arith.constant 6 : i32
    %145 = arith.index_cast %c6_i32 : i32 to index
    %c0_39 = arith.constant 0 : index
    %c0_40 = arith.constant 0 : index
    %146 = vector.load %arg1[%145, %c0_39, %c0_40] : memref<8x8x8xf32, #tpu.memory_space<vmem>>, vector<1x8x8xf32>
    %147 = vector.shape_cast %146 : vector<1x8x8xf32> to vector<8x8xf32>
    %148 = arith.index_cast %c6_i32 : i32 to index
    %c0_41 = arith.constant 0 : index
    %149 = vector.load %arg2[%148, %c0_41] : memref<8x8xi32, #tpu.memory_space<vmem>>, vector<1x8xi32>
    %150 = vector.broadcast %149 : vector<1x8xi32> to vector<8x8xi32>
    %151 = arith.cmpi eq, %150, %3 : vector<8x8xi32>
    %152 = arith.extui %151 : vector<8x8xi1> to vector<8x8xi32>
    %153 = arith.sitofp %152 : vector<8x8xi32> to vector<8x8xf32>
    %cst_42 = arith.constant dense<0.000000e+00> : vector<8x8xf32>
    %154 = tpu.matmul %4, %128, %cst_42 {dimension_numbers = #tpu.dot_dimension_numbers<[1], [0], [0], [1], [0, 0, 1, 1], [], []>, precision = #tpu.contract_precision<fp32>} : vector<8x8xf32>, vector<8x8xf32>, vector<8x8xf32> -> vector<8x8xf32>
    %155 = arith.addf %154, %147 : vector<8x8xf32>
    %156 = arith.mulf %153, %155 : vector<8x8xf32>
    %157 = arith.addf %132, %156 : vector<8x8xf32>
    %158 = vector.shape_cast %144 : vector<8x8xf32> to vector<8x1x8xf32>
    %159 = vector.broadcast %158 : vector<8x1x8xf32> to vector<8x8x8xf32>
    %160 = arith.addf %159, %7 : vector<8x8x8xf32>
    %cst_43 = arith.constant dense<0xFF800000> : vector<8x8xf32>
    %161 = vector.multi_reduction <maximumf>, %160, %cst_43 [0] : vector<8x8x8xf32> to vector<8x8xf32>
    %162 = vector.shape_cast %161 : vector<8x8xf32> to vector<1x8x8xf32>
    %163 = vector.broadcast %162 : vector<1x8x8xf32> to vector<8x8x8xf32>
    %164 = arith.subf %160, %163 : vector<8x8x8xf32>
    %165 = math.exp %164 : vector<8x8x8xf32>
    %cst_44 = arith.constant dense<0.000000e+00> : vector<8x8xf32>
    %166 = vector.multi_reduction <add>, %165, %cst_44 [0] : vector<8x8x8xf32> to vector<8x8xf32>
    %167 = math.log %166 : vector<8x8xf32>
    %168 = arith.addf %161, %167 : vector<8x8xf32>
    %169 = arith.addf %168, %147 : vector<8x8xf32>
    %c7_i32 = arith.constant 7 : i32
    %170 = arith.index_cast %c7_i32 : i32 to index
    %c0_45 = arith.constant 0 : index
    %c0_46 = arith.constant 0 : index
    %171 = vector.load %arg1[%170, %c0_45, %c0_46] : memref<8x8x8xf32, #tpu.memory_space<vmem>>, vector<1x8x8xf32>
    %172 = vector.shape_cast %171 : vector<1x8x8xf32> to vector<8x8xf32>
    %173 = arith.index_cast %c7_i32 : i32 to index
    %c0_47 = arith.constant 0 : index
    %174 = vector.load %arg2[%173, %c0_47] : memref<8x8xi32, #tpu.memory_space<vmem>>, vector<1x8xi32>
    %175 = vector.broadcast %174 : vector<1x8xi32> to vector<8x8xi32>
    %176 = arith.cmpi eq, %175, %3 : vector<8x8xi32>
    %177 = arith.extui %176 : vector<8x8xi1> to vector<8x8xi32>
    %178 = arith.sitofp %177 : vector<8x8xi32> to vector<8x8xf32>
    %cst_48 = arith.constant dense<0.000000e+00> : vector<8x8xf32>
    %179 = tpu.matmul %4, %153, %cst_48 {dimension_numbers = #tpu.dot_dimension_numbers<[1], [0], [0], [1], [0, 0, 1, 1], [], []>, precision = #tpu.contract_precision<fp32>} : vector<8x8xf32>, vector<8x8xf32>, vector<8x8xf32> -> vector<8x8xf32>
    %180 = arith.addf %179, %172 : vector<8x8xf32>
    %181 = arith.mulf %178, %180 : vector<8x8xf32>
    %182 = arith.addf %157, %181 : vector<8x8xf32>
    %183 = vector.shape_cast %169 : vector<8x8xf32> to vector<8x1x8xf32>
    %184 = vector.broadcast %183 : vector<8x1x8xf32> to vector<8x8x8xf32>
    %185 = arith.addf %184, %7 : vector<8x8x8xf32>
    %cst_49 = arith.constant dense<0xFF800000> : vector<8x8xf32>
    %186 = vector.multi_reduction <maximumf>, %185, %cst_49 [0] : vector<8x8x8xf32> to vector<8x8xf32>
    %187 = vector.shape_cast %186 : vector<8x8xf32> to vector<1x8x8xf32>
    %188 = vector.broadcast %187 : vector<1x8x8xf32> to vector<8x8x8xf32>
    %189 = arith.subf %185, %188 : vector<8x8x8xf32>
    %190 = math.exp %189 : vector<8x8x8xf32>
    %cst_50 = arith.constant dense<0.000000e+00> : vector<8x8xf32>
    %191 = vector.multi_reduction <add>, %190, %cst_50 [0] : vector<8x8x8xf32> to vector<8x8xf32>
    %192 = math.log %191 : vector<8x8xf32>
    %193 = arith.addf %186, %192 : vector<8x8xf32>
    %194 = arith.addf %193, %172 : vector<8x8xf32>
    %c7_i32_51 = arith.constant 7 : i32
    %195 = vector.broadcast %2 : vector<8x1xf32> to vector<8x8xf32>
    %196 = arith.mulf %178, %195 : vector<8x8xf32>
    %197 = arith.addf %182, %196 : vector<8x8xf32>
    %cst_52 = arith.constant dense<0.000000e+00> : vector<8xf32>
    %198 = vector.multi_reduction <add>, %197, %cst_52 [0] : vector<8x8xf32> to vector<8xf32>
    %199 = vector.shape_cast %198 : vector<8xf32> to vector<1x8xf32>
    %200 = vector.broadcast %2 : vector<8x1xf32> to vector<8x8xf32>
    %201 = arith.addf %194, %200 : vector<8x8xf32>
    %cst_53 = arith.constant dense<0xFF800000> : vector<8xf32>
    %202 = vector.multi_reduction <maximumf>, %201, %cst_53 [0] : vector<8x8xf32> to vector<8xf32>
    %203 = vector.shape_cast %202 : vector<8xf32> to vector<1x8xf32>
    %204 = vector.broadcast %203 : vector<1x8xf32> to vector<8x8xf32>
    %205 = arith.subf %201, %204 : vector<8x8xf32>
    %206 = math.exp %205 : vector<8x8xf32>
    %cst_54 = arith.constant dense<0.000000e+00> : vector<8xf32>
    %207 = vector.multi_reduction <add>, %206, %cst_54 [0] : vector<8x8xf32> to vector<8xf32>
    %208 = vector.shape_cast %207 : vector<8xf32> to vector<1x8xf32>
    %209 = math.log %208 : vector<1x8xf32>
    %210 = arith.addf %203, %209 : vector<1x8xf32>
    %211 = arith.subf %210, %199 : vector<1x8xf32>
    %c0_55 = arith.constant 0 : index
    %c0_56 = arith.constant 0 : index
    %c0_57 = arith.constant 0 : index
    %212 = vector.load %arg6[%c0_55, %c0_56, %c0_57] : memref<1x1x8xf32, #tpu.memory_space<vmem>>, vector<1x1x8xf32>
    %213 = vector.shape_cast %212 : vector<1x1x8xf32> to vector<1x8xf32>
    %214 = vector.shape_cast %211 : vector<1x8xf32> to vector<1x1x8xf32>
    tpu.vector_store %arg6[%c0_55, %c0_56, %c0_57], %214 {strides = array<i32>} : memref<1x1x8xf32, #tpu.memory_space<vmem>>, vector<1x1x8xf32>,
    return
  }
  func.func @transform_0(%arg0: i32) -> (i32, i32, i32) {
    %c0_i32 = arith.constant 0 : i32
    %c0_i32_0 = arith.constant 0 : i32
    %c0_i32_1 = arith.constant 0 : i32
    return %c0_i32, %c0_i32_0, %arg0 : i32, i32, i32
  }
  func.func @transform_1(%arg0: i32) -> (i32, i32) {
    %c0_i32 = arith.constant 0 : i32
    %c0_i32_0 = arith.constant 0 : i32
    return %c0_i32, %arg0 : i32, i32
  }
  func.func @transform_2(%arg0: i32) -> (i32, i32) {
    %c0_i32 = arith.constant 0 : i32
    %c0_i32_0 = arith.constant 0 : i32
    %c0_i32_1 = arith.constant 0 : i32
    return %c0_i32, %c0_i32_0 : i32, i32
  }
  func.func @transform_3(%arg0: i32) -> (i32, i32) {
    %c0_i32 = arith.constant 0 : i32
    %c0_i32_0 = arith.constant 0 : i32
    %c0_i32_1 = arith.constant 0 : i32
    return %c0_i32, %c0_i32_0 : i32, i32
  }
  func.func @transform_4(%arg0: i32) -> (i32, i32) {
    %c0_i32 = arith.constant 0 : i32
    %c0_i32_0 = arith.constant 0 : i32
    %c0_i32_1 = arith.constant 0 : i32
    return %c0_i32, %c0_i32_0 : i32, i32
  }
  func.func @transform_5(%arg0: i32) -> (i32, i32, i32) {
    %c0_i32 = arith.constant 0 : i32
    %c0_i32_0 = arith.constant 0 : i32
    %c0_i32_1 = arith.constant 0 : i32
    return %arg0, %c0_i32, %c0_i32_0 : i32, i32, i32
  }
}

</mosaic_0001>

<llo_original>
// kernel: tpu_custom_call.1
$region0: #{tpu_custom_call.1}
  #allocation0 [shape = 'u32[]', space=smem, size = 0x4, offset = 0x4, fixed_abs, tag = 'smem constant byte address 0x4 - core index']
  #allocation1 [shape = 'u32[144,128]{1,0:T(1,128)}', space=vmem, size = 0x12000, scoped, tag = 'internal scratch']
  %s0 = inlined_call_operand.hbm [shape: f32[8,8,8], index: 0, kind: input, shape index: {}]
  %s1 = inlined_call_operand.vmem [shape: s32[8,8], index: 1, kind: input, shape index: {}]
  %s2 = inlined_call_operand.vmem [shape: f32[8,1], index: 2, kind: input, shape index: {}]
  %s3 = inlined_call_operand.vmem [shape: f32[8,8], index: 3, kind: input, shape index: {}]
  %s4 = inlined_call_operand.vmem [shape: f32[8,1], index: 4, kind: input, shape index: {}]
  %s5 = inlined_call_operand.hbm [shape: f32[1,1,8], index: 5, kind: output, shape index: {}]
  %s6 = sld [smem:[#allocation0]]
  $region34: #{tpu_custom_call.1} parent=0
    _
  %s8 = ssub.s32 1, %s6
  %s9 = scalar_select 0, %s8, %s6
  $region1: #{tpu_custom_call.1} parent=0
    #allocation2 [shape = 'u8[32768]{0}', space=vmem, size = 0x8000, scoped, tag = 'input window, operand 0, single buffered']
    #allocation3 [shape = 's32[1]{0}', space=sflag, size = 0x4, scoped, tag = 'scoped memory for tpu_custom_call.1']
    #allocation4 [shape = 's32[1]{0}', space=sflag, size = 0x4, scoped, tag = 'scoped memory for tpu_custom_call.1']
    #allocation5 [shape = 'u8[512]{0}', space=vmem, size = 0x400, scoped, tag = 'output window, operand 0, single buffered']
    %10 = vsyncpa [#allocation3], 0
    %11 = vsyncpa [#allocation4], 0
    // Predicated region
    $region2: #{tpu_custom_call.1} parent=1 // pred_check
      _
    $region3: #{tpu_custom_call.1} parent=1 // pred_check_branch
      %13 = sbr.rel (0) target = $region5
    $region4: #{tpu_custom_call.1} parent=1 // pred_region
      %s15 = ssub.s32 1024, 1024
      %16 = vsyncadd [#allocation3], %s15
      %s17 = sshll.u32 [#allocation2], 4
      %s18 = int_to_ptr.vmem [resolvable:$true] %s17
      %23 = dma.hbm_to_vmem [thread:$0]  %s0, 1024, %s18, [#allocation3], 128, 128, 8
    $region5: #{tpu_custom_call.1} parent=1 // pred_fallthru
      _
    // Predicated region
    $region6: #{tpu_custom_call.1} parent=1 // pred_check
      _
    $region7: #{tpu_custom_call.1} parent=1 // pred_check_branch
      %25 = sbr.rel (0) target = $region9
    $region8: #{tpu_custom_call.1} parent=1 // pred_region
      _
    $region9: #{tpu_custom_call.1} parent=1 // pred_fallthru
      _
    // Predicated region
    $region10: #{tpu_custom_call.1} parent=1 // pred_check
      _
    $region11: #{tpu_custom_call.1} parent=1 // pred_check_branch
      %27 = sbr.rel (0) target = $region13
    $region12: #{tpu_custom_call.1} parent=1 // pred_region
      _
    $region13: #{tpu_custom_call.1} parent=1 // pred_fallthru
      _
    // Predicated region
    $region14: #{tpu_custom_call.1} parent=1 // pred_check
      _
    $region15: #{tpu_custom_call.1} parent=1 // pred_check_branch
      %29 = sbr.rel (0) target = $region17
    $region16: #{tpu_custom_call.1} parent=1 // pred_region
      _
    $region17: #{tpu_custom_call.1} parent=1 // pred_fallthru
      _
    // Predicated region
    $region18: #{tpu_custom_call.1} parent=1 // pred_check
      _
    $region19: #{tpu_custom_call.1} parent=1 // pred_check_branch
      %31 = sbr.rel (0) target = $region21
    $region20: #{tpu_custom_call.1} parent=1 // pred_region
      _
    $region21: #{tpu_custom_call.1} parent=1 // pred_fallthru
      _
    // Predicated region
    $region22: #{tpu_custom_call.1} parent=1 // pred_check
      _
    $region23: #{tpu_custom_call.1} parent=1 // pred_check_branch
      %33 = sbr.rel (0) target = $region25
    $region24: #{tpu_custom_call.1} parent=1 // pred_region
      %34 = dma.done [#allocation3], 1024
    $region25: #{tpu_custom_call.1} parent=1 // pred_fallthru
      _
    %v35 = vld [vmem:[%s2] sm:$0xff]
    %v36 = vld [vmem:[%s3] sm:$0xff]
    %v37 = vld [vmem:[%s4] sm:$0xff]
    %v38 = vlaneseq
    %v39 = vshrl.u32 %v38, 7
    %40 = vxpose.xlu0.b32.start [1/16] %v36, 128
    %41 = vxpose.xlu0.b32.cont [2/16] 0.0, 128
    %42 = vxpose.xlu0.b32.cont [3/16] 0.0, 128
    %43 = vxpose.xlu0.b32.cont [4/16] 0.0, 128
    %44 = vxpose.xlu0.b32.cont [5/16] 0.0, 128
    %45 = vxpose.xlu0.b32.cont [6/16] 0.0, 128
    %46 = vxpose.xlu0.b32.cont [7/16] 0.0, 128
    %47 = vxpose.xlu0.b32.cont [8/16] 0.0, 128
    %48 = vxpose.xlu0.b32.cont [9/16] 0.0, 128
    %49 = vxpose.xlu0.b32.cont [10/16] 0.0, 128
    %50 = vxpose.xlu0.b32.cont [11/16] 0.0, 128
    %51 = vxpose.xlu0.b32.cont [12/16] 0.0, 128
    %52 = vxpose.xlu0.b32.cont [13/16] 0.0, 128
    %53 = vxpose.xlu0.b32.cont [14/16] 0.0, 128
    %54 = vxpose.xlu0.b32.cont [15/16] 0.0, 128
    %55 = vxpose.xlu0.b32.end [16/16] 0.0, 128
    %v56 = vpop.trf.xlu0
    %v57 = vpop.trf.xlu0
    %v58 = vpop.trf.xlu0
    %v59 = vpop.trf.xlu0
    %v60 = vpop.trf.xlu0
    %v61 = vpop.trf.xlu0
    %v62 = vpop.trf.xlu0
    %v63 = vpop.trf.xlu0
    %v64 = vpop.trf.xlu0
    %v65 = vpop.trf.xlu0
    %v66 = vpop.trf.xlu0
    %v67 = vpop.trf.xlu0
    %v68 = vpop.trf.xlu0
    %v69 = vpop.trf.xlu0
    %v70 = vpop.trf.xlu0
    %v71 = vpop.trf.xlu0
    %v72 = vlaneseq
    %v73 = vshrl.u32 %v72, 7
    %v74 = vsub.s32 0, %v73
    %v75 = vrot.slane %v36, %v74
    %77 = vbcast.lane.b32.xlu0 %v75, 256
    %v78 = vpop.permute.xlu0 %77
    %v79 = vlaneseq
    %v80 = vshrl.u32 %v79, 7
    %v81 = vsub.s32 1, %v80
    %v82 = vrot.slane %v36, %v81
    %84 = vbcast.lane.b32.xlu0 %v82, 256
    %v85 = vpop.permute.xlu0 %84
    %v86 = vlaneseq
    %v87 = vshrl.u32 %v86, 7
    %v88 = vsub.s32 2, %v87
    %v89 = vrot.slane %v36, %v88
    %91 = vbcast.lane.b32.xlu0 %v89, 256
    %v92 = vpop.permute.xlu0 %91
    %v93 = vlaneseq
    %v94 = vshrl.u32 %v93, 7
    %v95 = vsub.s32 3, %v94
    %v96 = vrot.slane %v36, %v95
    %98 = vbcast.lane.b32.xlu0 %v96, 256
    %v99 = vpop.permute.xlu0 %98
    %v100 = vlaneseq
    %v101 = vshrl.u32 %v100, 7
    %v102 = vsub.s32 4, %v101
    %v103 = vrot.slane %v36, %v102
    %105 = vbcast.lane.b32.xlu0 %v103, 256
    %v106 = vpop.permute.xlu0 %105
    %v107 = vlaneseq
    %v108 = vshrl.u32 %v107, 7
    %v109 = vsub.s32 5, %v108
    %v110 = vrot.slane %v36, %v109
    %112 = vbcast.lane.b32.xlu0 %v110, 256
    %v113 = vpop.permute.xlu0 %112
    %v114 = vlaneseq
    %v115 = vshrl.u32 %v114, 7
    %v116 = vsub.s32 6, %v115
    %v117 = vrot.slane %v36, %v116
    %119 = vbcast.lane.b32.xlu0 %v117, 256
    %v120 = vpop.permute.xlu0 %119
    %v121 = vlaneseq
    %v122 = vshrl.u32 %v121, 7
    %v123 = vsub.s32 7, %v122
    %v124 = vrot.slane %v36, %v123
    %126 = vbcast.lane.b32.xlu0 %v124, 256
    %v127 = vpop.permute.xlu0 %126
    %v128 = vld [vmem:[#allocation2] sm:$0xff]
    %v129 = vld [vmem:[%s1] sm:$0x1]
    %v130 = vlaneseq
    %v131 = vshrl.u32 %v130, 7
    %v132 = vsub.s32 0, %v131
    %v133 = vrot.slane %v129, %v132
    %vm134 = vcmp.eq.s32.totalorder %v133, %v39
    %v135 = vsel %vm134, 1, 0
    %v136 = vcvt.s32.f32 %v135
    %138 = vset.pattern.permute.xlu0 0
    %139 = vperm.xlu0 %138, %v35
    %v140 = vpop.permute.xlu0 %139
    %v142 = vadd.f32 %v140, %v128
    %v143 = vmul.f32 %v136, %v142
    %s144 = scalar_lea.vmem [#allocation2], 8
    %v145 = vld [vmem:[%s144] sm:$0xff]
    %v146 = vld [vmem:[%s1 + $0x1] sm:$0x1]
    %v147 = vlaneseq
    %v148 = vshrl.u32 %v147, 7
    %v149 = vsub.s32 0, %v148
    %v150 = vrot.slane %v146, %v149
    %vm151 = vcmp.eq.s32.totalorder %v150, %v39
    %v152 = vsel %vm151, 1, 0
    %v153 = vcvt.s32.f32 %v152
    %vm154 = vcmask 64512
    %v156 = vsel %vm154, %v56, 0
    %158 = vmatprep.subr.mxu0 0.0
    %v159 = vand.u32 %v136, 4294901760
    %160 = vmatpush1.msra.mxu0 %v159
    %161 = vmatprep.subr.mxu0 0.0
    %162 = vmatpush1.msra.mxu0 0.0
    %163 = vmatprep.subr.mxu0 0.0
    %164 = vmatpush1.msra.mxu0 0.0
    %165 = vmatprep.subr.mxu0 0.0
    %166 = vmatpush1.msra.mxu0 0.0
    %167 = vmatprep.subr.mxu0 0.0
    %168 = vmatpush1.msra.mxu0 0.0
    %169 = vmatprep.subr.mxu0 0.0
    %170 = vmatpush1.msra.mxu0 0.0
    %171 = vmatprep.subr.mxu0 0.0
    %172 = vmatpush1.msra.mxu0 0.0
    %173 = vmatprep.subr.mxu0 0.0
    %174 = vmatpush1.msra.mxu0 0.0
    %175 = vmatprep.subr.mxu0 0.0
    %176 = vmatpush1.msra.mxu0 0.0
    %177 = vmatprep.subr.mxu0 0.0
    %178 = vmatpush1.msra.mxu0 0.0
    %179 = vmatprep.subr.mxu0 0.0
    %180 = vmatpush1.msra.mxu0 0.0
    %181 = vmatprep.subr.mxu0 0.0
    %182 = vmatpush1.msra.mxu0 0.0
    %183 = vmatprep.subr.mxu0 0.0
    %184 = vmatpush1.msra.mxu0 0.0
    %185 = vmatprep.subr.mxu0 0.0
    %186 = vmatpush1.msra.mxu0 0.0
    %187 = vmatprep.subr.mxu0 0.0
    %188 = vmatpush1.msra.mxu0 0.0
    %189 = vmatprep.subr.mxu0 0.0
    %190 = vmatpush1.msra.mxu0 0.0
    %191 = vmatprep.subr.mxu0 0.0
    %192 = vmatpush1.msra.mxu0 0.0
    %193 = vmatprep.subr.mxu0 0.0
    %194 = vmatpush1.msra.mxu0 0.0
    %195 = vmatprep.subr.mxu0 0.0
    %196 = vmatpush1.msra.mxu0 0.0
    %197 = vmatprep.subr.mxu0 0.0
    %198 = vmatpush1.msra.mxu0 0.0
    %199 = vmatprep.subr.mxu0 0.0
    %200 = vmatpush1.msra.mxu0 0.0
    %201 = vmatprep.subr.mxu0 0.0
    %202 = vmatpush1.msra.mxu0 0.0
    %203 = vmatprep.subr.mxu0 0.0
    %204 = vmatpush1.msra.mxu0 0.0
    %205 = vmatprep.subr.mxu0 0.0
    %206 = vmatpush1.msra.mxu0 0.0
    %207 = vmatprep.subr.mxu0 0.0
    %208 = vmatpush1.msra.mxu0 0.0
    %209 = vmatprep.subr.mxu0 0.0
    %210 = vmatpush1.msra.mxu0 0.0
    %211 = vmatprep.subr.mxu0 0.0
    %212 = vmatpush1.msra.mxu0 0.0
    %213 = vmatprep.subr.mxu0 0.0
    %214 = vmatpush1.msra.mxu0 0.0
    %215 = vmatprep.subr.mxu0 0.0
    %216 = vmatpush1.msra.mxu0 0.0
    %217 = vmatprep.subr.mxu0 0.0
    %218 = vmatpush1.msra.mxu0 0.0
    %219 = vmatprep.subr.mxu0 0.0
    %220 = vmatpush1.msra.mxu0 0.0
    %221 = vmatprep.subr.mxu0 0.0
    %222 = vmatpush1.msra.mxu0 0.0
    %223 = vmatprep.mubr.f32.mxu0 0.0
    %v224 = vand.u32 %v156, 4294901760
    %v225 = vsub.f32 %v156, %v224
    %v226 = vand.u32 %v225, 4294901760
    %v227 = vsub.f32 %v225, %v226
    %v228 = vand.u32 %v227, 4294901760
    %229 = vmatmul.mubr.f32.gmra.mrb[0].mxu0 %v228
    %v230 = vpop.f32.mrb[0].mxu0
    %v231 = vadd.f32 %v145, %v230
    %v232 = vpop.f32.mrb[0].mxu0
    %233 = vdwg.mxu0
    %234 = vmatprep.subr.mxu0 0.0
    %v235 = vand.u32 %v136, 4294901760
    %v236 = vsub.f32 %v136, %v235
    %v237 = vand.u32 %v236, 4294901760
    %v238 = vsub.f32 %v236, %v237
    %v239 = vand.u32 %v238, 4294901760
    %240 = vmatpush1.msra.mxu0 %v239
    %241 = vmatprep.subr.mxu0 0.0
    %242 = vmatpush1.msra.mxu0 0.0
    %243 = vmatprep.subr.mxu0 0.0
    %244 = vmatpush1.msra.mxu0 0.0
    %245 = vmatprep.subr.mxu0 0.0
    %246 = vmatpush1.msra.mxu0 0.0
    %247 = vmatprep.subr.mxu0 0.0
    %248 = vmatpush1.msra.mxu0 0.0
    %249 = vmatprep.subr.mxu0 0.0
    %250 = vmatpush1.msra.mxu0 0.0
    %251 = vmatprep.subr.mxu0 0.0
    %252 = vmatpush1.msra.mxu0 0.0
    %253 = vmatprep.subr.mxu0 0.0
    %254 = vmatpush1.msra.mxu0 0.0
    %255 = vmatprep.subr.mxu0 0.0
    %256 = vmatpush1.msra.mxu0 0.0
    %257 = vmatprep.subr.mxu0 0.0
    %258 = vmatpush1.msra.mxu0 0.0
    %259 = vmatprep.subr.mxu0 0.0
    %260 = vmatpush1.msra.mxu0 0.0
    %261 = vmatprep.subr.mxu0 0.0
    %262 = vmatpush1.msra.mxu0 0.0
    %263 = vmatprep.subr.mxu0 0.0
    %264 = vmatpush1.msra.mxu0 0.0
    %265 = vmatprep.subr.mxu0 0.0
    %266 = vmatpush1.msra.mxu0 0.0
    %267 = vmatprep.subr.mxu0 0.0
    %268 = vmatpush1.msra.mxu0 0.0
    %269 = vmatprep.subr.mxu0 0.0
    %270 = vmatpush1.msra.mxu0 0.0
    %271 = vmatprep.subr.mxu0 0.0
    %272 = vmatpush1.msra.mxu0 0.0
    %273 = vmatprep.subr.mxu0 0.0
    %274 = vmatpush1.msra.mxu0 0.0
    %275 = vmatprep.subr.mxu0 0.0
    %276 = vmatpush1.msra.mxu0 0.0
    %277 = vmatprep.subr.mxu0 0.0
    %278 = vmatpush1.msra.mxu0 0.0
    %279 = vmatprep.subr.mxu0 0.0
    %280 = vmatpush1.msra.mxu0 0.0
    %281 = vmatprep.subr.mxu0 0.0
    %282 = vmatpush1.msra.mxu0 0.0
    %283 = vmatprep.subr.mxu0 0.0
    %284 = vmatpush1.msra.mxu0 0.0
    %285 = vmatprep.subr.mxu0 0.0
    %286 = vmatpush1.msra.mxu0 0.0
    %287 = vmatprep.subr.mxu0 0.0
    %288 = vmatpush1.msra.mxu0 0.0
    %289 = vmatprep.subr.mxu0 0.0
    %290 = vmatpush1.msra.mxu0 0.0
    %291 = vmatprep.subr.mxu0 0.0
    %292 = vmatpush1.msra.mxu0 0.0
    %293 = vmatprep.subr.mxu0 0.0
    %294 = vmatpush1.msra.mxu0 0.0
    %295 = vmatprep.subr.mxu0 0.0
    %296 = vmatpush1.msra.mxu0 0.0
    %297 = vmatprep.subr.mxu0 0.0
    %298 = vmatpush1.msra.mxu0 0.0
    %299 = vmatprep.subr.mxu0 0.0
    %300 = vmatpush1.msra.mxu0 0.0
    %301 = vmatprep.subr.mxu0 0.0
    %302 = vmatpush1.msra.mxu0 0.0
    %303 = vmatprep.mubr.f32.mxu0 0.0
    %v304 = vand.u32 %v156, 4294901760
    %305 = vmatmul.mubr.f32.gmra.mrb[0].mxu0 %v304
    %v306 = vpop.f32.mrb[0].mxu0
    %v307 = vadd.f32 %v231, %v306
    %v308 = vpop.f32.mrb[0].mxu0
    %309 = vdwg.mxu0
    %310 = vmatprep.subr.mxu0 0.0
    %v311 = vand.u32 %v136, 4294901760
    %v312 = vsub.f32 %v136, %v311
    %313 = vmatpush1.msra.mxu0 %v312
    %314 = vmatprep.subr.mxu0 0.0
    %315 = vmatpush1.msra.mxu0 0.0
    %316 = vmatprep.subr.mxu0 0.0
    %317 = vmatpush1.msra.mxu0 0.0
    %318 = vmatprep.subr.mxu0 0.0
    %319 = vmatpush1.msra.mxu0 0.0
    %320 = vmatprep.subr.mxu0 0.0
    %321 = vmatpush1.msra.mxu0 0.0
    %322 = vmatprep.subr.mxu0 0.0
    %323 = vmatpush1.msra.mxu0 0.0
    %324 = vmatprep.subr.mxu0 0.0
    %325 = vmatpush1.msra.mxu0 0.0
    %326 = vmatprep.subr.mxu0 0.0
    %327 = vmatpush1.msra.mxu0 0.0
    %328 = vmatprep.subr.mxu0 0.0
    %329 = vmatpush1.msra.mxu0 0.0
    %330 = vmatprep.subr.mxu0 0.0
    %331 = vmatpush1.msra.mxu0 0.0
    %332 = vmatprep.subr.mxu0 0.0
    %333 = vmatpush1.msra.mxu0 0.0
    %334 = vmatprep.subr.mxu0 0.0
    %335 = vmatpush1.msra.mxu0 0.0
    %336 = vmatprep.subr.mxu0 0.0
    %337 = vmatpush1.msra.mxu0 0.0
    %338 = vmatprep.subr.mxu0 0.0
    %339 = vmatpush1.msra.mxu0 0.0
    %340 = vmatprep.subr.mxu0 0.0
    %341 = vmatpush1.msra.mxu0 0.0
    %342 = vmatprep.subr.mxu0 0.0
    %343 = vmatpush1.msra.mxu0 0.0
    %344 = vmatprep.subr.mxu0 0.0
    %345 = vmatpush1.msra.mxu0 0.0
    %346 = vmatprep.subr.mxu0 0.0
    %347 = vmatpush1.msra.mxu0 0.0
    %348 = vmatprep.subr.mxu0 0.0
    %349 = vmatpush1.msra.mxu0 0.0
    %350 = vmatprep.subr.mxu0 0.0
    %351 = vmatpush1.msra.mxu0 0.0
    %352 = vmatprep.subr.mxu0 0.0
    %353 = vmatpush1.msra.mxu0 0.0
    %354 = vmatprep.subr.mxu0 0.0
    %355 = vmatpush1.msra.mxu0 0.0
    %356 = vmatprep.subr.mxu0 0.0
    %357 = vmatpush1.msra.mxu0 0.0
    %358 = vmatprep.subr.mxu0 0.0
    %359 = vmatpush1.msra.mxu0 0.0
    %360 = vmatprep.subr.mxu0 0.0
    %361 = vmatpush1.msra.mxu0 0.0
    %362 = vmatprep.subr.mxu0 0.0
    %363 = vmatpush1.msra.mxu0 0.0
    %364 = vmatprep.subr.mxu0 0.0
    %365 = vmatpush1.msra.mxu0 0.0
    %366 = vmatprep.subr.mxu0 0.0
    %367 = vmatpush1.msra.mxu0 0.0
    %368 = vmatprep.subr.mxu0 0.0
    %369 = vmatpush1.msra.mxu0 0.0
    %370 = vmatprep.subr.mxu0 0.0
    %371 = vmatpush1.msra.mxu0 0.0
    %372 = vmatprep.subr.mxu0 0.0
    %373 = vmatpush1.msra.mxu0 0.0
    %374 = vmatprep.subr.mxu0 0.0
    %375 = vmatpush1.msra.mxu0 0.0
    %376 = vmatprep.mubr.f32.mxu0 0.0
    %v377 = vand.u32 %v156, 4294901760
    %v378 = vsub.f32 %v156, %v377
    %379 = vmatmul.mubr.f32.gmra.mrb[0].mxu0 %v378
    %v380 = vpop.f32.mrb[0].mxu0
    %v381 = vadd.f32 %v307, %v380
    %v382 = vpop.f32.mrb[0].mxu0
    %383 = vdwg.mxu0
    %384 = vmatprep.subr.mxu0 0.0
    %v385 = vand.u32 %v136, 4294901760
    %386 = vmatpush1.msra.mxu0 %v385
    %387 = vmatprep.subr.mxu0 0.0
    %388 = vmatpush1.msra.mxu0 0.0
    %389 = vmatprep.subr.mxu0 0.0
    %390 = vmatpush1.msra.mxu0 0.0
    %391 = vmatprep.subr.mxu0 0.0
    %392 = vmatpush1.msra.mxu0 0.0
    %393 = vmatprep.subr.mxu0 0.0
    %394 = vmatpush1.msra.mxu0 0.0
    %395 = vmatprep.subr.mxu0 0.0
    %396 = vmatpush1.msra.mxu0 0.0
    %397 = vmatprep.subr.mxu0 0.0
    %398 = vmatpush1.msra.mxu0 0.0
    %399 = vmatprep.subr.mxu0 0.0
    %400 = vmatpush1.msra.mxu0 0.0
    %401 = vmatprep.subr.mxu0 0.0
    %402 = vmatpush1.msra.mxu0 0.0
    %403 = vmatprep.subr.mxu0 0.0
    %404 = vmatpush1.msra.mxu0 0.0
    %405 = vmatprep.subr.mxu0 0.0
    %406 = vmatpush1.msra.mxu0 0.0
    %407 = vmatprep.subr.mxu0 0.0
    %408 = vmatpush1.msra.mxu0 0.0
    %409 = vmatprep.subr.mxu0 0.0
    %410 = vmatpush1.msra.mxu0 0.0
    %411 = vmatprep.subr.mxu0 0.0
    %412 = vmatpush1.msra.mxu0 0.0
    %413 = vmatprep.subr.mxu0 0.0
    %414 = vmatpush1.msra.mxu0 0.0
    %415 = vmatprep.subr.mxu0 0.0
    %416 = vmatpush1.msra.mxu0 0.0
    %417 = vmatprep.subr.mxu0 0.0
    %418 = vmatpush1.msra.mxu0 0.0
    %419 = vmatprep.subr.mxu0 0.0
    %420 = vmatpush1.msra.mxu0 0.0
    %421 = vmatprep.subr.mxu0 0.0
    %422 = vmatpush1.msra.mxu0 0.0
    %423 = vmatprep.subr.mxu0 0.0
    %424 = vmatpush1.msra.mxu0 0.0
    %425 = vmatprep.subr.mxu0 0.0
    %426 = vmatpush1.msra.mxu0 0.0
    %427 = vmatprep.subr.mxu0 0.0
    %428 = vmatpush1.msra.mxu0 0.0
    %429 = vmatprep.subr.mxu0 0.0
    %430 = vmatpush1.msra.mxu0 0.0
    %431 = vmatprep.subr.mxu0 0.0
    %432 = vmatpush1.msra.mxu0 0.0
    %433 = vmatprep.subr.mxu0 0.0
    %434 = vmatpush1.msra.mxu0 0.0
    %435 = vmatprep.subr.mxu0 0.0
    %436 = vmatpush1.msra.mxu0 0.0
    %437 = vmatprep.subr.mxu0 0.0
    %438 = vmatpush1.msra.mxu0 0.0
    %439 = vmatprep.subr.mxu0 0.0
    %440 = vmatpush1.msra.mxu0 0.0
    %441 = vmatprep.subr.mxu0 0.0
    %442 = vmatpush1.msra.mxu0 0.0
    %443 = vmatprep.subr.mxu0 0.0
    %444 = vmatpush1.msra.mxu0 0.0
    %445 = vmatprep.subr.mxu0 0.0
    %446 = vmatpush1.msra.mxu0 0.0
    %447 = vmatprep.subr.mxu0 0.0
    %448 = vmatpush1.msra.mxu0 0.0
    %449 = vmatprep.mubr.f32.mxu0 0.0
    %v450 = vand.u32 %v156, 4294901760
    %v451 = vsub.f32 %v156, %v450
    %v452 = vand.u32 %v451, 4294901760
    %453 = vmatmul.mubr.f32.gmra.mrb[0].mxu0 %v452
    %v454 = vpop.f32.mrb[0].mxu0
    %v455 = vadd.f32 %v381, %v454
    %v456 = vpop.f32.mrb[0].mxu0
    %457 = vdwg.mxu0
    %458 = vmatprep.subr.mxu0 0.0
    %v459 = vand.u32 %v136, 4294901760
    %v460 = vsub.f32 %v136, %v459
    %v461 = vand.u32 %v460, 4294901760
    %462 = vmatpush1.msra.mxu0 %v461
    %463 = vmatprep.subr.mxu0 0.0
    %464 = vmatpush1.msra.mxu0 0.0
    %465 = vmatprep.subr.mxu0 0.0
    %466 = vmatpush1.msra.mxu0 0.0
    %467 = vmatprep.subr.mxu0 0.0
    %468 = vmatpush1.msra.mxu0 0.0
    %469 = vmatprep.subr.mxu0 0.0
    %470 = vmatpush1.msra.mxu0 0.0
    %471 = vmatprep.subr.mxu0 0.0
    %472 = vmatpush1.msra.mxu0 0.0
    %473 = vmatprep.subr.mxu0 0.0
    %474 = vmatpush1.msra.mxu0 0.0
    %475 = vmatprep.subr.mxu0 0.0
    %476 = vmatpush1.msra.mxu0 0.0
    %477 = vmatprep.subr.mxu0 0.0
    %478 = vmatpush1.msra.mxu0 0.0
    %479 = vmatprep.subr.mxu0 0.0
    %480 = vmatpush1.msra.mxu0 0.0
    %481 = vmatprep.subr.mxu0 0.0
    %482 = vmatpush1.msra.mxu0 0.0
    %483 = vmatprep.subr.mxu0 0.0
    %484 = vmatpush1.msra.mxu0 0.0
    %485 = vmatprep.subr.mxu0 0.0
    %486 = vmatpush1.msra.mxu0 0.0
    %487 = vmatprep.subr.mxu0 0.0
    %488 = vmatpush1.msra.mxu0 0.0
    %489 = vmatprep.subr.mxu0 0.0
    %490 = vmatpush1.msra.mxu0 0.0
    %491 = vmatprep.subr.mxu0 0.0
    %492 = vmatpush1.msra.mxu0 0.0
    %493 = vmatprep.subr.mxu0 0.0
    %494 = vmatpush1.msra.mxu0 0.0
    %495 = vmatprep.subr.mxu0 0.0
    %496 = vmatpush1.msra.mxu0 0.0
    %497 = vmatprep.subr.mxu0 0.0
    %498 = vmatpush1.msra.mxu0 0.0
    %499 = vmatprep.subr.mxu0 0.0
    %500 = vmatpush1.msra.mxu0 0.0
    %501 = vmatprep.subr.mxu0 0.0
    %502 = vmatpush1.msra.mxu0 0.0
    %503 = vmatprep.subr.mxu0 0.0
    %504 = vmatpush1.msra.mxu0 0.0
    %505 = vmatprep.subr.mxu0 0.0
    %506 = vmatpush1.msra.mxu0 0.0
    %507 = vmatprep.subr.mxu0 0.0
    %508 = vmatpush1.msra.mxu0 0.0
    %509 = vmatprep.subr.mxu0 0.0
    %510 = vmatpush1.msra.mxu0 0.0
    %511 = vmatprep.subr.mxu0 0.0
    %512 = vmatpush1.msra.mxu0 0.0
    %513 = vmatprep.subr.mxu0 0.0
    %514 = vmatpush1.msra.mxu0 0.0
    %515 = vmatprep.subr.mxu0 0.0
    %516 = vmatpush1.msra.mxu0 0.0
    %517 = vmatprep.subr.mxu0 0.0
    %518 = vmatpush1.msra.mxu0 0.0
    %519 = vmatprep.subr.mxu0 0.0
    %520 = vmatpush1.msra.mxu0 0.0
    %521 = vmatprep.subr.mxu0 0.0
    %522 = vmatpush1.msra.mxu0 0.0
    %523 = vmatprep.subr.mxu0 0.0
    %524 = vmatpush1.msra.mxu0 0.0
    %525 = vmatprep.mubr.f32.mxu0 0.0
    %v526 = vand.u32 %v156, 4294901760
    %527 = vmatmul.mubr.f32.gmra.mrb[0].mxu0 %v526
    %v528 = vpop.f32.mrb[0].mxu0
    %v529 = vadd.f32 %v455, %v528
    %v530 = vpop.f32.mrb[0].mxu0
    %531 = vdwg.mxu0
    %532 = vmatprep.subr.mxu0 0.0
    %v533 = vand.u32 %v136, 4294901760
    %534 = vmatpush1.msra.mxu0 %v533
    %535 = vmatprep.subr.mxu0 0.0
    %536 = vmatpush1.msra.mxu0 0.0
    %537 = vmatprep.subr.mxu0 0.0
    %538 = vmatpush1.msra.mxu0 0.0
    %539 = vmatprep.subr.mxu0 0.0
    %540 = vmatpush1.msra.mxu0 0.0
    %541 = vmatprep.subr.mxu0 0.0
    %542 = vmatpush1.msra.mxu0 0.0
    %543 = vmatprep.subr.mxu0 0.0
    %544 = vmatpush1.msra.mxu0 0.0
    %545 = vmatprep.subr.mxu0 0.0
    %546 = vmatpush1.msra.mxu0 0.0
    %547 = vmatprep.subr.mxu0 0.0
    %548 = vmatpush1.msra.mxu0 0.0
    %549 = vmatprep.subr.mxu0 0.0
    %550 = vmatpush1.msra.mxu0 0.0
    %551 = vmatprep.subr.mxu0 0.0
    %552 = vmatpush1.msra.mxu0 0.0
    %553 = vmatprep.subr.mxu0 0.0
    %554 = vmatpush1.msra.mxu0 0.0
    %555 = vmatprep.subr.mxu0 0.0
    %556 = vmatpush1.msra.mxu0 0.0
    %557 = vmatprep.subr.mxu0 0.0
    %558 = vmatpush1.msra.mxu0 0.0
    %559 = vmatprep.subr.mxu0 0.0
    %560 = vmatpush1.msra.mxu0 0.0
    %561 = vmatprep.subr.mxu0 0.0
    %562 = vmatpush1.msra.mxu0 0.0
    %563 = vmatprep.subr.mxu0 0.0
    %564 = vmatpush1.msra.mxu0 0.0
    %565 = vmatprep.subr.mxu0 0.0
    %566 = vmatpush1.msra.mxu0 0.0
    %567 = vmatprep.subr.mxu0 0.0
    %568 = vmatpush1.msra.mxu0 0.0
    %569 = vmatprep.subr.mxu0 0.0
    %570 = vmatpush1.msra.mxu0 0.0
    %571 = vmatprep.subr.mxu0 0.0
    %572 = vmatpush1.msra.mxu0 0.0
    %573 = vmatprep.subr.mxu0 0.0
    %574 = vmatpush1.msra.mxu0 0.0
    %575 = vmatprep.subr.mxu0 0.0
    %576 = vmatpush1.msra.mxu0 0.0
    %577 = vmatprep.subr.mxu0 0.0
    %578 = vmatpush1.msra.mxu0 0.0
    %579 = vmatprep.subr.mxu0 0.0
    %580 = vmatpush1.msra.mxu0 0.0
    %581 = vmatprep.subr.mxu0 0.0
    %582 = vmatpush1.msra.mxu0 0.0
    %583 = vmatprep.subr.mxu0 0.0
    %584 = vmatpush1.msra.mxu0 0.0
    %585 = vmatprep.subr.mxu0 0.0
    %586 = vmatpush1.msra.mxu0 0.0
    %587 = vmatprep.subr.mxu0 0.0
    %588 = vmatpush1.msra.mxu0 0.0
    %589 = vmatprep.subr.mxu0 0.0
    %590 = vmatpush1.msra.mxu0 0.0
    %591 = vmatprep.subr.mxu0 0.0
    %592 = vmatpush1.msra.mxu0 0.0
    %593 = vmatprep.subr.mxu0 0.0
    %594 = vmatpush1.msra.mxu0 0.0
    %595 = vmatprep.subr.mxu0 0.0
    %596 = vmatpush1.msra.mxu0 0.0
    %597 = vmatprep.mubr.f32.mxu0 0.0
    %v598 = vand.u32 %v156, 4294901760
    %599 = vmatmul.mubr.f32.gmra.mrb[0].mxu0 %v598
    %v600 = vpop.f32.mrb[0].mxu0
    %v601 = vadd.f32 %v529, %v600
    %v602 = vpop.f32.mrb[0].mxu0
    %603 = vdwg.mxu0
    %v604 = vmul.f32 %v153, %v601
    %v605 = vadd.f32 %v143, %v604
    %v607 = vcombine.high %v142, %v142
    %v609 = vunpack.c.l.s4 1966171168
    %v610 = vunpack.c.0.s8 %v609
    %v611 = vlaneseq
    %v612 = vshrl.u32 %v611, 7
    %v613 = vsub.s32 %v610, %v612
    %v614 = vrot.slane %v142, %v613
    %v616 = vunpack.c.l.s4 1966171168
    %v617 = vunpack.c.0.s8 %v616
    %v618 = vlaneseq
    %v619 = vshrl.u32 %v618, 7
    %v620 = vsub.s32 %v617, %v619
    %v621 = vrot.slane %v607, %v620
    %v622 = vcombine.high %v614, %v614
    %v623 = vcombine.high %v621, %v621
    %v625 = vunpack.c.l.s4 1966171168
    %v626 = vunpack.c.0.s8 %v625
    %v627 = vlaneseq
    %v628 = vshrl.u32 %v627, 7
    %v629 = vsub.s32 %v626, %v628
    %v630 = vrot.slane %v614, %v629
    %v632 = vunpack.c.l.s4 1966171168
    %v633 = vunpack.c.0.s8 %v632
    %v634 = vlaneseq
    %v635 = vshrl.u32 %v634, 7
    %v636 = vsub.s32 %v633, %v635
    %v637 = vrot.slane %v621, %v636
    %v639 = vunpack.c.l.s4 1966171168
    %v640 = vunpack.c.0.s8 %v639
    %v641 = vlaneseq
    %v642 = vshrl.u32 %v641, 7
    %v643 = vsub.s32 %v640, %v642
    %v644 = vrot.slane %v622, %v643
    %v646 = vunpack.c.l.s4 1966171168
    %v647 = vunpack.c.0.s8 %v646
    %v648 = vlaneseq
    %v649 = vshrl.u32 %v648, 7
    %v650 = vsub.s32 %v647, %v649
    %v651 = vrot.slane %v623, %v650
    %v652 = vcombine.high %v630, %v630
    %v653 = vcombine.high %v637, %v637
    %v654 = vcombine.high %v644, %v644
    %v655 = vcombine.high %v651, %v651
    %v656 = vlaneseq
    %v657 = vshrl.u32 %v656, 7
    %v658 = vsub.s32 0, %v657
    %v659 = vrot.slane %v630, %v658
    %v660 = vlaneseq
    %v661 = vshrl.u32 %v660, 7
    %v662 = vsub.s32 0, %v661
    %v663 = vrot.slane %v644, %v662
    %v664 = vlaneseq
    %v665 = vshrl.u32 %v664, 7
    %v666 = vsub.s32 0, %v665
    %v667 = vrot.slane %v652, %v666
    %v668 = vlaneseq
    %v669 = vshrl.u32 %v668, 7
    %v670 = vsub.s32 0, %v669
    %v671 = vrot.slane %v654, %v670
    %v672 = vlaneseq
    %v673 = vshrl.u32 %v672, 7
    %v674 = vsub.s32 0, %v673
    %v675 = vrot.slane %v637, %v674
    %v676 = vlaneseq
    %v677 = vshrl.u32 %v676, 7
    %v678 = vsub.s32 0, %v677
    %v679 = vrot.slane %v651, %v678
    %v680 = vlaneseq
    %v681 = vshrl.u32 %v680, 7
    %v682 = vsub.s32 0, %v681
    %v683 = vrot.slane %v653, %v682
    %v684 = vlaneseq
    %v685 = vshrl.u32 %v684, 7
    %v686 = vsub.s32 0, %v685
    %v687 = vrot.slane %v655, %v686
    %v696 = vadd.f32 %v659, %v78
    %v697 = vadd.f32 %v663, %v85
    %v698 = vadd.f32 %v667, %v92
    %v699 = vadd.f32 %v671, %v99
    %v700 = vadd.f32 %v675, %v106
    %v701 = vadd.f32 %v679, %v113
    %v702 = vadd.f32 %v683, %v120
    %v703 = vadd.f32 %v687, %v127
    %v704 = vsel %vm154, %v696, -inf
    %v705 = vsel %vm154, %v697, -inf
    %v706 = vsel %vm154, %v698, -inf
    %v707 = vsel %vm154, %v699, -inf
    %v708 = vsel %vm154, %v700, -inf
    %v709 = vmax.f32 %v704, %v708
    %v710 = vsel %vm154, %v701, -inf
    %v711 = vmax.f32 %v705, %v710
    %v712 = vsel %vm154, %v702, -inf
    %v713 = vmax.f32 %v706, %v712
    %v714 = vsel %vm154, %v703, -inf
    %v715 = vmax.f32 %v707, %v714
    %v716 = vmax.f32 %v709, %v711
    %v717 = vmax.f32 %v713, %v715
    %v718 = vmax.f32 %v716, %v717
    %v719 = vsub.f32 %v696, %v718
    %v720 = vsub.f32 %v697, %v718
    %v721 = vsub.f32 %v698, %v718
    %v722 = vsub.f32 %v699, %v718
    %v723 = vsub.f32 %v700, %v718
    %v724 = vsub.f32 %v701, %v718
    %v725 = vsub.f32 %v702, %v718
    %v726 = vsub.f32 %v703, %v718
    %v727 = vmul.f32 %v719, 1.442695
    %v728 = vpow.pop %v727
    %v729 = vmul.f32 %v720, 1.442695
    %v730 = vpow.pop %v729
    %v731 = vmul.f32 %v721, 1.442695
    %v732 = vpow.pop %v731
    %v733 = vmul.f32 %v722, 1.442695
    %v734 = vpow.pop %v733
    %v735 = vmul.f32 %v723, 1.442695
    %v736 = vpow.pop %v735
    %v737 = vmul.f32 %v724, 1.442695
    %v738 = vpow.pop %v737
    %v739 = vmul.f32 %v725, 1.442695
    %v740 = vpow.pop %v739
    %v741 = vmul.f32 %v726, 1.442695
    %v742 = vpow.pop %v741
    %v743 = vsel %vm154, %v728, 0.0
    %v744 = vsel %vm154, %v730, 0.0
    %v745 = vadd.f32 %v743, %v744
    %v746 = vsel %vm154, %v732, 0.0
    %v747 = vadd.f32 %v745, %v746
    %v748 = vsel %vm154, %v734, 0.0
    %v749 = vadd.f32 %v747, %v748
    %v750 = vsel %vm154, %v736, 0.0
    %v751 = vadd.f32 %v749, %v750
    %v752 = vsel %vm154, %v738, 0.0
    %v753 = vadd.f32 %v751, %v752
    %v754 = vsel %vm154, %v740, 0.0
    %v755 = vadd.f32 %v753, %v754
    %v756 = vsel %vm154, %v742, 0.0
    %v757 = vadd.f32 %v755, %v756
    %v758 = vlog2.pop %v757
    %v759 = vmul.f32 %v758, 0.6931472
    %v760 = vadd.f32 %v718, %v759
    %v761 = vadd.f32 %v760, %v145
    %s762 = scalar_lea.vmem [#allocation2], 16
    %v763 = vld [vmem:[%s762] sm:$0xff]
    %v764 = vld [vmem:[%s1 + $0x2] sm:$0x1]
    %v765 = vlaneseq
    %v766 = vshrl.u32 %v765, 7
    %v767 = vsub.s32 0, %v766
    %v768 = vrot.slane %v764, %v767
    %vm769 = vcmp.eq.s32.totalorder %v768, %v39
    %v770 = vsel %vm769, 1, 0
    %v771 = vcvt.s32.f32 %v770
    %772 = vmatprep.subr.mxu0 0.0
    %v773 = vand.u32 %v153, 4294901760
    %774 = vmatpush1.msra.mxu0 %v773
    %775 = vmatprep.subr.mxu0 0.0
    %776 = vmatpush1.msra.mxu0 0.0
    %777 = vmatprep.subr.mxu0 0.0
    %778 = vmatpush1.msra.mxu0 0.0
    %779 = vmatprep.subr.mxu0 0.0
    %780 = vmatpush1.msra.mxu0 0.0
    %781 = vmatprep.subr.mxu0 0.0
    %782 = vmatpush1.msra.mxu0 0.0
    %783 = vmatprep.subr.mxu0 0.0
    %784 = vmatpush1.msra.mxu0 0.0
    %785 = vmatprep.subr.mxu0 0.0
    %786 = vmatpush1.msra.mxu0 0.0
    %787 = vmatprep.subr.mxu0 0.0
    %788 = vmatpush1.msra.mxu0 0.0
    %789 = vmatprep.subr.mxu0 0.0
    %790 = vmatpush1.msra.mxu0 0.0
    %791 = vmatprep.subr.mxu0 0.0
    %792 = vmatpush1.msra.mxu0 0.0
    %793 = vmatprep.subr.mxu0 0.0
    %794 = vmatpush1.msra.mxu0 0.0
    %795 = vmatprep.subr.mxu0 0.0
    %796 = vmatpush1.msra.mxu0 0.0
    %797 = vmatprep.subr.mxu0 0.0
    %798 = vmatpush1.msra.mxu0 0.0
    %799 = vmatprep.subr.mxu0 0.0
    %800 = vmatpush1.msra.mxu0 0.0
    %801 = vmatprep.subr.mxu0 0.0
    %802 = vmatpush1.msra.mxu0 0.0
    %803 = vmatprep.subr.mxu0 0.0
    %804 = vmatpush1.msra.mxu0 0.0
    %805 = vmatprep.subr.mxu0 0.0
    %806 = vmatpush1.msra.mxu0 0.0
    %807 = vmatprep.subr.mxu0 0.0
    %808 = vmatpush1.msra.mxu0 0.0
    %809 = vmatprep.subr.mxu0 0.0
    %810 = vmatpush1.msra.mxu0 0.0
    %811 = vmatprep.subr.mxu0 0.0
    %812 = vmatpush1.msra.mxu0 0.0
    %813 = vmatprep.subr.mxu0 0.0
    %814 = vmatpush1.msra.mxu0 0.0
    %815 = vmatprep.subr.mxu0 0.0
    %816 = vmatpush1.msra.mxu0 0.0
    %817 = vmatprep.subr.mxu0 0.0
    %818 = vmatpush1.msra.mxu0 0.0
    %819 = vmatprep.subr.mxu0 0.0
    %820 = vmatpush1.msra.mxu0 0.0
    %821 = vmatprep.subr.mxu0 0.0
    %822 = vmatpush1.msra.mxu0 0.0
    %823 = vmatprep.subr.mxu0 0.0
    %824 = vmatpush1.msra.mxu0 0.0
    %825 = vmatprep.subr.mxu0 0.0
    %826 = vmatpush1.msra.mxu0 0.0
    %827 = vmatprep.subr.mxu0 0.0
    %828 = vmatpush1.msra.mxu0 0.0
    %829 = vmatprep.subr.mxu0 0.0
    %830 = vmatpush1.msra.mxu0 0.0
    %831 = vmatprep.subr.mxu0 0.0
    %832 = vmatpush1.msra.mxu0 0.0
    %833 = vmatprep.subr.mxu0 0.0
    %834 = vmatpush1.msra.mxu0 0.0
    %835 = vmatprep.subr.mxu0 0.0
    %836 = vmatpush1.msra.mxu0 0.0
    %837 = vmatprep.mubr.f32.mxu0 0.0
    %v838 = vand.u32 %v156, 4294901760
    %v839 = vsub.f32 %v156, %v838
    %v840 = vand.u32 %v839, 4294901760
    %v841 = vsub.f32 %v839, %v840
    %v842 = vand.u32 %v841, 4294901760
    %843 = vmatmul.mubr.f32.gmra.mrb[0].mxu0 %v842
    %v844 = vpop.f32.mrb[0].mxu0
    %v845 = vadd.f32 %v763, %v844
    %v846 = vpop.f32.mrb[0].mxu0
    %847 = vdwg.mxu0
    %848 = vmatprep.subr.mxu0 0.0
    %v849 = vand.u32 %v153, 4294901760
    %v850 = vsub.f32 %v153, %v849
    %v851 = vand.u32 %v850, 4294901760
    %v852 = vsub.f32 %v850, %v851
    %v853 = vand.u32 %v852, 4294901760
    %854 = vmatpush1.msra.mxu0 %v853
    %855 = vmatprep.subr.mxu0 0.0
    %856 = vmatpush1.msra.mxu0 0.0
    %857 = vmatprep.subr.mxu0 0.0
    %858 = vmatpush1.msra.mxu0 0.0
    %859 = vmatprep.subr.mxu0 0.0
    %860 = vmatpush1.msra.mxu0 0.0
    %861 = vmatprep.subr.mxu0 0.0
    %862 = vmatpush1.msra.mxu0 0.0
    %863 = vmatprep.subr.mxu0 0.0
    %864 = vmatpush1.msra.mxu0 0.0
    %865 = vmatprep.subr.mxu0 0.0
    %866 = vmatpush1.msra.mxu0 0.0
    %867 = vmatprep.subr.mxu0 0.0
    %868 = vmatpush1.msra.mxu0 0.0
    %869 = vmatprep.subr.mxu0 0.0
    %870 = vmatpush1.msra.mxu0 0.0
    %871 = vmatprep.subr.mxu0 0.0
    %872 = vmatpush1.msra.mxu0 0.0
    %873 = vmatprep.subr.mxu0 0.0
    %874 = vmatpush1.msra.mxu0 0.0
    %875 = vmatprep.subr.mxu0 0.0
    %876 = vmatpush1.msra.mxu0 0.0
    %877 = vmatprep.subr.mxu0 0.0
    %878 = vmatpush1.msra.mxu0 0.0
    %879 = vmatprep.subr.mxu0 0.0
    %880 = vmatpush1.msra.mxu0 0.0
    %881 = vmatprep.subr.mxu0 0.0
    %882 = vmatpush1.msra.mxu0 0.0
    %883 = vmatprep.subr.mxu0 0.0
    %884 = vmatpush1.msra.mxu0 0.0
    %885 = vmatprep.subr.mxu0 0.0
    %886 = vmatpush1.msra.mxu0 0.0
    %887 = vmatprep.subr.mxu0 0.0
    %888 = vmatpush1.msra.mxu0 0.0
    %889 = vmatprep.subr.mxu0 0.0
    %890 = vmatpush1.msra.mxu0 0.0
    %891 = vmatprep.subr.mxu0 0.0
    %892 = vmatpush1.msra.mxu0 0.0
    %893 = vmatprep.subr.mxu0 0.0
    %894 = vmatpush1.msra.mxu0 0.0
    %895 = vmatprep.subr.mxu0 0.0
    %896 = vmatpush1.msra.mxu0 0.0
    %897 = vmatprep.subr.mxu0 0.0
    %898 = vmatpush1.msra.mxu0 0.0
    %899 = vmatprep.subr.mxu0 0.0
    %900 = vmatpush1.msra.mxu0 0.0
    %901 = vmatprep.subr.mxu0 0.0
    %902 = vmatpush1.msra.mxu0 0.0
    %903 = vmatprep.subr.mxu0 0.0
    %904 = vmatpush1.msra.mxu0 0.0
    %905 = vmatprep.subr.mxu0 0.0
    %906 = vmatpush1.msra.mxu0 0.0
    %907 = vmatprep.subr.mxu0 0.0
    %908 = vmatpush1.msra.mxu0 0.0
    %909 = vmatprep.subr.mxu0 0.0
    %910 = vmatpush1.msra.mxu0 0.0
    %911 = vmatprep.subr.mxu0 0.0
    %912 = vmatpush1.msra.mxu0 0.0
    %913 = vmatprep.subr.mxu0 0.0
    %914 = vmatpush1.msra.mxu0 0.0
    %915 = vmatprep.subr.mxu0 0.0
    %916 = vmatpush1.msra.mxu0 0.0
    %917 = vmatprep.mubr.f32.mxu0 0.0
    %v918 = vand.u32 %v156, 4294901760
    %919 = vmatmul.mubr.f32.gmra.mrb[0].mxu0 %v918
    %v920 = vpop.f32.mrb[0].mxu0
    %v921 = vadd.f32 %v845, %v920
    %v922 = vpop.f32.mrb[0].mxu0
    %923 = vdwg.mxu0
    %924 = vmatprep.subr.mxu0 0.0
    %v925 = vand.u32 %v153, 4294901760
    %v926 = vsub.f32 %v153, %v925
    %927 = vmatpush1.msra.mxu0 %v926
    %928 = vmatprep.subr.mxu0 0.0
    %929 = vmatpush1.msra.mxu0 0.0
    %930 = vmatprep.subr.mxu0 0.0
    %931 = vmatpush1.msra.mxu0 0.0
    %932 = vmatprep.subr.mxu0 0.0
    %933 = vmatpush1.msra.mxu0 0.0
    %934 = vmatprep.subr.mxu0 0.0
    %935 = vmatpush1.msra.mxu0 0.0
    %936 = vmatprep.subr.mxu0 0.0
    %937 = vmatpush1.msra.mxu0 0.0
    %938 = vmatprep.subr.mxu0 0.0
    %939 = vmatpush1.msra.mxu0 0.0
    %940 = vmatprep.subr.mxu0 0.0
    %941 = vmatpush1.msra.mxu0 0.0
    %942 = vmatprep.subr.mxu0 0.0
    %943 = vmatpush1.msra.mxu0 0.0
    %944 = vmatprep.subr.mxu0 0.0
    %945 = vmatpush1.msra.mxu0 0.0
    %946 = vmatprep.subr.mxu0 0.0
    %947 = vmatpush1.msra.mxu0 0.0
    %948 = vmatprep.subr.mxu0 0.0
    %949 = vmatpush1.msra.mxu0 0.0
    %950 = vmatprep.subr.mxu0 0.0
    %951 = vmatpush1.msra.mxu0 0.0
    %952 = vmatprep.subr.mxu0 0.0
    %953 = vmatpush1.msra.mxu0 0.0
    %954 = vmatprep.subr.mxu0 0.0
    %955 = vmatpush1.msra.mxu0 0.0
    %956 = vmatprep.subr.mxu0 0.0
    %957 = vmatpush1.msra.mxu0 0.0
    %958 = vmatprep.subr.mxu0 0.0
    %959 = vmatpush1.msra.mxu0 0.0
    %960 = vmatprep.subr.mxu0 0.0
    %961 = vmatpush1.msra.mxu0 0.0
    %962 = vmatprep.subr.mxu0 0.0
    %963 = vmatpush1.msra.mxu0 0.0
    %964 = vmatprep.subr.mxu0 0.0
    %965 = vmatpush1.msra.mxu0 0.0
    %966 = vmatprep.subr.mxu0 0.0
    %967 = vmatpush1.msra.mxu0 0.0
    %968 = vmatprep.subr.mxu0 0.0
    %969 = vmatpush1.msra.mxu0 0.0
    %970 = vmatprep.subr.mxu0 0.0
    %971 = vmatpush1.msra.mxu0 0.0
    %972 = vmatprep.subr.mxu0 0.0
    %973 = vmatpush1.msra.mxu0 0.0
    %974 = vmatprep.subr.mxu0 0.0
    %975 = vmatpush1.msra.mxu0 0.0
    %976 = vmatprep.subr.mxu0 0.0
    %977 = vmatpush1.msra.mxu0 0.0
    %978 = vmatprep.subr.mxu0 0.0
    %979 = vmatpush1.msra.mxu0 0.0
    %980 = vmatprep.subr.mxu0 0.0
    %981 = vmatpush1.msra.mxu0 0.0
    %982 = vmatprep.subr.mxu0 0.0
    %983 = vmatpush1.msra.mxu0 0.0
    %984 = vmatprep.subr.mxu0 0.0
    %985 = vmatpush1.msra.mxu0 0.0
    %986 = vmatprep.subr.mxu0 0.0
    %987 = vmatpush1.msra.mxu0 0.0
    %988 = vmatprep.subr.mxu0 0.0
    %989 = vmatpush1.msra.mxu0 0.0
    %990 = vmatprep.mubr.f32.mxu0 0.0
    %v991 = vand.u32 %v156, 4294901760
    %v992 = vsub.f32 %v156, %v991
    %993 = vmatmul.mubr.f32.gmra.mrb[0].mxu0 %v992
    %v994 = vpop.f32.mrb[0].mxu0
    %v995 = vadd.f32 %v921, %v994
    %v996 = vpop.f32.mrb[0].mxu0
    %997 = vdwg.mxu0
    %998 = vmatprep.subr.mxu0 0.0
    %v999 = vand.u32 %v153, 4294901760
    %1000 = vmatpush1.msra.mxu0 %v999
    %1001 = vmatprep.subr.mxu0 0.0
    %1002 = vmatpush1.msra.mxu0 0.0
    %1003 = vmatprep.subr.mxu0 0.0
    %1004 = vmatpush1.msra.mxu0 0.0
    %1005 = vmatprep.subr.mxu0 0.0
    %1006 = vmatpush1.msra.mxu0 0.0
    %1007 = vmatprep.subr.mxu0 0.0
    %1008 = vmatpush1.msra.mxu0 0.0
    %1009 = vmatprep.subr.mxu0 0.0
    %1010 = vmatpush1.msra.mxu0 0.0
    %1011 = vmatprep.subr.mxu0 0.0
    %1012 = vmatpush1.msra.mxu0 0.0
    %1013 = vmatprep.subr.mxu0 0.0
    %1014 = vmatpush1.msra.mxu0 0.0
    %1015 = vmatprep.subr.mxu0 0.0
    %1016 = vmatpush1.msra.mxu0 0.0
    %1017 = vmatprep.subr.mxu0 0.0
    %1018 = vmatpush1.msra.mxu0 0.0
    %1019 = vmatprep.subr.mxu0 0.0
    %1020 = vmatpush1.msra.mxu0 0.0
    %1021 = vmatprep.subr.mxu0 0.0
    %1022 = vmatpush1.msra.mxu0 0.0
    %1023 = vmatprep.subr.mxu0 0.0
    %1024 = vmatpush1.msra.mxu0 0.0
    %1025 = vmatprep.subr.mxu0 0.0
    %1026 = vmatpush1.msra.mxu0 0.0
    %1027 = vmatprep.subr.mxu0 0.0
    %1028 = vmatpush1.msra.mxu0 0.0
    %1029 = vmatprep.subr.mxu0 0.0
    %1030 = vmatpush1.msra.mxu0 0.0
    %1031 = vmatprep.subr.mxu0 0.0
    %1032 = vmatpush1.msra.mxu0 0.0
    %1033 = vmatprep.subr.mxu0 0.0
    %1034 = vmatpush1.msra.mxu0 0.0
    %1035 = vmatprep.subr.mxu0 0.0
    %1036 = vmatpush1.msra.mxu0 0.0
    %1037 = vmatprep.subr.mxu0 0.0
    %1038 = vmatpush1.msra.mxu0 0.0
    %1039 = vmatprep.subr.mxu0 0.0
    %1040 = vmatpush1.msra.mxu0 0.0
    %1041 = vmatprep.subr.mxu0 0.0
    %1042 = vmatpush1.msra.mxu0 0.0
    %1043 = vmatprep.subr.mxu0 0.0
    %1044 = vmatpush1.msra.mxu0 0.0
    %1045 = vmatprep.subr.mxu0 0.0
    %1046 = vmatpush1.msra.mxu0 0.0
    %1047 = vmatprep.subr.mxu0 0.0
    %1048 = vmatpush1.msra.mxu0 0.0
    %1049 = vmatprep.subr.mxu0 0.0
    %1050 = vmatpush1.msra.mxu0 0.0
    %1051 = vmatprep.subr.mxu0 0.0
    %1052 = vmatpush1.msra.mxu0 0.0
    %1053 = vmatprep.subr.mxu0 0.0
    %1054 = vmatpush1.msra.mxu0 0.0
    %1055 = vmatprep.subr.mxu0 0.0
    %1056 = vmatpush1.msra.mxu0 0.0
    %1057 = vmatprep.subr.mxu0 0.0
    %1058 = vmatpush1.msra.mxu0 0.0
    %1059 = vmatprep.subr.mxu0 0.0
    %1060 = vmatpush1.msra.mxu0 0.0
    %1061 = vmatprep.subr.mxu0 0.0
    %1062 = vmatpush1.msra.mxu0 0.0
    %1063 = vmatprep.mubr.f32.mxu0 0.0
    %v1064 = vand.u32 %v156, 4294901760
    %v1065 = vsub.f32 %v156, %v1064
    %v1066 = vand.u32 %v1065, 4294901760
    %1067 = vmatmul.mubr.f32.gmra.mrb[0].mxu0 %v1066
    %v1068 = vpop.f32.mrb[0].mxu0
    %v1069 = vadd.f32 %v995, %v1068
    %v1070 = vpop.f32.mrb[0].mxu0
    %1071 = vdwg.mxu0
    %1072 = vmatprep.subr.mxu0 0.0
    %v1073 = vand.u32 %v153, 4294901760
    %v1074 = vsub.f32 %v153, %v1073
    %v1075 = vand.u32 %v1074, 4294901760
    %1076 = vmatpush1.msra.mxu0 %v1075
    %1077 = vmatprep.subr.mxu0 0.0
    %1078 = vmatpush1.msra.mxu0 0.0
    %1079 = vmatprep.subr.mxu0 0.0
    %1080 = vmatpush1.msra.mxu0 0.0
    %1081 = vmatprep.subr.mxu0 0.0
    %1082 = vmatpush1.msra.mxu0 0.0
    %1083 = vmatprep.subr.mxu0 0.0
    %1084 = vmatpush1.msra.mxu0 0.0
    %1085 = vmatprep.subr.mxu0 0.0
    %1086 = vmatpush1.msra.mxu0 0.0
    %1087 = vmatprep.subr.mxu0 0.0
    %1088 = vmatpush1.msra.mxu0 0.0
    %1089 = vmatprep.subr.mxu0 0.0
    %1090 = vmatpush1.msra.mxu0 0.0
    %1091 = vmatprep.subr.mxu0 0.0
    %1092 = vmatpush1.msra.mxu0 0.0
    %1093 = vmatprep.subr.mxu0 0.0
    %1094 = vmatpush1.msra.mxu0 0.0
    %1095 = vmatprep.subr.mxu0 0.0
    %1096 = vmatpush1.msra.mxu0 0.0
    %1097 = vmatprep.subr.mxu0 0.0
    %1098 = vmatpush1.msra.mxu0 0.0
    %1099 = vmatprep.subr.mxu0 0.0
    %1100 = vmatpush1.msra.mxu0 0.0
    %1101 = vmatprep.subr.mxu0 0.0
    %1102 = vmatpush1.msra.mxu0 0.0
    %1103 = vmatprep.subr.mxu0 0.0
    %1104 = vmatpush1.msra.mxu0 0.0
    %1105 = vmatprep.subr.mxu0 0.0
    %1106 = vmatpush1.msra.mxu0 0.0
    %1107 = vmatprep.subr.mxu0 0.0
    %1108 = vmatpush1.msra.mxu0 0.0
    %1109 = vmatprep.subr.mxu0 0.0
    %1110 = vmatpush1.msra.mxu0 0.0
    %1111 = vmatprep.subr.mxu0 0.0
    %1112 = vmatpush1.msra.mxu0 0.0
    %1113 = vmatprep.subr.mxu0 0.0
    %1114 = vmatpush1.msra.mxu0 0.0
    %1115 = vmatprep.subr.mxu0 0.0
    %1116 = vmatpush1.msra.mxu0 0.0
    %1117 = vmatprep.subr.mxu0 0.0
    %1118 = vmatpush1.msra.mxu0 0.0
    %1119 = vmatprep.subr.mxu0 0.0
    %1120 = vmatpush1.msra.mxu0 0.0
    %1121 = vmatprep.subr.mxu0 0.0
    %1122 = vmatpush1.msra.mxu0 0.0
    %1123 = vmatprep.subr.mxu0 0.0
    %1124 = vmatpush1.msra.mxu0 0.0
    %1125 = vmatprep.subr.mxu0 0.0
    %1126 = vmatpush1.msra.mxu0 0.0
    %1127 = vmatprep.subr.mxu0 0.0
    %1128 = vmatpush1.msra.mxu0 0.0
    %1129 = vmatprep.subr.mxu0 0.0
    %1130 = vmatpush1.msra.mxu0 0.0
    %1131 = vmatprep.subr.mxu0 0.0
    %1132 = vmatpush1.msra.mxu0 0.0
    %1133 = vmatprep.subr.mxu0 0.0
    %1134 = vmatpush1.msra.mxu0 0.0
    %1135 = vmatprep.subr.mxu0 0.0
    %1136 = vmatpush1.msra.mxu0 0.0
    %1137 = vmatprep.subr.mxu0 0.0
    %1138 = vmatpush1.msra.mxu0 0.0
    %1139 = vmatprep.mubr.f32.mxu0 0.0
    %v1140 = vand.u32 %v156, 4294901760
    %1141 = vmatmul.mubr.f32.gmra.mrb[0].mxu0 %v1140
    %v1142 = vpop.f32.mrb[0].mxu0
    %v1143 = vadd.f32 %v1069, %v1142
    %v1144 = vpop.f32.mrb[0].mxu0
    %1145 = vdwg.mxu0
    %1146 = vmatprep.subr.mxu0 0.0
    %v1147 = vand.u32 %v153, 4294901760
    %1148 = vmatpush1.msra.mxu0 %v1147
    %1149 = vmatprep.subr.mxu0 0.0
    %1150 = vmatpush1.msra.mxu0 0.0
    %1151 = vmatprep.subr.mxu0 0.0
    %1152 = vmatpush1.msra.mxu0 0.0
    %1153 = vmatprep.subr.mxu0 0.0
    %1154 = vmatpush1.msra.mxu0 0.0
    %1155 = vmatprep.subr.mxu0 0.0
    %1156 = vmatpush1.msra.mxu0 0.0
    %1157 = vmatprep.subr.mxu0 0.0
    %1158 = vmatpush1.msra.mxu0 0.0
    %1159 = vmatprep.subr.mxu0 0.0
    %1160 = vmatpush1.msra.mxu0 0.0
    %1161 = vmatprep.subr.mxu0 0.0
    %1162 = vmatpush1.msra.mxu0 0.0
    %1163 = vmatprep.subr.mxu0 0.0
    %1164 = vmatpush1.msra.mxu0 0.0
    %1165 = vmatprep.subr.mxu0 0.0
    %1166 = vmatpush1.msra.mxu0 0.0
    %1167 = vmatprep.subr.mxu0 0.0
    %1168 = vmatpush1.msra.mxu0 0.0
    %1169 = vmatprep.subr.mxu0 0.0
    %1170 = vmatpush1.msra.mxu0 0.0
    %1171 = vmatprep.subr.mxu0 0.0
    %1172 = vmatpush1.msra.mxu0 0.0
    %1173 = vmatprep.subr.mxu0 0.0
    %1174 = vmatpush1.msra.mxu0 0.0
    %1175 = vmatprep.subr.mxu0 0.0
    %1176 = vmatpush1.msra.mxu0 0.0
    %1177 = vmatprep.subr.mxu0 0.0
    %1178 = vmatpush1.msra.mxu0 0.0
    %1179 = vmatprep.subr.mxu0 0.0
    %1180 = vmatpush1.msra.mxu0 0.0
    %1181 = vmatprep.subr.mxu0 0.0
    %1182 = vmatpush1.msra.mxu0 0.0
    %1183 = vmatprep.subr.mxu0 0.0
    %1184 = vmatpush1.msra.mxu0 0.0
    %1185 = vmatprep.subr.mxu0 0.0
    %1186 = vmatpush1.msra.mxu0 0.0
    %1187 = vmatprep.subr.mxu0 0.0
    %1188 = vmatpush1.msra.mxu0 0.0
    %1189 = vmatprep.subr.mxu0 0.0
    %1190 = vmatpush1.msra.mxu0 0.0
    %1191 = vmatprep.subr.mxu0 0.0
    %1192 = vmatpush1.msra.mxu0 0.0
    %1193 = vmatprep.subr.mxu0 0.0
    %1194 = vmatpush1.msra.mxu0 0.0
    %1195 = vmatprep.subr.mxu0 0.0
    %1196 = vmatpush1.msra.mxu0 0.0
    %1197 = vmatprep.subr.mxu0 0.0
    %1198 = vmatpush1.msra.mxu0 0.0
    %1199 = vmatprep.subr.mxu0 0.0
    %1200 = vmatpush1.msra.mxu0 0.0
    %1201 = vmatprep.subr.mxu0 0.0
    %1202 = vmatpush1.msra.mxu0 0.0
    %1203 = vmatprep.subr.mxu0 0.0
    %1204 = vmatpush1.msra.mxu0 0.0
    %1205 = vmatprep.subr.mxu0 0.0
    %1206 = vmatpush1.msra.mxu0 0.0
    %1207 = vmatprep.subr.mxu0 0.0
    %1208 = vmatpush1.msra.mxu0 0.0
    %1209 = vmatprep.subr.mxu0 0.0
    %1210 = vmatpush1.msra.mxu0 0.0
    %1211 = vmatprep.mubr.f32.mxu0 0.0
    %v1212 = vand.u32 %v156, 4294901760
    %1213 = vmatmul.mubr.f32.gmra.mrb[0].mxu0 %v1212
    %v1214 = vpop.f32.mrb[0].mxu0
    %v1215 = vadd.f32 %v1143, %v1214
    %v1216 = vpop.f32.mrb[0].mxu0
    %1217 = vdwg.mxu0
    %v1218 = vmul.f32 %v771, %v1215
    %v1219 = vadd.f32 %v605, %v1218
    %v1221 = vcombine.high %v761, %v761
    %v1223 = vunpack.c.l.s4 1966171168
    %v1224 = vunpack.c.0.s8 %v1223
    %v1225 = vlaneseq
    %v1226 = vshrl.u32 %v1225, 7
    %v1227 = vsub.s32 %v1224, %v1226
    %v1228 = vrot.slane %v761, %v1227
    %v1230 = vunpack.c.l.s4 1966171168
    %v1231 = vunpack.c.0.s8 %v1230
    %v1232 = vlaneseq
    %v1233 = vshrl.u32 %v1232, 7
    %v1234 = vsub.s32 %v1231, %v1233
    %v1235 = vrot.slane %v1221, %v1234
    %v1236 = vcombine.high %v1228, %v1228
    %v1237 = vcombine.high %v1235, %v1235
    %v1239 = vunpack.c.l.s4 1966171168
    %v1240 = vunpack.c.0.s8 %v1239
    %v1241 = vlaneseq
    %v1242 = vshrl.u32 %v1241, 7
    %v1243 = vsub.s32 %v1240, %v1242
    %v1244 = vrot.slane %v1228, %v1243
    %v1246 = vunpack.c.l.s4 1966171168
    %v1247 = vunpack.c.0.s8 %v1246
    %v1248 = vlaneseq
    %v1249 = vshrl.u32 %v1248, 7
    %v1250 = vsub.s32 %v1247, %v1249
    %v1251 = vrot.slane %v1235, %v1250
    %v1253 = vunpack.c.l.s4 1966171168
    %v1254 = vunpack.c.0.s8 %v1253
    %v1255 = vlaneseq
    %v1256 = vshrl.u32 %v1255, 7
    %v1257 = vsub.s32 %v1254, %v1256
    %v1258 = vrot.slane %v1236, %v1257
    %v1260 = vunpack.c.l.s4 1966171168
    %v1261 = vunpack.c.0.s8 %v1260
    %v1262 = vlaneseq
    %v1263 = vshrl.u32 %v1262, 7
    %v1264 = vsub.s32 %v1261, %v1263
    %v1265 = vrot.slane %v1237, %v1264
    %v1266 = vcombine.high %v1244, %v1244
    %v1267 = vcombine.high %v1251, %v1251
    %v1268 = vcombine.high %v1258, %v1258
    %v1269 = vcombine.high %v1265, %v1265
    %v1270 = vlaneseq
    %v1271 = vshrl.u32 %v1270, 7
    %v1272 = vsub.s32 0, %v1271
    %v1273 = vrot.slane %v1244, %v1272
    %v1274 = vlaneseq
    %v1275 = vshrl.u32 %v1274, 7
    %v1276 = vsub.s32 0, %v1275
    %v1277 = vrot.slane %v1258, %v1276
    %v1278 = vlaneseq
    %v1279 = vshrl.u32 %v1278, 7
    %v1280 = vsub.s32 0, %v1279
    %v1281 = vrot.slane %v1266, %v1280
    %v1282 = vlaneseq
    %v1283 = vshrl.u32 %v1282, 7
    %v1284 = vsub.s32 0, %v1283
    %v1285 = vrot.slane %v1268, %v1284
    %v1286 = vlaneseq
    %v1287 = vshrl.u32 %v1286, 7
    %v1288 = vsub.s32 0, %v1287
    %v1289 = vrot.slane %v1251, %v1288
    %v1290 = vlaneseq
    %v1291 = vshrl.u32 %v1290, 7
    %v1292 = vsub.s32 0, %v1291
    %v1293 = vrot.slane %v1265, %v1292
    %v1294 = vlaneseq
    %v1295 = vshrl.u32 %v1294, 7
    %v1296 = vsub.s32 0, %v1295
    %v1297 = vrot.slane %v1267, %v1296
    %v1298 = vlaneseq
    %v1299 = vshrl.u32 %v1298, 7
    %v1300 = vsub.s32 0, %v1299
    %v1301 = vrot.slane %v1269, %v1300
    %v1310 = vadd.f32 %v1273, %v78
    %v1311 = vadd.f32 %v1277, %v85
    %v1312 = vadd.f32 %v1281, %v92
    %v1313 = vadd.f32 %v1285, %v99
    %v1314 = vadd.f32 %v1289, %v106
    %v1315 = vadd.f32 %v1293, %v113
    %v1316 = vadd.f32 %v1297, %v120
    %v1317 = vadd.f32 %v1301, %v127
    %v1318 = vsel %vm154, %v1310, -inf
    %v1319 = vsel %vm154, %v1311, -inf
    %v1320 = vsel %vm154, %v1312, -inf
    %v1321 = vsel %vm154, %v1313, -inf
    %v1322 = vsel %vm154, %v1314, -inf
    %v1323 = vmax.f32 %v1318, %v1322
    %v1324 = vsel %vm154, %v1315, -inf
    %v1325 = vmax.f32 %v1319, %v1324
    %v1326 = vsel %vm154, %v1316, -inf
    %v1327 = vmax.f32 %v1320, %v1326
    %v1328 = vsel %vm154, %v1317, -inf
    %v1329 = vmax.f32 %v1321, %v1328
    %v1330 = vmax.f32 %v1323, %v1325
    %v1331 = vmax.f32 %v1327, %v1329
    %v1332 = vmax.f32 %v1330, %v1331
    %v1333 = vsub.f32 %v1310, %v1332
    %v1334 = vsub.f32 %v1311, %v1332
    %v1335 = vsub.f32 %v1312, %v1332
    %v1336 = vsub.f32 %v1313, %v1332
    %v1337 = vsub.f32 %v1314, %v1332
    %v1338 = vsub.f32 %v1315, %v1332
    %v1339 = vsub.f32 %v1316, %v1332
    %v1340 = vsub.f32 %v1317, %v1332
    %v1341 = vmul.f32 %v1333, 1.442695
    %v1342 = vpow.pop %v1341
    %v1343 = vmul.f32 %v1334, 1.442695
    %v1344 = vpow.pop %v1343
    %v1345 = vmul.f32 %v1335, 1.442695
    %v1346 = vpow.pop %v1345
    %v1347 = vmul.f32 %v1336, 1.442695
    %v1348 = vpow.pop %v1347
    %v1349 = vmul.f32 %v1337, 1.442695
    %v1350 = vpow.pop %v1349
    %v1351 = vmul.f32 %v1338, 1.442695
    %v1352 = vpow.pop %v1351
    %v1353 = vmul.f32 %v1339, 1.442695
    %v1354 = vpow.pop %v1353
    %v1355 = vmul.f32 %v1340, 1.442695
    %v1356 = vpow.pop %v1355
    %v1357 = vsel %vm154, %v1342, 0.0
    %v1358 = vsel %vm154, %v1344, 0.0
    %v1359 = vadd.f32 %v1357, %v1358
    %v1360 = vsel %vm154, %v1346, 0.0
    %v1361 = vadd.f32 %v1359, %v1360
    %v1362 = vsel %vm154, %v1348, 0.0
    %v1363 = vadd.f32 %v1361, %v1362
    %v1364 = vsel %vm154, %v1350, 0.0
    %v1365 = vadd.f32 %v1363, %v1364
    %v1366 = vsel %vm154, %v1352, 0.0
    %v1367 = vadd.f32 %v1365, %v1366
    %v1368 = vsel %vm154, %v1354, 0.0
    %v1369 = vadd.f32 %v1367, %v1368
    %v1370 = vsel %vm154, %v1356, 0.0
    %v1371 = vadd.f32 %v1369, %v1370
    %v1372 = vlog2.pop %v1371
    %v1373 = vmul.f32 %v1372, 0.6931472
    %v1374 = vadd.f32 %v1332, %v1373
    %v1375 = vadd.f32 %v1374, %v763
    %s1376 = scalar_lea.vmem [#allocation2], 24
    %v1377 = vld [vmem:[%s1376] sm:$0xff]
    %v1378 = vld [vmem:[%s1 + $0x3] sm:$0x1]
    %v1379 = vlaneseq
    %v1380 = vshrl.u32 %v1379, 7
    %v1381 = vsub.s32 0, %v1380
    %v1382 = vrot.slane %v1378, %v1381
    %vm1383 = vcmp.eq.s32.totalorder %v1382, %v39
    %v1384 = vsel %vm1383, 1, 0
    %v1385 = vcvt.s32.f32 %v1384
    %1386 = vmatprep.subr.mxu0 0.0
    %v1387 = vand.u32 %v771, 4294901760
    %1388 = vmatpush1.msra.mxu0 %v1387
    %1389 = vmatprep.subr.mxu0 0.0
    %1390 = vmatpush1.msra.mxu0 0.0
    %1391 = vmatprep.subr.mxu0 0.0
    %1392 = vmatpush1.msra.mxu0 0.0
    %1393 = vmatprep.subr.mxu0 0.0
    %1394 = vmatpush1.msra.mxu0 0.0
    %1395 = vmatprep.subr.mxu0 0.0
    %1396 = vmatpush1.msra.mxu0 0.0
    %1397 = vmatprep.subr.mxu0 0.0
    %1398 = vmatpush1.msra.mxu0 0.0
    %1399 = vmatprep.subr.mxu0 0.0
    %1400 = vmatpush1.msra.mxu0 0.0
    %1401 = vmatprep.subr.mxu0 0.0
    %1402 = vmatpush1.msra.mxu0 0.0
    %1403 = vmatprep.subr.mxu0 0.0
    %1404 = vmatpush1.msra.mxu0 0.0
    %1405 = vmatprep.subr.mxu0 0.0
    %1406 = vmatpush1.msra.mxu0 0.0
    %1407 = vmatprep.subr.mxu0 0.0
    %1408 = vmatpush1.msra.mxu0 0.0
    %1409 = vmatprep.subr.mxu0 0.0
    %1410 = vmatpush1.msra.mxu0 0.0
    %1411 = vmatprep.subr.mxu0 0.0
    %1412 = vmatpush1.msra.mxu0 0.0
    %1413 = vmatprep.subr.mxu0 0.0
    %1414 = vmatpush1.msra.mxu0 0.0
    %1415 = vmatprep.subr.mxu0 0.0
    %1416 = vmatpush1.msra.mxu0 0.0
    %1417 = vmatprep.subr.mxu0 0.0
    %1418 = vmatpush1.msra.mxu0 0.0
    %1419 = vmatprep.subr.mxu0 0.0
    %1420 = vmatpush1.msra.mxu0 0.0
    %1421 = vmatprep.subr.mxu0 0.0
    %1422 = vmatpush1.msra.mxu0 0.0
    %1423 = vmatprep.subr.mxu0 0.0
    %1424 = vmatpush1.msra.mxu0 0.0
    %1425 = vmatprep.subr.mxu0 0.0
    %1426 = vmatpush1.msra.mxu0 0.0
    %1427 = vmatprep.subr.mxu0 0.0
    %1428 = vmatpush1.msra.mxu0 0.0
    %1429 = vmatprep.subr.mxu0 0.0
    %1430 = vmatpush1.msra.mxu0 0.0
    %1431 = vmatprep.subr.mxu0 0.0
    %1432 = vmatpush1.msra.mxu0 0.0
    %1433 = vmatprep.subr.mxu0 0.0
    %1434 = vmatpush1.msra.mxu0 0.0
    %1435 = vmatprep.subr.mxu0 0.0
    %1436 = vmatpush1.msra.mxu0 0.0
    %1437 = vmatprep.subr.mxu0 0.0
    %1438 = vmatpush1.msra.mxu0 0.0
    %1439 = vmatprep.subr.mxu0 0.0
    %1440 = vmatpush1.msra.mxu0 0.0
    %1441 = vmatprep.subr.mxu0 0.0
    %1442 = vmatpush1.msra.mxu0 0.0
    %1443 = vmatprep.subr.mxu0 0.0
    %1444 = vmatpush1.msra.mxu0 0.0
    %1445 = vmatprep.subr.mxu0 0.0
    %1446 = vmatpush1.msra.mxu0 0.0
    %1447 = vmatprep.subr.mxu0 0.0
    %1448 = vmatpush1.msra.mxu0 0.0
    %1449 = vmatprep.subr.mxu0 0.0
    %1450 = vmatpush1.msra.mxu0 0.0
    %1451 = vmatprep.mubr.f32.mxu0 0.0
    %v1452 = vand.u32 %v156, 4294901760
    %v1453 = vsub.f32 %v156, %v1452
    %v1454 = vand.u32 %v1453, 4294901760
    %v1455 = vsub.f32 %v1453, %v1454
    %v1456 = vand.u32 %v1455, 4294901760
    %1457 = vmatmul.mubr.f32.gmra.mrb[0].mxu0 %v1456
    %v1458 = vpop.f32.mrb[0].mxu0
    %v1459 = vadd.f32 %v1377, %v1458
    %v1460 = vpop.f32.mrb[0].mxu0
    %1461 = vdwg.mxu0
    %1462 = vmatprep.subr.mxu0 0.0
    %v1463 = vand.u32 %v771, 4294901760
    %v1464 = vsub.f32 %v771, %v1463
    %v1465 = vand.u32 %v1464, 4294901760
    %v1466 = vsub.f32 %v1464, %v1465
    %v1467 = vand.u32 %v1466, 4294901760
    %1468 = vmatpush1.msra.mxu0 %v1467
    %1469 = vmatprep.subr.mxu0 0.0
    %1470 = vmatpush1.msra.mxu0 0.0
    %1471 = vmatprep.subr.mxu0 0.0
    %1472 = vmatpush1.msra.mxu0 0.0
    %1473 = vmatprep.subr.mxu0 0.0
    %1474 = vmatpush1.msra.mxu0 0.0
    %1475 = vmatprep.subr.mxu0 0.0
    %1476 = vmatpush1.msra.mxu0 0.0
    %1477 = vmatprep.subr.mxu0 0.0
    %1478 = vmatpush1.msra.mxu0 0.0
    %1479 = vmatprep.subr.mxu0 0.0
    %1480 = vmatpush1.msra.mxu0 0.0
    %1481 = vmatprep.subr.mxu0 0.0
    %1482 = vmatpush1.msra.mxu0 0.0
    %1483 = vmatprep.subr.mxu0 0.0
    %1484 = vmatpush1.msra.mxu0 0.0
    %1485 = vmatprep.subr.mxu0 0.0
    %1486 = vmatpush1.msra.mxu0 0.0
    %1487 = vmatprep.subr.mxu0 0.0
    %1488 = vmatpush1.msra.mxu0 0.0
    %1489 = vmatprep.subr.mxu0 0.0
    %1490 = vmatpush1.msra.mxu0 0.0
    %1491 = vmatprep.subr.mxu0 0.0
    %1492 = vmatpush1.msra.mxu0 0.0
    %1493 = vmatprep.subr.mxu0 0.0
    %1494 = vmatpush1.msra.mxu0 0.0
    %1495 = vmatprep.subr.mxu0 0.0
    %1496 = vmatpush1.msra.mxu0 0.0
    %1497 = vmatprep.subr.mxu0 0.0
    %1498 = vmatpush1.msra.mxu0 0.0
    %1499 = vmatprep.subr.mxu0 0.0
    %1500 = vmatpush1.msra.mxu0 0.0
    %1501 = vmatprep.subr.mxu0 0.0
    %1502 = vmatpush1.msra.mxu0 0.0
    %1503 = vmatprep.subr.mxu0 0.0
    %1504 = vmatpush1.msra.mxu0 0.0
    %1505 = vmatprep.subr.mxu0 0.0
    %1506 = vmatpush1.msra.mxu0 0.0
    %1507 = vmatprep.subr.mxu0 0.0
    %1508 = vmatpush1.msra.mxu0 0.0
    %1509 = vmatprep.subr.mxu0 0.0
    %1510 = vmatpush1.msra.mxu0 0.0
    %1511 = vmatprep.subr.mxu0 0.0
    %1512 = vmatpush1.msra.mxu0 0.0
    %1513 = vmatprep.subr.mxu0 0.0
    %1514 = vmatpush1.msra.mxu0 0.0
    %1515 = vmatprep.subr.mxu0 0.0
    %1516 = vmatpush1.msra.mxu0 0.0
    %1517 = vmatprep.subr.mxu0 0.0
    %1518 = vmatpush1.msra.mxu0 0.0
    %1519 = vmatprep.subr.mxu0 0.0
    %1520 = vmatpush1.msra.mxu0 0.0
    %1521 = vmatprep.subr.mxu0 0.0
    %1522 = vmatpush1.msra.mxu0 0.0
    %1523 = vmatprep.subr.mxu0 0.0
    %1524 = vmatpush1.msra.mxu0 0.0
    %1525 = vmatprep.subr.mxu0 0.0
    %1526 = vmatpush1.msra.mxu0 0.0
    %1527 = vmatprep.subr.mxu0 0.0
    %1528 = vmatpush1.msra.mxu0 0.0
    %1529 = vmatprep.subr.mxu0 0.0
    %1530 = vmatpush1.msra.mxu0 0.0
    %1531 = vmatprep.mubr.f32.mxu0 0.0
    %v1532 = vand.u32 %v156, 4294901760
    %1533 = vmatmul.mubr.f32.gmra.mrb[0].mxu0 %v1532
    %v1534 = vpop.f32.mrb[0].mxu0
    %v1535 = vadd.f32 %v1459, %v1534
    %v1536 = vpop.f32.mrb[0].mxu0
    %1537 = vdwg.mxu0
    %1538 = vmatprep.subr.mxu0 0.0
    %v1539 = vand.u32 %v771, 4294901760
    %v1540 = vsub.f32 %v771, %v1539
    %1541 = vmatpush1.msra.mxu0 %v1540
    %1542 = vmatprep.subr.mxu0 0.0
    %1543 = vmatpush1.msra.mxu0 0.0
    %1544 = vmatprep.subr.mxu0 0.0
    %1545 = vmatpush1.msra.mxu0 0.0
    %1546 = vmatprep.subr.mxu0 0.0
    %1547 = vmatpush1.msra.mxu0 0.0
    %1548 = vmatprep.subr.mxu0 0.0
    %1549 = vmatpush1.msra.mxu0 0.0
    %1550 = vmatprep.subr.mxu0 0.0
    %1551 = vmatpush1.msra.mxu0 0.0
    %1552 = vmatprep.subr.mxu0 0.0
    %1553 = vmatpush1.msra.mxu0 0.0
    %1554 = vmatprep.subr.mxu0 0.0
    %1555 = vmatpush1.msra.mxu0 0.0
    %1556 = vmatprep.subr.mxu0 0.0
    %1557 = vmatpush1.msra.mxu0 0.0
    %1558 = vmatprep.subr.mxu0 0.0
    %1559 = vmatpush1.msra.mxu0 0.0
    %1560 = vmatprep.subr.mxu0 0.0
    %1561 = vmatpush1.msra.mxu0 0.0
    %1562 = vmatprep.subr.mxu0 0.0
    %1563 = vmatpush1.msra.mxu0 0.0
    %1564 = vmatprep.subr.mxu0 0.0
    %1565 = vmatpush1.msra.mxu0 0.0
    %1566 = vmatprep.subr.mxu0 0.0
    %1567 = vmatpush1.msra.mxu0 0.0
    %1568 = vmatprep.subr.mxu0 0.0
    %1569 = vmatpush1.msra.mxu0 0.0
    %1570 = vmatprep.subr.mxu0 0.0
    %1571 = vmatpush1.msra.mxu0 0.0
    %1572 = vmatprep.subr.mxu0 0.0
    %1573 = vmatpush1.msra.mxu0 0.0
    %1574 = vmatprep.subr.mxu0 0.0
    %1575 = vmatpush1.msra.mxu0 0.0
    %1576 = vmatprep.subr.mxu0 0.0
    %1577 = vmatpush1.msra.mxu0 0.0
    %1578 = vmatprep.subr.mxu0 0.0
    %1579 = vmatpush1.msra.mxu0 0.0
    %1580 = vmatprep.subr.mxu0 0.0
    %1581 = vmatpush1.msra.mxu0 0.0
    %1582 = vmatprep.subr.mxu0 0.0
    %1583 = vmatpush1.msra.mxu0 0.0
    %1584 = vmatprep.subr.mxu0 0.0
    %1585 = vmatpush1.msra.mxu0 0.0
    %1586 = vmatprep.subr.mxu0 0.0
    %1587 = vmatpush1.msra.mxu0 0.0
    %1588 = vmatprep.subr.mxu0 0.0
    %1589 = vmatpush1.msra.mxu0 0.0
    %1590 = vmatprep.subr.mxu0 0.0
    %1591 = vmatpush1.msra.mxu0 0.0
    %1592 = vmatprep.subr.mxu0 0.0
    %1593 = vmatpush1.msra.mxu0 0.0
    %1594 = vmatprep.subr.mxu0 0.0
    %1595 = vmatpush1.msra.mxu0 0.0
    %1596 = vmatprep.subr.mxu0 0.0
    %1597 = vmatpush1.msra.mxu0 0.0
    %1598 = vmatprep.subr.mxu0 0.0
    %1599 = vmatpush1.msra.mxu0 0.0
    %1600 = vmatprep.subr.mxu0 0.0
    %1601 = vmatpush1.msra.mxu0 0.0
    %1602 = vmatprep.subr.mxu0 0.0
    %1603 = vmatpush1.msra.mxu0 0.0
    %1604 = vmatprep.mubr.f32.mxu0 0.0
    %v1605 = vand.u32 %v156, 4294901760
    %v1606 = vsub.f32 %v156, %v1605
    %1607 = vmatmul.mubr.f32.gmra.mrb[0].mxu0 %v1606
    %v1608 = vpop.f32.mrb[0].mxu0
    %v1609 = vadd.f32 %v1535, %v1608
    %v1610 = vpop.f32.mrb[0].mxu0
    %1611 = vdwg.mxu0
    %1612 = vmatprep.subr.mxu0 0.0
    %v1613 = vand.u32 %v771, 4294901760
    %1614 = vmatpush1.msra.mxu0 %v1613
    %1615 = vmatprep.subr.mxu0 0.0
    %1616 = vmatpush1.msra.mxu0 0.0
    %1617 = vmatprep.subr.mxu0 0.0
    %1618 = vmatpush1.msra.mxu0 0.0
    %1619 = vmatprep.subr.mxu0 0.0
    %1620 = vmatpush1.msra.mxu0 0.0
    %1621 = vmatprep.subr.mxu0 0.0
    %1622 = vmatpush1.msra.mxu0 0.0
    %1623 = vmatprep.subr.mxu0 0.0
    %1624 = vmatpush1.msra.mxu0 0.0
    %1625 = vmatprep.subr.mxu0 0.0
    %1626 = vmatpush1.msra.mxu0 0.0
    %1627 = vmatprep.subr.mxu0 0.0
    %1628 = vmatpush1.msra.mxu0 0.0
    %1629 = vmatprep.subr.mxu0 0.0
    %1630 = vmatpush1.msra.mxu0 0.0
    %1631 = vmatprep.subr.mxu0 0.0
    %1632 = vmatpush1.msra.mxu0 0.0
    %1633 = vmatprep.subr.mxu0 0.0
    %1634 = vmatpush1.msra.mxu0 0.0
    %1635 = vmatprep.subr.mxu0 0.0
    %1636 = vmatpush1.msra.mxu0 0.0
    %1637 = vmatprep.subr.mxu0 0.0
    %1638 = vmatpush1.msra.mxu0 0.0
    %1639 = vmatprep.subr.mxu0 0.0
    %1640 = vmatpush1.msra.mxu0 0.0
    %1641 = vmatprep.subr.mxu0 0.0
    %1642 = vmatpush1.msra.mxu0 0.0
    %1643 = vmatprep.subr.mxu0 0.0
    %1644 = vmatpush1.msra.mxu0 0.0
    %1645 = vmatprep.subr.mxu0 0.0
    %1646 = vmatpush1.msra.mxu0 0.0
    %1647 = vmatprep.subr.mxu0 0.0
    %1648 = vmatpush1.msra.mxu0 0.0
    %1649 = vmatprep.subr.mxu0 0.0
    %1650 = vmatpush1.msra.mxu0 0.0
    %1651 = vmatprep.subr.mxu0 0.0
    %1652 = vmatpush1.msra.mxu0 0.0
    %1653 = vmatprep.subr.mxu0 0.0
    %1654 = vmatpush1.msra.mxu0 0.0
    %1655 = vmatprep.subr.mxu0 0.0
    %1656 = vmatpush1.msra.mxu0 0.0
    %1657 = vmatprep.subr.mxu0 0.0
    %1658 = vmatpush1.msra.mxu0 0.0
    %1659 = vmatprep.subr.mxu0 0.0
    %1660 = vmatpush1.msra.mxu0 0.0
    %1661 = vmatprep.subr.mxu0 0.0
    %1662 = vmatpush1.msra.mxu0 0.0
    %1663 = vmatprep.subr.mxu0 0.0
    %1664 = vmatpush1.msra.mxu0 0.0
    %1665 = vmatprep.subr.mxu0 0.0
    %1666 = vmatpush1.msra.mxu0 0.0
    %1667 = vmatprep.subr.mxu0 0.0
    %1668 = vmatpush1.msra.mxu0 0.0
    %1669 = vmatprep.subr.mxu0 0.0
    %1670 = vmatpush1.msra.mxu0 0.0
    %1671 = vmatprep.subr.mxu0 0.0
    %1672 = vmatpush1.msra.mxu0 0.0
    %1673 = vmatprep.subr.mxu0 0.0
    %1674 = vmatpush1.msra.mxu0 0.0
    %1675 = vmatprep.subr.mxu0 0.0
    %1676 = vmatpush1.msra.mxu0 0.0
    %1677 = vmatprep.mubr.f32.mxu0 0.0
    %v1678 = vand.u32 %v156, 4294901760
    %v1679 = vsub.f32 %v156, %v1678
    %v1680 = vand.u32 %v1679, 4294901760
    %1681 = vmatmul.mubr.f32.gmra.mrb[0].mxu0 %v1680
    %v1682 = vpop.f32.mrb[0].mxu0
    %v1683 = vadd.f32 %v1609, %v1682
    %v1684 = vpop.f32.mrb[0].mxu0
    %1685 = vdwg.mxu0
    %1686 = vmatprep.subr.mxu0 0.0
    %v1687 = vand.u32 %v771, 4294901760
    %v1688 = vsub.f32 %v771, %v1687
    %v1689 = vand.u32 %v1688, 4294901760
    %1690 = vmatpush1.msra.mxu0 %v1689
    %1691 = vmatprep.subr.mxu0 0.0
    %1692 = vmatpush1.msra.mxu0 0.0
    %1693 = vmatprep.subr.mxu0 0.0
    %1694 = vmatpush1.msra.mxu0 0.0
    %1695 = vmatprep.subr.mxu0 0.0
    %1696 = vmatpush1.msra.mxu0 0.0
    %1697 = vmatprep.subr.mxu0 0.0
    %1698 = vmatpush1.msra.mxu0 0.0
    %1699 = vmatprep.subr.mxu0 0.0
    %1700 = vmatpush1.msra.mxu0 0.0
    %1701 = vmatprep.subr.mxu0 0.0
    %1702 = vmatpush1.msra.mxu0 0.0
    %1703 = vmatprep.subr.mxu0 0.0
    %1704 = vmatpush1.msra.mxu0 0.0
    %1705 = vmatprep.subr.mxu0 0.0
    %1706 = vmatpush1.msra.mxu0 0.0
    %1707 = vmatprep.subr.mxu0 0.0
    %1708 = vmatpush1.msra.mxu0 0.0
    %1709 = vmatprep.subr.mxu0 0.0
    %1710 = vmatpush1.msra.mxu0 0.0
    %1711 = vmatprep.subr.mxu0 0.0
    %1712 = vmatpush1.msra.mxu0 0.0
    %1713 = vmatprep.subr.mxu0 0.0
    %1714 = vmatpush1.msra.mxu0 0.0
    %1715 = vmatprep.subr.mxu0 0.0
    %1716 = vmatpush1.msra.mxu0 0.0
    %1717 = vmatprep.subr.mxu0 0.0
    %1718 = vmatpush1.msra.mxu0 0.0
    %1719 = vmatprep.subr.mxu0 0.0
    %1720 = vmatpush1.msra.mxu0 0.0
    %1721 = vmatprep.subr.mxu0 0.0
    %1722 = vmatpush1.msra.mxu0 0.0
    %1723 = vmatprep.subr.mxu0 0.0
    %1724 = vmatpush1.msra.mxu0 0.0
    %1725 = vmatprep.subr.mxu0 0.0
    %1726 = vmatpush1.msra.mxu0 0.0
    %1727 = vmatprep.subr.mxu0 0.0
    %1728 = vmatpush1.msra.mxu0 0.0
    %1729 = vmatprep.subr.mxu0 0.0
    %1730 = vmatpush1.msra.mxu0 0.0
    %1731 = vmatprep.subr.mxu0 0.0
    %1732 = vmatpush1.msra.mxu0 0.0
    %1733 = vmatprep.subr.mxu0 0.0
    %1734 = vmatpush1.msra.mxu0 0.0
    %1735 = vmatprep.subr.mxu0 0.0
    %1736 = vmatpush1.msra.mxu0 0.0
    %1737 = vmatprep.subr.mxu0 0.0
    %1738 = vmatpush1.msra.mxu0 0.0
    %1739 = vmatprep.subr.mxu0 0.0
    %1740 = vmatpush1.msra.mxu0 0.0
    %1741 = vmatprep.subr.mxu0 0.0
    %1742 = vmatpush1.msra.mxu0 0.0
    %1743 = vmatprep.subr.mxu0 0.0
    %1744 = vmatpush1.msra.mxu0 0.0
    %1745 = vmatprep.subr.mxu0 0.0
    %1746 = vmatpush1.msra.mxu0 0.0
    %1747 = vmatprep.subr.mxu0 0.0
    %1748 = vmatpush1.msra.mxu0 0.0
    %1749 = vmatprep.subr.mxu0 0.0
    %1750 = vmatpush1.msra.mxu0 0.0
    %1751 = vmatprep.subr.mxu0 0.0
    %1752 = vmatpush1.msra.mxu0 0.0
    %1753 = vmatprep.mubr.f32.mxu0 0.0
    %v1754 = vand.u32 %v156, 4294901760
    %1755 = vmatmul.mubr.f32.gmra.mrb[0].mxu0 %v1754
    %v1756 = vpop.f32.mrb[0].mxu0
    %v1757 = vadd.f32 %v1683, %v1756
    %v1758 = vpop.f32.mrb[0].mxu0
    %1759 = vdwg.mxu0
    %1760 = vmatprep.subr.mxu0 0.0
    %v1761 = vand.u32 %v771, 4294901760
    %1762 = vmatpush1.msra.mxu0 %v1761
    %1763 = vmatprep.subr.mxu0 0.0
    %1764 = vmatpush1.msra.mxu0 0.0
    %1765 = vmatprep.subr.mxu0 0.0
    %1766 = vmatpush1.msra.mxu0 0.0
    %1767 = vmatprep.subr.mxu0 0.0
    %1768 = vmatpush1.msra.mxu0 0.0
    %1769 = vmatprep.subr.mxu0 0.0
    %1770 = vmatpush1.msra.mxu0 0.0
    %1771 = vmatprep.subr.mxu0 0.0
    %1772 = vmatpush1.msra.mxu0 0.0
    %1773 = vmatprep.subr.mxu0 0.0
    %1774 = vmatpush1.msra.mxu0 0.0
    %1775 = vmatprep.subr.mxu0 0.0
    %1776 = vmatpush1.msra.mxu0 0.0
    %1777 = vmatprep.subr.mxu0 0.0
    %1778 = vmatpush1.msra.mxu0 0.0
    %1779 = vmatprep.subr.mxu0 0.0
    %1780 = vmatpush1.msra.mxu0 0.0
    %1781 = vmatprep.subr.mxu0 0.0
    %1782 = vmatpush1.msra.mxu0 0.0
    %1783 = vmatprep.subr.mxu0 0.0
    %1784 = vmatpush1.msra.mxu0 0.0
    %1785 = vmatprep.subr.mxu0 0.0
    %1786 = vmatpush1.msra.mxu0 0.0
    %1787 = vmatprep.subr.mxu0 0.0
    %1788 = vmatpush1.msra.mxu0 0.0
    %1789 = vmatprep.subr.mxu0 0.0
    %1790 = vmatpush1.msra.mxu0 0.0
    %1791 = vmatprep.subr.mxu0 0.0
    %1792 = vmatpush1.msra.mxu0 0.0
    %1793 = vmatprep.subr.mxu0 0.0
    %1794 = vmatpush1.msra.mxu0 0.0
    %1795 = vmatprep.subr.mxu0 0.0
    %1796 = vmatpush1.msra.mxu0 0.0
    %1797 = vmatprep.subr.mxu0 0.0
    %1798 = vmatpush1.msra.mxu0 0.0
    %1799 = vmatprep.subr.mxu0 0.0
    %1800 = vmatpush1.msra.mxu0 0.0
    %1801 = vmatprep.subr.mxu0 0.0
    %1802 = vmatpush1.msra.mxu0 0.0
    %1803 = vmatprep.subr.mxu0 0.0
    %1804 = vmatpush1.msra.mxu0 0.0
    %1805 = vmatprep.subr.mxu0 0.0
    %1806 = vmatpush1.msra.mxu0 0.0
    %1807 = vmatprep.subr.mxu0 0.0
    %1808 = vmatpush1.msra.mxu0 0.0
    %1809 = vmatprep.subr.mxu0 0.0
    %1810 = vmatpush1.msra.mxu0 0.0
    %1811 = vmatprep.subr.mxu0 0.0
    %1812 = vmatpush1.msra.mxu0 0.0
    %1813 = vmatprep.subr.mxu0 0.0
    %1814 = vmatpush1.msra.mxu0 0.0
    %1815 = vmatprep.subr.mxu0 0.0
    %1816 = vmatpush1.msra.mxu0 0.0
    %1817 = vmatprep.subr.mxu0 0.0
    %1818 = vmatpush1.msra.mxu0 0.0
    %1819 = vmatprep.subr.mxu0 0.0
    %1820 = vmatpush1.msra.mxu0 0.0
    %1821 = vmatprep.subr.mxu0 0.0
    %1822 = vmatpush1.msra.mxu0 0.0
    %1823 = vmatprep.subr.mxu0 0.0
    %1824 = vmatpush1.msra.mxu0 0.0
    %1825 = vmatprep.mubr.f32.mxu0 0.0
    %v1826 = vand.u32 %v156, 4294901760
    %1827 = vmatmul.mubr.f32.gmra.mrb[0].mxu0 %v1826
    %v1828 = vpop.f32.mrb[0].mxu0
    %v1829 = vadd.f32 %v1757, %v1828
    %v1830 = vpop.f32.mrb[0].mxu0
    %1831 = vdwg.mxu0
    %v1832 = vmul.f32 %v1385, %v1829
    %v1833 = vadd.f32 %v1219, %v1832
    %v1835 = vcombine.high %v1375, %v1375
    %v1837 = vunpack.c.l.s4 1966171168
    %v1838 = vunpack.c.0.s8 %v1837
    %v1839 = vlaneseq
    %v1840 = vshrl.u32 %v1839, 7
    %v1841 = vsub.s32 %v1838, %v1840
    %v1842 = vrot.slane %v1375, %v1841
    %v1844 = vunpack.c.l.s4 1966171168
    %v1845 = vunpack.c.0.s8 %v1844
    %v1846 = vlaneseq
    %v1847 = vshrl.u32 %v1846, 7
    %v1848 = vsub.s32 %v1845, %v1847
    %v1849 = vrot.slane %v1835, %v1848
    %v1850 = vcombine.high %v1842, %v1842
    %v1851 = vcombine.high %v1849, %v1849
    %v1853 = vunpack.c.l.s4 1966171168
    %v1854 = vunpack.c.0.s8 %v1853
    %v1855 = vlaneseq
    %v1856 = vshrl.u32 %v1855, 7
    %v1857 = vsub.s32 %v1854, %v1856
    %v1858 = vrot.slane %v1842, %v1857
    %v1860 = vunpack.c.l.s4 1966171168
    %v1861 = vunpack.c.0.s8 %v1860
    %v1862 = vlaneseq
    %v1863 = vshrl.u32 %v1862, 7
    %v1864 = vsub.s32 %v1861, %v1863
    %v1865 = vrot.slane %v1849, %v1864
    %v1867 = vunpack.c.l.s4 1966171168
    %v1868 = vunpack.c.0.s8 %v1867
    %v1869 = vlaneseq
    %v1870 = vshrl.u32 %v1869, 7
    %v1871 = vsub.s32 %v1868, %v1870
    %v1872 = vrot.slane %v1850, %v1871
    %v1874 = vunpack.c.l.s4 1966171168
    %v1875 = vunpack.c.0.s8 %v1874
    %v1876 = vlaneseq
    %v1877 = vshrl.u32 %v1876, 7
    %v1878 = vsub.s32 %v1875, %v1877
    %v1879 = vrot.slane %v1851, %v1878
    %v1880 = vcombine.high %v1858, %v1858
    %v1881 = vcombine.high %v1865, %v1865
    %v1882 = vcombine.high %v1872, %v1872
    %v1883 = vcombine.high %v1879, %v1879
    %v1884 = vlaneseq
    %v1885 = vshrl.u32 %v1884, 7
    %v1886 = vsub.s32 0, %v1885
    %v1887 = vrot.slane %v1858, %v1886
    %v1888 = vlaneseq
    %v1889 = vshrl.u32 %v1888, 7
    %v1890 = vsub.s32 0, %v1889
    %v1891 = vrot.slane %v1872, %v1890
    %v1892 = vlaneseq
    %v1893 = vshrl.u32 %v1892, 7
    %v1894 = vsub.s32 0, %v1893
    %v1895 = vrot.slane %v1880, %v1894
    %v1896 = vlaneseq
    %v1897 = vshrl.u32 %v1896, 7
    %v1898 = vsub.s32 0, %v1897
    %v1899 = vrot.slane %v1882, %v1898
    %v1900 = vlaneseq
    %v1901 = vshrl.u32 %v1900, 7
    %v1902 = vsub.s32 0, %v1901
    %v1903 = vrot.slane %v1865, %v1902
    %v1904 = vlaneseq
    %v1905 = vshrl.u32 %v1904, 7
    %v1906 = vsub.s32 0, %v1905
    %v1907 = vrot.slane %v1879, %v1906
    %v1908 = vlaneseq
    %v1909 = vshrl.u32 %v1908, 7
    %v1910 = vsub.s32 0, %v1909
    %v1911 = vrot.slane %v1881, %v1910
    %v1912 = vlaneseq
    %v1913 = vshrl.u32 %v1912, 7
    %v1914 = vsub.s32 0, %v1913
    %v1915 = vrot.slane %v1883, %v1914
    %v1924 = vadd.f32 %v1887, %v78
    %v1925 = vadd.f32 %v1891, %v85
    %v1926 = vadd.f32 %v1895, %v92
    %v1927 = vadd.f32 %v1899, %v99
    %v1928 = vadd.f32 %v1903, %v106
    %v1929 = vadd.f32 %v1907, %v113
    %v1930 = vadd.f32 %v1911, %v120
    %v1931 = vadd.f32 %v1915, %v127
    %v1932 = vsel %vm154, %v1924, -inf
    %v1933 = vsel %vm154, %v1925, -inf
    %v1934 = vsel %vm154, %v1926, -inf
    %v1935 = vsel %vm154, %v1927, -inf
    %v1936 = vsel %vm154, %v1928, -inf
    %v1937 = vmax.f32 %v1932, %v1936
    %v1938 = vsel %vm154, %v1929, -inf
    %v1939 = vmax.f32 %v1933, %v1938
    %v1940 = vsel %vm154, %v1930, -inf
    %v1941 = vmax.f32 %v1934, %v1940
    %v1942 = vsel %vm154, %v1931, -inf
    %v1943 = vmax.f32 %v1935, %v1942
    %v1944 = vmax.f32 %v1937, %v1939
    %v1945 = vmax.f32 %v1941, %v1943
    %v1946 = vmax.f32 %v1944, %v1945
    %v1947 = vsub.f32 %v1924, %v1946
    %v1948 = vsub.f32 %v1925, %v1946
    %v1949 = vsub.f32 %v1926, %v1946
    %v1950 = vsub.f32 %v1927, %v1946
    %v1951 = vsub.f32 %v1928, %v1946
    %v1952 = vsub.f32 %v1929, %v1946
    %v1953 = vsub.f32 %v1930, %v1946
    %v1954 = vsub.f32 %v1931, %v1946
    %v1955 = vmul.f32 %v1947, 1.442695
    %v1956 = vpow.pop %v1955
    %v1957 = vmul.f32 %v1948, 1.442695
    %v1958 = vpow.pop %v1957
    %v1959 = vmul.f32 %v1949, 1.442695
    %v1960 = vpow.pop %v1959
    %v1961 = vmul.f32 %v1950, 1.442695
    %v1962 = vpow.pop %v1961
    %v1963 = vmul.f32 %v1951, 1.442695
    %v1964 = vpow.pop %v1963
    %v1965 = vmul.f32 %v1952, 1.442695
    %v1966 = vpow.pop %v1965
    %v1967 = vmul.f32 %v1953, 1.442695
    %v1968 = vpow.pop %v1967
    %v1969 = vmul.f32 %v1954, 1.442695
    %v1970 = vpow.pop %v1969
    %v1971 = vsel %vm154, %v1956, 0.0
    %v1972 = vsel %vm154, %v1958, 0.0
    %v1973 = vadd.f32 %v1971, %v1972
    %v1974 = vsel %vm154, %v1960, 0.0
    %v1975 = vadd.f32 %v1973, %v1974
    %v1976 = vsel %vm154, %v1962, 0.0
    %v1977 = vadd.f32 %v1975, %v1976
    %v1978 = vsel %vm154, %v1964, 0.0
    %v1979 = vadd.f32 %v1977, %v1978
    %v1980 = vsel %vm154, %v1966, 0.0
    %v1981 = vadd.f32 %v1979, %v1980
    %v1982 = vsel %vm154, %v1968, 0.0
    %v1983 = vadd.f32 %v1981, %v1982
    %v1984 = vsel %vm154, %v1970, 0.0
    %v1985 = vadd.f32 %v1983, %v1984
    %v1986 = vlog2.pop %v1985
    %v1987 = vmul.f32 %v1986, 0.6931472
    %v1988 = vadd.f32 %v1946, %v1987
    %v1989 = vadd.f32 %v1988, %v1377
    %s1990 = scalar_lea.vmem [#allocation2], 32
    %v1991 = vld [vmem:[%s1990] sm:$0xff]
    %v1992 = vld [vmem:[%s1 + $0x4] sm:$0x1]
    %v1993 = vlaneseq
    %v1994 = vshrl.u32 %v1993, 7
    %v1995 = vsub.s32 0, %v1994
    %v1996 = vrot.slane %v1992, %v1995
    %vm1997 = vcmp.eq.s32.totalorder %v1996, %v39
    %v1998 = vsel %vm1997, 1, 0
    %v1999 = vcvt.s32.f32 %v1998
    %2000 = vmatprep.subr.mxu0 0.0
    %v2001 = vand.u32 %v1385, 4294901760
    %2002 = vmatpush1.msra.mxu0 %v2001
    %2003 = vmatprep.subr.mxu0 0.0
    %2004 = vmatpush1.msra.mxu0 0.0
    %2005 = vmatprep.subr.mxu0 0.0
    %2006 = vmatpush1.msra.mxu0 0.0
    %2007 = vmatprep.subr.mxu0 0.0
    %2008 = vmatpush1.msra.mxu0 0.0
    %2009 = vmatprep.subr.mxu0 0.0
    %2010 = vmatpush1.msra.mxu0 0.0
    %2011 = vmatprep.subr.mxu0 0.0
    %2012 = vmatpush1.msra.mxu0 0.0
    %2013 = vmatprep.subr.mxu0 0.0
    %2014 = vmatpush1.msra.mxu0 0.0
    %2015 = vmatprep.subr.mxu0 0.0
    %2016 = vmatpush1.msra.mxu0 0.0
    %2017 = vmatprep.subr.mxu0 0.0
    %2018 = vmatpush1.msra.mxu0 0.0
    %2019 = vmatprep.subr.mxu0 0.0
    %2020 = vmatpush1.msra.mxu0 0.0
    %2021 = vmatprep.subr.mxu0 0.0
    %2022 = vmatpush1.msra.mxu0 0.0
    %2023 = vmatprep.subr.mxu0 0.0
    %2024 = vmatpush1.msra.mxu0 0.0
    %2025 = vmatprep.subr.mxu0 0.0
    %2026 = vmatpush1.msra.mxu0 0.0
    %2027 = vmatprep.subr.mxu0 0.0
    %2028 = vmatpush1.msra.mxu0 0.0
    %2029 = vmatprep.subr.mxu0 0.0
    %2030 = vmatpush1.msra.mxu0 0.0
    %2031 = vmatprep.subr.mxu0 0.0
    %2032 = vmatpush1.msra.mxu0 0.0
    %2033 = vmatprep.subr.mxu0 0.0
    %2034 = vmatpush1.msra.mxu0 0.0
    %2035 = vmatprep.subr.mxu0 0.0
    %2036 = vmatpush1.msra.mxu0 0.0
    %2037 = vmatprep.subr.mxu0 0.0
    %2038 = vmatpush1.msra.mxu0 0.0
    %2039 = vmatprep.subr.mxu0 0.0
    %2040 = vmatpush1.msra.mxu0 0.0
    %2041 = vmatprep.subr.mxu0 0.0
    %2042 = vmatpush1.msra.mxu0 0.0
    %2043 = vmatprep.subr.mxu0 0.0
    %2044 = vmatpush1.msra.mxu0 0.0
    %2045 = vmatprep.subr.mxu0 0.0
    %2046 = vmatpush1.msra.mxu0 0.0
    %2047 = vmatprep.subr.mxu0 0.0
    %2048 = vmatpush1.msra.mxu0 0.0
    %2049 = vmatprep.subr.mxu0 0.0
    %2050 = vmatpush1.msra.mxu0 0.0
    %2051 = vmatprep.subr.mxu0 0.0
    %2052 = vmatpush1.msra.mxu0 0.0
    %2053 = vmatprep.subr.mxu0 0.0
    %2054 = vmatpush1.msra.mxu0 0.0
    %2055 = vmatprep.subr.mxu0 0.0
    %2056 = vmatpush1.msra.mxu0 0.0
    %2057 = vmatprep.subr.mxu0 0.0
    %2058 = vmatpush1.msra.mxu0 0.0
    %2059 = vmatprep.subr.mxu0 0.0
    %2060 = vmatpush1.msra.mxu0 0.0
    %2061 = vmatprep.subr.mxu0 0.0
    %2062 = vmatpush1.msra.mxu0 0.0
    %2063 = vmatprep.subr.mxu0 0.0
    %2064 = vmatpush1.msra.mxu0 0.0
    %2065 = vmatprep.mubr.f32.mxu0 0.0
    %v2066 = vand.u32 %v156, 4294901760
    %v2067 = vsub.f32 %v156, %v2066
    %v2068 = vand.u32 %v2067, 4294901760
    %v2069 = vsub.f32 %v2067, %v2068
    %v2070 = vand.u32 %v2069, 4294901760
    %2071 = vmatmul.mubr.f32.gmra.mrb[0].mxu0 %v2070
    %v2072 = vpop.f32.mrb[0].mxu0
    %v2073 = vadd.f32 %v1991, %v2072
    %v2074 = vpop.f32.mrb[0].mxu0
    %2075 = vdwg.mxu0
    %2076 = vmatprep.subr.mxu0 0.0
    %v2077 = vand.u32 %v1385, 4294901760
    %v2078 = vsub.f32 %v1385, %v2077
    %v2079 = vand.u32 %v2078, 4294901760
    %v2080 = vsub.f32 %v2078, %v2079
    %v2081 = vand.u32 %v2080, 4294901760
    %2082 = vmatpush1.msra.mxu0 %v2081
    %2083 = vmatprep.subr.mxu0 0.0
    %2084 = vmatpush1.msra.mxu0 0.0
    %2085 = vmatprep.subr.mxu0 0.0
    %2086 = vmatpush1.msra.mxu0 0.0
    %2087 = vmatprep.subr.mxu0 0.0
    %2088 = vmatpush1.msra.mxu0 0.0
    %2089 = vmatprep.subr.mxu0 0.0
    %2090 = vmatpush1.msra.mxu0 0.0
    %2091 = vmatprep.subr.mxu0 0.0
    %2092 = vmatpush1.msra.mxu0 0.0
    %2093 = vmatprep.subr.mxu0 0.0
    %2094 = vmatpush1.msra.mxu0 0.0
    %2095 = vmatprep.subr.mxu0 0.0
    %2096 = vmatpush1.msra.mxu0 0.0
    %2097 = vmatprep.subr.mxu0 0.0
    %2098 = vmatpush1.msra.mxu0 0.0
    %2099 = vmatprep.subr.mxu0 0.0
    %2100 = vmatpush1.msra.mxu0 0.0
    %2101 = vmatprep.subr.mxu0 0.0
    %2102 = vmatpush1.msra.mxu0 0.0
    %2103 = vmatprep.subr.mxu0 0.0
    %2104 = vmatpush1.msra.mxu0 0.0
    %2105 = vmatprep.subr.mxu0 0.0
    %2106 = vmatpush1.msra.mxu0 0.0
    %2107 = vmatprep.subr.mxu0 0.0
    %2108 = vmatpush1.msra.mxu0 0.0
    %2109 = vmatprep.subr.mxu0 0.0
    %2110 = vmatpush1.msra.mxu0 0.0
    %2111 = vmatprep.subr.mxu0 0.0
    %2112 = vmatpush1.msra.mxu0 0.0
    %2113 = vmatprep.subr.mxu0 0.0
    %2114 = vmatpush1.msra.mxu0 0.0
    %2115 = vmatprep.subr.mxu0 0.0
    %2116 = vmatpush1.msra.mxu0 0.0
    %2117 = vmatprep.subr.mxu0 0.0
    %2118 = vmatpush1.msra.mxu0 0.0
    %2119 = vmatprep.subr.mxu0 0.0
    %2120 = vmatpush1.msra.mxu0 0.0
    %2121 = vmatprep.subr.mxu0 0.0
    %2122 = vmatpush1.msra.mxu0 0.0
    %2123 = vmatprep.subr.mxu0 0.0
    %2124 = vmatpush1.msra.mxu0 0.0
    %2125 = vmatprep.subr.mxu0 0.0
    %2126 = vmatpush1.msra.mxu0 0.0
    %2127 = vmatprep.subr.mxu0 0.0
    %2128 = vmatpush1.msra.mxu0 0.0
    %2129 = vmatprep.subr.mxu0 0.0
    %2130 = vmatpush1.msra.mxu0 0.0
    %2131 = vmatprep.subr.mxu0 0.0
    %2132 = vmatpush1.msra.mxu0 0.0
    %2133 = vmatprep.subr.mxu0 0.0
    %2134 = vmatpush1.msra.mxu0 0.0
    %2135 = vmatprep.subr.mxu0 0.0
    %2136 = vmatpush1.msra.mxu0 0.0
    %2137 = vmatprep.subr.mxu0 0.0
    %2138 = vmatpush1.msra.mxu0 0.0
    %2139 = vmatprep.subr.mxu0 0.0
    %2140 = vmatpush1.msra.mxu0 0.0
    %2141 = vmatprep.subr.mxu0 0.0
    %2142 = vmatpush1.msra.mxu0 0.0
    %2143 = vmatprep.subr.mxu0 0.0
    %2144 = vmatpush1.msra.mxu0 0.0
    %2145 = vmatprep.mubr.f32.mxu0 0.0
    %v2146 = vand.u32 %v156, 4294901760
    %2147 = vmatmul.mubr.f32.gmra.mrb[0].mxu0 %v2146
    %v2148 = vpop.f32.mrb[0].mxu0
    %v2149 = vadd.f32 %v2073, %v2148
    %v2150 = vpop.f32.mrb[0].mxu0
    %2151 = vdwg.mxu0
    %2152 = vmatprep.subr.mxu0 0.0
    %v2153 = vand.u32 %v1385, 4294901760
    %v2154 = vsub.f32 %v1385, %v2153
    %2155 = vmatpush1.msra.mxu0 %v2154
    %2156 = vmatprep.subr.mxu0 0.0
    %2157 = vmatpush1.msra.mxu0 0.0
    %2158 = vmatprep.subr.mxu0 0.0
    %2159 = vmatpush1.msra.mxu0 0.0
    %2160 = vmatprep.subr.mxu0 0.0
    %2161 = vmatpush1.msra.mxu0 0.0
    %2162 = vmatprep.subr.mxu0 0.0
    %2163 = vmatpush1.msra.mxu0 0.0
    %2164 = vmatprep.subr.mxu0 0.0
    %2165 = vmatpush1.msra.mxu0 0.0
    %2166 = vmatprep.subr.mxu0 0.0
    %2167 = vmatpush1.msra.mxu0 0.0
    %2168 = vmatprep.subr.mxu0 0.0
    %2169 = vmatpush1.msra.mxu0 0.0
    %2170 = vmatprep.subr.mxu0 0.0
    %2171 = vmatpush1.msra.mxu0 0.0
    %2172 = vmatprep.subr.mxu0 0.0
    %2173 = vmatpush1.msra.mxu0 0.0
    %2174 = vmatprep.subr.mxu0 0.0
    %2175 = vmatpush1.msra.mxu0 0.0
    %2176 = vmatprep.subr.mxu0 0.0
    %2177 = vmatpush1.msra.mxu0 0.0
    %2178 = vmatprep.subr.mxu0 0.0
    %2179 = vmatpush1.msra.mxu0 0.0
    %2180 = vmatprep.subr.mxu0 0.0
    %2181 = vmatpush1.msra.mxu0 0.0
    %2182 = vmatprep.subr.mxu0 0.0
    %2183 = vmatpush1.msra.mxu0 0.0
    %2184 = vmatprep.subr.mxu0 0.0
    %2185 = vmatpush1.msra.mxu0 0.0
    %2186 = vmatprep.subr.mxu0 0.0
    %2187 = vmatpush1.msra.mxu0 0.0
    %2188 = vmatprep.subr.mxu0 0.0
    %2189 = vmatpush1.msra.mxu0 0.0
    %2190 = vmatprep.subr.mxu0 0.0
    %2191 = vmatpush1.msra.mxu0 0.0
    %2192 = vmatprep.subr.mxu0 0.0
    %2193 = vmatpush1.msra.mxu0 0.0
    %2194 = vmatprep.subr.mxu0 0.0
    %2195 = vmatpush1.msra.mxu0 0.0
    %2196 = vmatprep.subr.mxu0 0.0
    %2197 = vmatpush1.msra.mxu0 0.0
    %2198 = vmatprep.subr.mxu0 0.0
    %2199 = vmatpush1.msra.mxu0 0.0
    %2200 = vmatprep.subr.mxu0 0.0
    %2201 = vmatpush1.msra.mxu0 0.0
    %2202 = vmatprep.subr.mxu0 0.0
    %2203 = vmatpush1.msra.mxu0 0.0
    %2204 = vmatprep.subr.mxu0 0.0
    %2205 = vmatpush1.msra.mxu0 0.0
    %2206 = vmatprep.subr.mxu0 0.0
    %2207 = vmatpush1.msra.mxu0 0.0
    %2208 = vmatprep.subr.mxu0 0.0
    %2209 = vmatpush1.msra.mxu0 0.0
    %2210 = vmatprep.subr.mxu0 0.0
    %2211 = vmatpush1.msra.mxu0 0.0
    %2212 = vmatprep.subr.mxu0 0.0
    %2213 = vmatpush1.msra.mxu0 0.0
    %2214 = vmatprep.subr.mxu0 0.0
    %2215 = vmatpush1.msra.mxu0 0.0
    %2216 = vmatprep.subr.mxu0 0.0
    %2217 = vmatpush1.msra.mxu0 0.0
    %2218 = vmatprep.mubr.f32.mxu0 0.0
    %v2219 = vand.u32 %v156, 4294901760
    %v2220 = vsub.f32 %v156, %v2219
    %2221 = vmatmul.mubr.f32.gmra.mrb[0].mxu0 %v2220
    %v2222 = vpop.f32.mrb[0].mxu0
    %v2223 = vadd.f32 %v2149, %v2222
    %v2224 = vpop.f32.mrb[0].mxu0
    %2225 = vdwg.mxu0
    %2226 = vmatprep.subr.mxu0 0.0
    %v2227 = vand.u32 %v1385, 4294901760
    %2228 = vmatpush1.msra.mxu0 %v2227
    %2229 = vmatprep.subr.mxu0 0.0
    %2230 = vmatpush1.msra.mxu0 0.0
    %2231 = vmatprep.subr.mxu0 0.0
    %2232 = vmatpush1.msra.mxu0 0.0
    %2233 = vmatprep.subr.mxu0 0.0
    %2234 = vmatpush1.msra.mxu0 0.0
    %2235 = vmatprep.subr.mxu0 0.0
    %2236 = vmatpush1.msra.mxu0 0.0
    %2237 = vmatprep.subr.mxu0 0.0
    %2238 = vmatpush1.msra.mxu0 0.0
    %2239 = vmatprep.subr.mxu0 0.0
    %2240 = vmatpush1.msra.mxu0 0.0
    %2241 = vmatprep.subr.mxu0 0.0
    %2242 = vmatpush1.msra.mxu0 0.0
    %2243 = vmatprep.subr.mxu0 0.0
    %2244 = vmatpush1.msra.mxu0 0.0
    %2245 = vmatprep.subr.mxu0 0.0
    %2246 = vmatpush1.msra.mxu0 0.0
    %2247 = vmatprep.subr.mxu0 0.0
    %2248 = vmatpush1.msra.mxu0 0.0
    %2249 = vmatprep.subr.mxu0 0.0
    %2250 = vmatpush1.msra.mxu0 0.0
    %2251 = vmatprep.subr.mxu0 0.0
    %2252 = vmatpush1.msra.mxu0 0.0
    %2253 = vmatprep.subr.mxu0 0.0
    %2254 = vmatpush1.msra.mxu0 0.0
    %2255 = vmatprep.subr.mxu0 0.0
    %2256 = vmatpush1.msra.mxu0 0.0
    %2257 = vmatprep.subr.mxu0 0.0
    %2258 = vmatpush1.msra.mxu0 0.0
    %2259 = vmatprep.subr.mxu0 0.0
    %2260 = vmatpush1.msra.mxu0 0.0
    %2261 = vmatprep.subr.mxu0 0.0
    %2262 = vmatpush1.msra.mxu0 0.0
    %2263 = vmatprep.subr.mxu0 0.0
    %2264 = vmatpush1.msra.mxu0 0.0
    %2265 = vmatprep.subr.mxu0 0.0
    %2266 = vmatpush1.msra.mxu0 0.0
    %2267 = vmatprep.subr.mxu0 0.0
    %2268 = vmatpush1.msra.mxu0 0.0
    %2269 = vmatprep.subr.mxu0 0.0
    %2270 = vmatpush1.msra.mxu0 0.0
    %2271 = vmatprep.subr.mxu0 0.0
    %2272 = vmatpush1.msra.mxu0 0.0
    %2273 = vmatprep.subr.mxu0 0.0
    %2274 = vmatpush1.msra.mxu0 0.0
    %2275 = vmatprep.subr.mxu0 0.0
    %2276 = vmatpush1.msra.mxu0 0.0
    %2277 = vmatprep.subr.mxu0 0.0
    %2278 = vmatpush1.msra.mxu0 0.0
    %2279 = vmatprep.subr.mxu0 0.0
    %2280 = vmatpush1.msra.mxu0 0.0
    %2281 = vmatprep.subr.mxu0 0.0
    %2282 = vmatpush1.msra.mxu0 0.0
    %2283 = vmatprep.subr.mxu0 0.0
    %2284 = vmatpush1.msra.mxu0 0.0
    %2285 = vmatprep.subr.mxu0 0.0
    %2286 = vmatpush1.msra.mxu0 0.0
    %2287 = vmatprep.subr.mxu0 0.0
    %2288 = vmatpush1.msra.mxu0 0.0
    %2289 = vmatprep.subr.mxu0 0.0
    %2290 = vmatpush1.msra.mxu0 0.0
    %2291 = vmatprep.mubr.f32.mxu0 0.0
    %v2292 = vand.u32 %v156, 4294901760
    %v2293 = vsub.f32 %v156, %v2292
    %v2294 = vand.u32 %v2293, 4294901760
    %2295 = vmatmul.mubr.f32.gmra.mrb[0].mxu0 %v2294
    %v2296 = vpop.f32.mrb[0].mxu0
    %v2297 = vadd.f32 %v2223, %v2296
    %v2298 = vpop.f32.mrb[0].mxu0
    %2299 = vdwg.mxu0
    %2300 = vmatprep.subr.mxu0 0.0
    %v2301 = vand.u32 %v1385, 4294901760
    %v2302 = vsub.f32 %v1385, %v2301
    %v2303 = vand.u32 %v2302, 4294901760
    %2304 = vmatpush1.msra.mxu0 %v2303
    %2305 = vmatprep.subr.mxu0 0.0
    %2306 = vmatpush1.msra.mxu0 0.0
    %2307 = vmatprep.subr.mxu0 0.0
    %2308 = vmatpush1.msra.mxu0 0.0
    %2309 = vmatprep.subr.mxu0 0.0
    %2310 = vmatpush1.msra.mxu0 0.0
    %2311 = vmatprep.subr.mxu0 0.0
    %2312 = vmatpush1.msra.mxu0 0.0
    %2313 = vmatprep.subr.mxu0 0.0
    %2314 = vmatpush1.msra.mxu0 0.0
    %2315 = vmatprep.subr.mxu0 0.0
    %2316 = vmatpush1.msra.mxu0 0.0
    %2317 = vmatprep.subr.mxu0 0.0
    %2318 = vmatpush1.msra.mxu0 0.0
    %2319 = vmatprep.subr.mxu0 0.0
    %2320 = vmatpush1.msra.mxu0 0.0
    %2321 = vmatprep.subr.mxu0 0.0
    %2322 = vmatpush1.msra.mxu0 0.0
    %2323 = vmatprep.subr.mxu0 0.0
    %2324 = vmatpush1.msra.mxu0 0.0
    %2325 = vmatprep.subr.mxu0 0.0
    %2326 = vmatpush1.msra.mxu0 0.0
    %2327 = vmatprep.subr.mxu0 0.0
    %2328 = vmatpush1.msra.mxu0 0.0
    %2329 = vmatprep.subr.mxu0 0.0
    %2330 = vmatpush1.msra.mxu0 0.0
    %2331 = vmatprep.subr.mxu0 0.0
    %2332 = vmatpush1.msra.mxu0 0.0
    %2333 = vmatprep.subr.mxu0 0.0
    %2334 = vmatpush1.msra.mxu0 0.0
    %2335 = vmatprep.subr.mxu0 0.0
    %2336 = vmatpush1.msra.mxu0 0.0
    %2337 = vmatprep.subr.mxu0 0.0
    %2338 = vmatpush1.msra.mxu0 0.0
    %2339 = vmatprep.subr.mxu0 0.0
    %2340 = vmatpush1.msra.mxu0 0.0
    %2341 = vmatprep.subr.mxu0 0.0
    %2342 = vmatpush1.msra.mxu0 0.0
    %2343 = vmatprep.subr.mxu0 0.0
    %2344 = vmatpush1.msra.mxu0 0.0
    %2345 = vmatprep.subr.mxu0 0.0
    %2346 = vmatpush1.msra.mxu0 0.0
    %2347 = vmatprep.subr.mxu0 0.0
    %2348 = vmatpush1.msra.mxu0 0.0
    %2349 = vmatprep.subr.mxu0 0.0
    %2350 = vmatpush1.msra.mxu0 0.0
    %2351 = vmatprep.subr.mxu0 0.0
    %2352 = vmatpush1.msra.mxu0 0.0
    %2353 = vmatprep.subr.mxu0 0.0
    %2354 = vmatpush1.msra.mxu0 0.0
    %2355 = vmatprep.subr.mxu0 0.0
    %2356 = vmatpush1.msra.mxu0 0.0
    %2357 = vmatprep.subr.mxu0 0.0
    %2358 = vmatpush1.msra.mxu0 0.0
    %2359 = vmatprep.subr.mxu0 0.0
    %2360 = vmatpush1.msra.mxu0 0.0
    %2361 = vmatprep.subr.mxu0 0.0
    %2362 = vmatpush1.msra.mxu0 0.0
    %2363 = vmatprep.subr.mxu0 0.0
    %2364 = vmatpush1.msra.mxu0 0.0
    %2365 = vmatprep.subr.mxu0 0.0
    %2366 = vmatpush1.msra.mxu0 0.0
    %2367 = vmatprep.mubr.f32.mxu0 0.0
    %v2368 = vand.u32 %v156, 4294901760
    %2369 = vmatmul.mubr.f32.gmra.mrb[0].mxu0 %v2368
    %v2370 = vpop.f32.mrb[0].mxu0
    %v2371 = vadd.f32 %v2297, %v2370
    %v2372 = vpop.f32.mrb[0].mxu0
    %2373 = vdwg.mxu0
    %2374 = vmatprep.subr.mxu0 0.0
    %v2375 = vand.u32 %v1385, 4294901760
    %2376 = vmatpush1.msra.mxu0 %v2375
    %2377 = vmatprep.subr.mxu0 0.0
    %2378 = vmatpush1.msra.mxu0 0.0
    %2379 = vmatprep.subr.mxu0 0.0
    %2380 = vmatpush1.msra.mxu0 0.0
    %2381 = vmatprep.subr.mxu0 0.0
    %2382 = vmatpush1.msra.mxu0 0.0
    %2383 = vmatprep.subr.mxu0 0.0
    %2384 = vmatpush1.msra.mxu0 0.0
    %2385 = vmatprep.subr.mxu0 0.0
    %2386 = vmatpush1.msra.mxu0 0.0
    %2387 = vmatprep.subr.mxu0 0.0
    %2388 = vmatpush1.msra.mxu0 0.0
    %2389 = vmatprep.subr.mxu0 0.0
    %2390 = vmatpush1.msra.mxu0 0.0
    %2391 = vmatprep.subr.mxu0 0.0
    %2392 = vmatpush1.msra.mxu0 0.0
    %2393 = vmatprep.subr.mxu0 0.0
    %2394 = vmatpush1.msra.mxu0 0.0
    %2395 = vmatprep.subr.mxu0 0.0
    %2396 = vmatpush1.msra.mxu0 0.0
    %2397 = vmatprep.subr.mxu0 0.0
    %2398 = vmatpush1.msra.mxu0 0.0
    %2399 = vmatprep.subr.mxu0 0.0
    %2400 = vmatpush1.msra.mxu0 0.0
    %2401 = vmatprep.subr.mxu0 0.0
    %2402 = vmatpush1.msra.mxu0 0.0
    %2403 = vmatprep.subr.mxu0 0.0
    %2404 = vmatpush1.msra.mxu0 0.0
    %2405 = vmatprep.subr.mxu0 0.0
    %2406 = vmatpush1.msra.mxu0 0.0
    %2407 = vmatprep.subr.mxu0 0.0
    %2408 = vmatpush1.msra.mxu0 0.0
    %2409 = vmatprep.subr.mxu0 0.0
    %2410 = vmatpush1.msra.mxu0 0.0
    %2411 = vmatprep.subr.mxu0 0.0
    %2412 = vmatpush1.msra.mxu0 0.0
    %2413 = vmatprep.subr.mxu0 0.0
    %2414 = vmatpush1.msra.mxu0 0.0
    %2415 = vmatprep.subr.mxu0 0.0
    %2416 = vmatpush1.msra.mxu0 0.0
    %2417 = vmatprep.subr.mxu0 0.0
    %2418 = vmatpush1.msra.mxu0 0.0
    %2419 = vmatprep.subr.mxu0 0.0
    %2420 = vmatpush1.msra.mxu0 0.0
    %2421 = vmatprep.subr.mxu0 0.0
    %2422 = vmatpush1.msra.mxu0 0.0
    %2423 = vmatprep.subr.mxu0 0.0
    %2424 = vmatpush1.msra.mxu0 0.0
    %2425 = vmatprep.subr.mxu0 0.0
    %2426 = vmatpush1.msra.mxu0 0.0
    %2427 = vmatprep.subr.mxu0 0.0
    %2428 = vmatpush1.msra.mxu0 0.0
    %2429 = vmatprep.subr.mxu0 0.0
    %2430 = vmatpush1.msra.mxu0 0.0
    %2431 = vmatprep.subr.mxu0 0.0
    %2432 = vmatpush1.msra.mxu0 0.0
    %2433 = vmatprep.subr.mxu0 0.0
    %2434 = vmatpush1.msra.mxu0 0.0
    %2435 = vmatprep.subr.mxu0 0.0
    %2436 = vmatpush1.msra.mxu0 0.0
    %2437 = vmatprep.subr.mxu0 0.0
    %2438 = vmatpush1.msra.mxu0 0.0
    %2439 = vmatprep.mubr.f32.mxu0 0.0
    %v2440 = vand.u32 %v156, 4294901760
    %2441 = vmatmul.mubr.f32.gmra.mrb[0].mxu0 %v2440
    %v2442 = vpop.f32.mrb[0].mxu0
    %v2443 = vadd.f32 %v2371, %v2442
    %v2444 = vpop.f32.mrb[0].mxu0
    %2445 = vdwg.mxu0
    %v2446 = vmul.f32 %v1999, %v2443
    %v2447 = vadd.f32 %v1833, %v2446
    %v2449 = vcombine.high %v1989, %v1989
    %v2451 = vunpack.c.l.s4 1966171168
    %v2452 = vunpack.c.0.s8 %v2451
    %v2453 = vlaneseq
    %v2454 = vshrl.u32 %v2453, 7
    %v2455 = vsub.s32 %v2452, %v2454
    %v2456 = vrot.slane %v1989, %v2455
    %v2458 = vunpack.c.l.s4 1966171168
    %v2459 = vunpack.c.0.s8 %v2458
    %v2460 = vlaneseq
    %v2461 = vshrl.u32 %v2460, 7
    %v2462 = vsub.s32 %v2459, %v2461
    %v2463 = vrot.slane %v2449, %v2462
    %v2464 = vcombine.high %v2456, %v2456
    %v2465 = vcombine.high %v2463, %v2463
    %v2467 = vunpack.c.l.s4 1966171168
    %v2468 = vunpack.c.0.s8 %v2467
    %v2469 = vlaneseq
    %v2470 = vshrl.u32 %v2469, 7
    %v2471 = vsub.s32 %v2468, %v2470
    %v2472 = vrot.slane %v2456, %v2471
    %v2474 = vunpack.c.l.s4 1966171168
    %v2475 = vunpack.c.0.s8 %v2474
    %v2476 = vlaneseq
    %v2477 = vshrl.u32 %v2476, 7
    %v2478 = vsub.s32 %v2475, %v2477
    %v2479 = vrot.slane %v2463, %v2478
    %v2481 = vunpack.c.l.s4 1966171168
    %v2482 = vunpack.c.0.s8 %v2481
    %v2483 = vlaneseq
    %v2484 = vshrl.u32 %v2483, 7
    %v2485 = vsub.s32 %v2482, %v2484
    %v2486 = vrot.slane %v2464, %v2485
    %v2488 = vunpack.c.l.s4 1966171168
    %v2489 = vunpack.c.0.s8 %v2488
    %v2490 = vlaneseq
    %v2491 = vshrl.u32 %v2490, 7
    %v2492 = vsub.s32 %v2489, %v2491
    %v2493 = vrot.slane %v2465, %v2492
    %v2494 = vcombine.high %v2472, %v2472
    %v2495 = vcombine.high %v2479, %v2479
    %v2496 = vcombine.high %v2486, %v2486
    %v2497 = vcombine.high %v2493, %v2493
    %v2498 = vlaneseq
    %v2499 = vshrl.u32 %v2498, 7
    %v2500 = vsub.s32 0, %v2499
    %v2501 = vrot.slane %v2472, %v2500
    %v2502 = vlaneseq
    %v2503 = vshrl.u32 %v2502, 7
    %v2504 = vsub.s32 0, %v2503
    %v2505 = vrot.slane %v2486, %v2504
    %v2506 = vlaneseq
    %v2507 = vshrl.u32 %v2506, 7
    %v2508 = vsub.s32 0, %v2507
    %v2509 = vrot.slane %v2494, %v2508
    %v2510 = vlaneseq
    %v2511 = vshrl.u32 %v2510, 7
    %v2512 = vsub.s32 0, %v2511
    %v2513 = vrot.slane %v2496, %v2512
    %v2514 = vlaneseq
    %v2515 = vshrl.u32 %v2514, 7
    %v2516 = vsub.s32 0, %v2515
    %v2517 = vrot.slane %v2479, %v2516
    %v2518 = vlaneseq
    %v2519 = vshrl.u32 %v2518, 7
    %v2520 = vsub.s32 0, %v2519
    %v2521 = vrot.slane %v2493, %v2520
    %v2522 = vlaneseq
    %v2523 = vshrl.u32 %v2522, 7
    %v2524 = vsub.s32 0, %v2523
    %v2525 = vrot.slane %v2495, %v2524
    %v2526 = vlaneseq
    %v2527 = vshrl.u32 %v2526, 7
    %v2528 = vsub.s32 0, %v2527
    %v2529 = vrot.slane %v2497, %v2528
    %v2538 = vadd.f32 %v2501, %v78
    %v2539 = vadd.f32 %v2505, %v85
    %v2540 = vadd.f32 %v2509, %v92
    %v2541 = vadd.f32 %v2513, %v99
    %v2542 = vadd.f32 %v2517, %v106
    %v2543 = vadd.f32 %v2521, %v113
    %v2544 = vadd.f32 %v2525, %v120
    %v2545 = vadd.f32 %v2529, %v127
    %v2546 = vsel %vm154, %v2538, -inf
    %v2547 = vsel %vm154, %v2539, -inf
    %v2548 = vsel %vm154, %v2540, -inf
    %v2549 = vsel %vm154, %v2541, -inf
    %v2550 = vsel %vm154, %v2542, -inf
    %v2551 = vmax.f32 %v2546, %v2550
    %v2552 = vsel %vm154, %v2543, -inf
    %v2553 = vmax.f32 %v2547, %v2552
    %v2554 = vsel %vm154, %v2544, -inf
    %v2555 = vmax.f32 %v2548, %v2554
    %v2556 = vsel %vm154, %v2545, -inf
    %v2557 = vmax.f32 %v2549, %v2556
    %v2558 = vmax.f32 %v2551, %v2553
    %v2559 = vmax.f32 %v2555, %v2557
    %v2560 = vmax.f32 %v2558, %v2559
    %v2561 = vsub.f32 %v2538, %v2560
    %v2562 = vsub.f32 %v2539, %v2560
    %v2563 = vsub.f32 %v2540, %v2560
    %v2564 = vsub.f32 %v2541, %v2560
    %v2565 = vsub.f32 %v2542, %v2560
    %v2566 = vsub.f32 %v2543, %v2560
    %v2567 = vsub.f32 %v2544, %v2560
    %v2568 = vsub.f32 %v2545, %v2560
    %v2569 = vmul.f32 %v2561, 1.442695
    %v2570 = vpow.pop %v2569
    %v2571 = vmul.f32 %v2562, 1.442695
    %v2572 = vpow.pop %v2571
    %v2573 = vmul.f32 %v2563, 1.442695
    %v2574 = vpow.pop %v2573
    %v2575 = vmul.f32 %v2564, 1.442695
    %v2576 = vpow.pop %v2575
    %v2577 = vmul.f32 %v2565, 1.442695
    %v2578 = vpow.pop %v2577
    %v2579 = vmul.f32 %v2566, 1.442695
    %v2580 = vpow.pop %v2579
    %v2581 = vmul.f32 %v2567, 1.442695
    %v2582 = vpow.pop %v2581
    %v2583 = vmul.f32 %v2568, 1.442695
    %v2584 = vpow.pop %v2583
    %v2585 = vsel %vm154, %v2570, 0.0
    %v2586 = vsel %vm154, %v2572, 0.0
    %v2587 = vadd.f32 %v2585, %v2586
    %v2588 = vsel %vm154, %v2574, 0.0
    %v2589 = vadd.f32 %v2587, %v2588
    %v2590 = vsel %vm154, %v2576, 0.0
    %v2591 = vadd.f32 %v2589, %v2590
    %v2592 = vsel %vm154, %v2578, 0.0
    %v2593 = vadd.f32 %v2591, %v2592
    %v2594 = vsel %vm154, %v2580, 0.0
    %v2595 = vadd.f32 %v2593, %v2594
    %v2596 = vsel %vm154, %v2582, 0.0
    %v2597 = vadd.f32 %v2595, %v2596
    %v2598 = vsel %vm154, %v2584, 0.0
    %v2599 = vadd.f32 %v2597, %v2598
    %v2600 = vlog2.pop %v2599
    %v2601 = vmul.f32 %v2600, 0.6931472
    %v2602 = vadd.f32 %v2560, %v2601
    %v2603 = vadd.f32 %v2602, %v1991
    %s2604 = scalar_lea.vmem [#allocation2], 40
    %v2605 = vld [vmem:[%s2604] sm:$0xff]
    %v2606 = vld [vmem:[%s1 + $0x5] sm:$0x1]
    %v2607 = vlaneseq
    %v2608 = vshrl.u32 %v2607, 7
    %v2609 = vsub.s32 0, %v2608
    %v2610 = vrot.slane %v2606, %v2609
    %vm2611 = vcmp.eq.s32.totalorder %v2610, %v39
    %v2612 = vsel %vm2611, 1, 0
    %v2613 = vcvt.s32.f32 %v2612
    %2614 = vmatprep.subr.mxu0 0.0
    %v2615 = vand.u32 %v1999, 4294901760
    %2616 = vmatpush1.msra.mxu0 %v2615
    %2617 = vmatprep.subr.mxu0 0.0
    %2618 = vmatpush1.msra.mxu0 0.0
    %2619 = vmatprep.subr.mxu0 0.0
    %2620 = vmatpush1.msra.mxu0 0.0
    %2621 = vmatprep.subr.mxu0 0.0
    %2622 = vmatpush1.msra.mxu0 0.0
    %2623 = vmatprep.subr.mxu0 0.0
    %2624 = vmatpush1.msra.mxu0 0.0
    %2625 = vmatprep.subr.mxu0 0.0
    %2626 = vmatpush1.msra.mxu0 0.0
    %2627 = vmatprep.subr.mxu0 0.0
    %2628 = vmatpush1.msra.mxu0 0.0
    %2629 = vmatprep.subr.mxu0 0.0
    %2630 = vmatpush1.msra.mxu0 0.0
    %2631 = vmatprep.subr.mxu0 0.0
    %2632 = vmatpush1.msra.mxu0 0.0
    %2633 = vmatprep.subr.mxu0 0.0
    %2634 = vmatpush1.msra.mxu0 0.0
    %2635 = vmatprep.subr.mxu0 0.0
    %2636 = vmatpush1.msra.mxu0 0.0
    %2637 = vmatprep.subr.mxu0 0.0
    %2638 = vmatpush1.msra.mxu0 0.0
    %2639 = vmatprep.subr.mxu0 0.0
    %2640 = vmatpush1.msra.mxu0 0.0
    %2641 = vmatprep.subr.mxu0 0.0
    %2642 = vmatpush1.msra.mxu0 0.0
    %2643 = vmatprep.subr.mxu0 0.0
    %2644 = vmatpush1.msra.mxu0 0.0
    %2645 = vmatprep.subr.mxu0 0.0
    %2646 = vmatpush1.msra.mxu0 0.0
    %2647 = vmatprep.subr.mxu0 0.0
    %2648 = vmatpush1.msra.mxu0 0.0
    %2649 = vmatprep.subr.mxu0 0.0
    %2650 = vmatpush1.msra.mxu0 0.0
    %2651 = vmatprep.subr.mxu0 0.0
    %2652 = vmatpush1.msra.mxu0 0.0
    %2653 = vmatprep.subr.mxu0 0.0
    %2654 = vmatpush1.msra.mxu0 0.0
    %2655 = vmatprep.subr.mxu0 0.0
    %2656 = vmatpush1.msra.mxu0 0.0
    %2657 = vmatprep.subr.mxu0 0.0
    %2658 = vmatpush1.msra.mxu0 0.0
    %2659 = vmatprep.subr.mxu0 0.0
    %2660 = vmatpush1.msra.mxu0 0.0
    %2661 = vmatprep.subr.mxu0 0.0
    %2662 = vmatpush1.msra.mxu0 0.0
    %2663 = vmatprep.subr.mxu0 0.0
    %2664 = vmatpush1.msra.mxu0 0.0
    %2665 = vmatprep.subr.mxu0 0.0
    %2666 = vmatpush1.msra.mxu0 0.0
    %2667 = vmatprep.subr.mxu0 0.0
    %2668 = vmatpush1.msra.mxu0 0.0
    %2669 = vmatprep.subr.mxu0 0.0
    %2670 = vmatpush1.msra.mxu0 0.0
    %2671 = vmatprep.subr.mxu0 0.0
    %2672 = vmatpush1.msra.mxu0 0.0
    %2673 = vmatprep.subr.mxu0 0.0
    %2674 = vmatpush1.msra.mxu0 0.0
    %2675 = vmatprep.subr.mxu0 0.0
    %2676 = vmatpush1.msra.mxu0 0.0
    %2677 = vmatprep.subr.mxu0 0.0
    %2678 = vmatpush1.msra.mxu0 0.0
    %2679 = vmatprep.mubr.f32.mxu0 0.0
    %v2680 = vand.u32 %v156, 4294901760
    %v2681 = vsub.f32 %v156, %v2680
    %v2682 = vand.u32 %v2681, 4294901760
    %v2683 = vsub.f32 %v2681, %v2682
    %v2684 = vand.u32 %v2683, 4294901760
    %2685 = vmatmul.mubr.f32.gmra.mrb[0].mxu0 %v2684
    %v2686 = vpop.f32.mrb[0].mxu0
    %v2687 = vadd.f32 %v2605, %v2686
    %v2688 = vpop.f32.mrb[0].mxu0
    %2689 = vdwg.mxu0
    %2690 = vmatprep.subr.mxu0 0.0
    %v2691 = vand.u32 %v1999, 4294901760
    %v2692 = vsub.f32 %v1999, %v2691
    %v2693 = vand.u32 %v2692, 4294901760
    %v2694 = vsub.f32 %v2692, %v2693
    %v2695 = vand.u32 %v2694, 4294901760
    %2696 = vmatpush1.msra.mxu0 %v2695
    %2697 = vmatprep.subr.mxu0 0.0
    %2698 = vmatpush1.msra.mxu0 0.0
    %2699 = vmatprep.subr.mxu0 0.0
    %2700 = vmatpush1.msra.mxu0 0.0
    %2701 = vmatprep.subr.mxu0 0.0
    %2702 = vmatpush1.msra.mxu0 0.0
    %2703 = vmatprep.subr.mxu0 0.0
    %2704 = vmatpush1.msra.mxu0 0.0
    %2705 = vmatprep.subr.mxu0 0.0
    %2706 = vmatpush1.msra.mxu0 0.0
    %2707 = vmatprep.subr.mxu0 0.0
    %2708 = vmatpush1.msra.mxu0 0.0
    %2709 = vmatprep.subr.mxu0 0.0
    %2710 = vmatpush1.msra.mxu0 0.0
    %2711 = vmatprep.subr.mxu0 0.0
    %2712 = vmatpush1.msra.mxu0 0.0
    %2713 = vmatprep.subr.mxu0 0.0
    %2714 = vmatpush1.msra.mxu0 0.0
    %2715 = vmatprep.subr.mxu0 0.0
    %2716 = vmatpush1.msra.mxu0 0.0
    %2717 = vmatprep.subr.mxu0 0.0
    %2718 = vmatpush1.msra.mxu0 0.0
    %2719 = vmatprep.subr.mxu0 0.0
    %2720 = vmatpush1.msra.mxu0 0.0
    %2721 = vmatprep.subr.mxu0 0.0
    %2722 = vmatpush1.msra.mxu0 0.0
    %2723 = vmatprep.subr.mxu0 0.0
    %2724 = vmatpush1.msra.mxu0 0.0
    %2725 = vmatprep.subr.mxu0 0.0
    %2726 = vmatpush1.msra.mxu0 0.0
    %2727 = vmatprep.subr.mxu0 0.0
    %2728 = vmatpush1.msra.mxu0 0.0
    %2729 = vmatprep.subr.mxu0 0.0
    %2730 = vmatpush1.msra.mxu0 0.0
    %2731 = vmatprep.subr.mxu0 0.0
    %2732 = vmatpush1.msra.mxu0 0.0
    %2733 = vmatprep.subr.mxu0 0.0
    %2734 = vmatpush1.msra.mxu0 0.0
    %2735 = vmatprep.subr.mxu0 0.0
    %2736 = vmatpush1.msra.mxu0 0.0
    %2737 = vmatprep.subr.mxu0 0.0
    %2738 = vmatpush1.msra.mxu0 0.0
    %2739 = vmatprep.subr.mxu0 0.0
    %2740 = vmatpush1.msra.mxu0 0.0
    %2741 = vmatprep.subr.mxu0 0.0
    %2742 = vmatpush1.msra.mxu0 0.0
    %2743 = vmatprep.subr.mxu0 0.0
    %2744 = vmatpush1.msra.mxu0 0.0
    %2745 = vmatprep.subr.mxu0 0.0
    %2746 = vmatpush1.msra.mxu0 0.0
    %2747 = vmatprep.subr.mxu0 0.0
    %2748 = vmatpush1.msra.mxu0 0.0
    %2749 = vmatprep.subr.mxu0 0.0
    %2750 = vmatpush1.msra.mxu0 0.0
    %2751 = vmatprep.subr.mxu0 0.0
    %2752 = vmatpush1.msra.mxu0 0.0
    %2753 = vmatprep.subr.mxu0 0.0
    %2754 = vmatpush1.msra.mxu0 0.0
    %2755 = vmatprep.subr.mxu0 0.0
    %2756 = vmatpush1.msra.mxu0 0.0
    %2757 = vmatprep.subr.mxu0 0.0
    %2758 = vmatpush1.msra.mxu0 0.0
    %2759 = vmatprep.mubr.f32.mxu0 0.0
    %v2760 = vand.u32 %v156, 4294901760
    %2761 = vmatmul.mubr.f32.gmra.mrb[0].mxu0 %v2760
    %v2762 = vpop.f32.mrb[0].mxu0
    %v2763 = vadd.f32 %v2687, %v2762
    %v2764 = vpop.f32.mrb[0].mxu0
    %2765 = vdwg.mxu0
    %2766 = vmatprep.subr.mxu0 0.0
    %v2767 = vand.u32 %v1999, 4294901760
    %v2768 = vsub.f32 %v1999, %v2767
    %2769 = vmatpush1.msra.mxu0 %v2768
    %2770 = vmatprep.subr.mxu0 0.0
    %2771 = vmatpush1.msra.mxu0 0.0
    %2772 = vmatprep.subr.mxu0 0.0
    %2773 = vmatpush1.msra.mxu0 0.0
    %2774 = vmatprep.subr.mxu0 0.0
    %2775 = vmatpush1.msra.mxu0 0.0
    %2776 = vmatprep.subr.mxu0 0.0
    %2777 = vmatpush1.msra.mxu0 0.0
    %2778 = vmatprep.subr.mxu0 0.0
    %2779 = vmatpush1.msra.mxu0 0.0
    %2780 = vmatprep.subr.mxu0 0.0
    %2781 = vmatpush1.msra.mxu0 0.0
    %2782 = vmatprep.subr.mxu0 0.0
    %2783 = vmatpush1.msra.mxu0 0.0
    %2784 = vmatprep.subr.mxu0 0.0
    %2785 = vmatpush1.msra.mxu0 0.0
    %2786 = vmatprep.subr.mxu0 0.0
    %2787 = vmatpush1.msra.mxu0 0.0
    %2788 = vmatprep.subr.mxu0 0.0
    %2789 = vmatpush1.msra.mxu0 0.0
    %2790 = vmatprep.subr.mxu0 0.0
    %2791 = vmatpush1.msra.mxu0 0.0
    %2792 = vmatprep.subr.mxu0 0.0
    %2793 = vmatpush1.msra.mxu0 0.0
    %2794 = vmatprep.subr.mxu0 0.0
    %2795 = vmatpush1.msra.mxu0 0.0
    %2796 = vmatprep.subr.mxu0 0.0
    %2797 = vmatpush1.msra.mxu0 0.0
    %2798 = vmatprep.subr.mxu0 0.0
    %2799 = vmatpush1.msra.mxu0 0.0
    %2800 = vmatprep.subr.mxu0 0.0
    %2801 = vmatpush1.msra.mxu0 0.0
    %2802 = vmatprep.subr.mxu0 0.0
    %2803 = vmatpush1.msra.mxu0 0.0
    %2804 = vmatprep.subr.mxu0 0.0
    %2805 = vmatpush1.msra.mxu0 0.0
    %2806 = vmatprep.subr.mxu0 0.0
    %2807 = vmatpush1.msra.mxu0 0.0
    %2808 = vmatprep.subr.mxu0 0.0
    %2809 = vmatpush1.msra.mxu0 0.0
    %2810 = vmatprep.subr.mxu0 0.0
    %2811 = vmatpush1.msra.mxu0 0.0
    %2812 = vmatprep.subr.mxu0 0.0
    %2813 = vmatpush1.msra.mxu0 0.0
    %2814 = vmatprep.subr.mxu0 0.0
    %2815 = vmatpush1.msra.mxu0 0.0
    %2816 = vmatprep.subr.mxu0 0.0
    %2817 = vmatpush1.msra.mxu0 0.0
    %2818 = vmatprep.subr.mxu0 0.0
    %2819 = vmatpush1.msra.mxu0 0.0
    %2820 = vmatprep.subr.mxu0 0.0
    %2821 = vmatpush1.msra.mxu0 0.0
    %2822 = vmatprep.subr.mxu0 0.0
    %2823 = vmatpush1.msra.mxu0 0.0
    %2824 = vmatprep.subr.mxu0 0.0
    %2825 = vmatpush1.msra.mxu0 0.0
    %2826 = vmatprep.subr.mxu0 0.0
    %2827 = vmatpush1.msra.mxu0 0.0
    %2828 = vmatprep.subr.mxu0 0.0
    %2829 = vmatpush1.msra.mxu0 0.0
    %2830 = vmatprep.subr.mxu0 0.0
    %2831 = vmatpush1.msra.mxu0 0.0
    %2832 = vmatprep.mubr.f32.mxu0 0.0
    %v2833 = vand.u32 %v156, 4294901760
    %v2834 = vsub.f32 %v156, %v2833
    %2835 = vmatmul.mubr.f32.gmra.mrb[0].mxu0 %v2834
    %v2836 = vpop.f32.mrb[0].mxu0
    %v2837 = vadd.f32 %v2763, %v2836
    %v2838 = vpop.f32.mrb[0].mxu0
    %2839 = vdwg.mxu0
    %2840 = vmatprep.subr.mxu0 0.0
    %v2841 = vand.u32 %v1999, 4294901760
    %2842 = vmatpush1.msra.mxu0 %v2841
    %2843 = vmatprep.subr.mxu0 0.0
    %2844 = vmatpush1.msra.mxu0 0.0
    %2845 = vmatprep.subr.mxu0 0.0
    %2846 = vmatpush1.msra.mxu0 0.0
    %2847 = vmatprep.subr.mxu0 0.0
    %2848 = vmatpush1.msra.mxu0 0.0
    %2849 = vmatprep.subr.mxu0 0.0
    %2850 = vmatpush1.msra.mxu0 0.0
    %2851 = vmatprep.subr.mxu0 0.0
    %2852 = vmatpush1.msra.mxu0 0.0
    %2853 = vmatprep.subr.mxu0 0.0
    %2854 = vmatpush1.msra.mxu0 0.0
    %2855 = vmatprep.subr.mxu0 0.0
    %2856 = vmatpush1.msra.mxu0 0.0
    %2857 = vmatprep.subr.mxu0 0.0
    %2858 = vmatpush1.msra.mxu0 0.0
    %2859 = vmatprep.subr.mxu0 0.0
    %2860 = vmatpush1.msra.mxu0 0.0
    %2861 = vmatprep.subr.mxu0 0.0
    %2862 = vmatpush1.msra.mxu0 0.0
    %2863 = vmatprep.subr.mxu0 0.0
    %2864 = vmatpush1.msra.mxu0 0.0
    %2865 = vmatprep.subr.mxu0 0.0
    %2866 = vmatpush1.msra.mxu0 0.0
    %2867 = vmatprep.subr.mxu0 0.0
    %2868 = vmatpush1.msra.mxu0 0.0
    %2869 = vmatprep.subr.mxu0 0.0
    %2870 = vmatpush1.msra.mxu0 0.0
    %2871 = vmatprep.subr.mxu0 0.0
    %2872 = vmatpush1.msra.mxu0 0.0
    %2873 = vmatprep.subr.mxu0 0.0
    %2874 = vmatpush1.msra.mxu0 0.0
    %2875 = vmatprep.subr.mxu0 0.0
    %2876 = vmatpush1.msra.mxu0 0.0
    %2877 = vmatprep.subr.mxu0 0.0
    %2878 = vmatpush1.msra.mxu0 0.0
    %2879 = vmatprep.subr.mxu0 0.0
    %2880 = vmatpush1.msra.mxu0 0.0
    %2881 = vmatprep.subr.mxu0 0.0
    %2882 = vmatpush1.msra.mxu0 0.0
    %2883 = vmatprep.subr.mxu0 0.0
    %2884 = vmatpush1.msra.mxu0 0.0
    %2885 = vmatprep.subr.mxu0 0.0
    %2886 = vmatpush1.msra.mxu0 0.0
    %2887 = vmatprep.subr.mxu0 0.0
    %2888 = vmatpush1.msra.mxu0 0.0
    %2889 = vmatprep.subr.mxu0 0.0
    %2890 = vmatpush1.msra.mxu0 0.0
    %2891 = vmatprep.subr.mxu0 0.0
    %2892 = vmatpush1.msra.mxu0 0.0
    %2893 = vmatprep.subr.mxu0 0.0
    %2894 = vmatpush1.msra.mxu0 0.0
    %2895 = vmatprep.subr.mxu0 0.0
    %2896 = vmatpush1.msra.mxu0 0.0
    %2897 = vmatprep.subr.mxu0 0.0
    %2898 = vmatpush1.msra.mxu0 0.0
    %2899 = vmatprep.subr.mxu0 0.0
    %2900 = vmatpush1.msra.mxu0 0.0
    %2901 = vmatprep.subr.mxu0 0.0
    %2902 = vmatpush1.msra.mxu0 0.0
    %2903 = vmatprep.subr.mxu0 0.0
    %2904 = vmatpush1.msra.mxu0 0.0
    %2905 = vmatprep.mubr.f32.mxu0 0.0
    %v2906 = vand.u32 %v156, 4294901760
    %v2907 = vsub.f32 %v156, %v2906
    %v2908 = vand.u32 %v2907, 4294901760
    %2909 = vmatmul.mubr.f32.gmra.mrb[0].mxu0 %v2908
    %v2910 = vpop.f32.mrb[0].mxu0
    %v2911 = vadd.f32 %v2837, %v2910
    %v2912 = vpop.f32.mrb[0].mxu0
    %2913 = vdwg.mxu0
    %2914 = vmatprep.subr.mxu0 0.0
    %v2915 = vand.u32 %v1999, 4294901760
    %v2916 = vsub.f32 %v1999, %v2915
    %v2917 = vand.u32 %v2916, 4294901760
    %2918 = vmatpush1.msra.mxu0 %v2917
    %2919 = vmatprep.subr.mxu0 0.0
    %2920 = vmatpush1.msra.mxu0 0.0
    %2921 = vmatprep.subr.mxu0 0.0
    %2922 = vmatpush1.msra.mxu0 0.0
    %2923 = vmatprep.subr.mxu0 0.0
    %2924 = vmatpush1.msra.mxu0 0.0
    %2925 = vmatprep.subr.mxu0 0.0
    %2926 = vmatpush1.msra.mxu0 0.0
    %2927 = vmatprep.subr.mxu0 0.0
    %2928 = vmatpush1.msra.mxu0 0.0
    %2929 = vmatprep.subr.mxu0 0.0
    %2930 = vmatpush1.msra.mxu0 0.0
    %2931 = vmatprep.subr.mxu0 0.0
    %2932 = vmatpush1.msra.mxu0 0.0
    %2933 = vmatprep.subr.mxu0 0.0
    %2934 = vmatpush1.msra.mxu0 0.0
    %2935 = vmatprep.subr.mxu0 0.0
    %2936 = vmatpush1.msra.mxu0 0.0
    %2937 = vmatprep.subr.mxu0 0.0
    %2938 = vmatpush1.msra.mxu0 0.0
    %2939 = vmatprep.subr.mxu0 0.0
    %2940 = vmatpush1.msra.mxu0 0.0
    %2941 = vmatprep.subr.mxu0 0.0
    %2942 = vmatpush1.msra.mxu0 0.0
    %2943 = vmatprep.subr.mxu0 0.0
    %2944 = vmatpush1.msra.mxu0 0.0
    %2945 = vmatprep.subr.mxu0 0.0
    %2946 = vmatpush1.msra.mxu0 0.0
    %2947 = vmatprep.subr.mxu0 0.0
    %2948 = vmatpush1.msra.mxu0 0.0
    %2949 = vmatprep.subr.mxu0 0.0
    %2950 = vmatpush1.msra.mxu0 0.0
    %2951 = vmatprep.subr.mxu0 0.0
    %2952 = vmatpush1.msra.mxu0 0.0
    %2953 = vmatprep.subr.mxu0 0.0
    %2954 = vmatpush1.msra.mxu0 0.0
    %2955 = vmatprep.subr.mxu0 0.0
    %2956 = vmatpush1.msra.mxu0 0.0
    %2957 = vmatprep.subr.mxu0 0.0
    %2958 = vmatpush1.msra.mxu0 0.0
    %2959 = vmatprep.subr.mxu0 0.0
    %2960 = vmatpush1.msra.mxu0 0.0
    %2961 = vmatprep.subr.mxu0 0.0
    %2962 = vmatpush1.msra.mxu0 0.0
    %2963 = vmatprep.subr.mxu0 0.0
    %2964 = vmatpush1.msra.mxu0 0.0
    %2965 = vmatprep.subr.mxu0 0.0
    %2966 = vmatpush1.msra.mxu0 0.0
    %2967 = vmatprep.subr.mxu0 0.0
    %2968 = vmatpush1.msra.mxu0 0.0
    %2969 = vmatprep.subr.mxu0 0.0
    %2970 = vmatpush1.msra.mxu0 0.0
    %2971 = vmatprep.subr.mxu0 0.0
    %2972 = vmatpush1.msra.mxu0 0.0
    %2973 = vmatprep.subr.mxu0 0.0
    %2974 = vmatpush1.msra.mxu0 0.0
    %2975 = vmatprep.subr.mxu0 0.0
    %2976 = vmatpush1.msra.mxu0 0.0
    %2977 = vmatprep.subr.mxu0 0.0
    %2978 = vmatpush1.msra.mxu0 0.0
    %2979 = vmatprep.subr.mxu0 0.0
    %2980 = vmatpush1.msra.mxu0 0.0
    %2981 = vmatprep.mubr.f32.mxu0 0.0
    %v2982 = vand.u32 %v156, 4294901760
    %2983 = vmatmul.mubr.f32.gmra.mrb[0].mxu0 %v2982
    %v2984 = vpop.f32.mrb[0].mxu0
    %v2985 = vadd.f32 %v2911, %v2984
    %v2986 = vpop.f32.mrb[0].mxu0
    %2987 = vdwg.mxu0
    %2988 = vmatprep.subr.mxu0 0.0
    %v2989 = vand.u32 %v1999, 4294901760
    %2990 = vmatpush1.msra.mxu0 %v2989
    %2991 = vmatprep.subr.mxu0 0.0
    %2992 = vmatpush1.msra.mxu0 0.0
    %2993 = vmatprep.subr.mxu0 0.0
    %2994 = vmatpush1.msra.mxu0 0.0
    %2995 = vmatprep.subr.mxu0 0.0
    %2996 = vmatpush1.msra.mxu0 0.0
    %2997 = vmatprep.subr.mxu0 0.0
    %2998 = vmatpush1.msra.mxu0 0.0
    %2999 = vmatprep.subr.mxu0 0.0
    %3000 = vmatpush1.msra.mxu0 0.0
    %3001 = vmatprep.subr.mxu0 0.0
    %3002 = vmatpush1.msra.mxu0 0.0
    %3003 = vmatprep.subr.mxu0 0.0
    %3004 = vmatpush1.msra.mxu0 0.0
    %3005 = vmatprep.subr.mxu0 0.0
    %3006 = vmatpush1.msra.mxu0 0.0
    %3007 = vmatprep.subr.mxu0 0.0
    %3008 = vmatpush1.msra.mxu0 0.0
    %3009 = vmatprep.subr.mxu0 0.0
    %3010 = vmatpush1.msra.mxu0 0.0
    %3011 = vmatprep.subr.mxu0 0.0
    %3012 = vmatpush1.msra.mxu0 0.0
    %3013 = vmatprep.subr.mxu0 0.0
    %3014 = vmatpush1.msra.mxu0 0.0
    %3015 = vmatprep.subr.mxu0 0.0
    %3016 = vmatpush1.msra.mxu0 0.0
    %3017 = vmatprep.subr.mxu0 0.0
    %3018 = vmatpush1.msra.mxu0 0.0
    %3019 = vmatprep.subr.mxu0 0.0
    %3020 = vmatpush1.msra.mxu0 0.0
    %3021 = vmatprep.subr.mxu0 0.0
    %3022 = vmatpush1.msra.mxu0 0.0
    %3023 = vmatprep.subr.mxu0 0.0
    %3024 = vmatpush1.msra.mxu0 0.0
    %3025 = vmatprep.subr.mxu0 0.0
    %3026 = vmatpush1.msra.mxu0 0.0
    %3027 = vmatprep.subr.mxu0 0.0
    %3028 = vmatpush1.msra.mxu0 0.0
    %3029 = vmatprep.subr.mxu0 0.0
    %3030 = vmatpush1.msra.mxu0 0.0
    %3031 = vmatprep.subr.mxu0 0.0
    %3032 = vmatpush1.msra.mxu0 0.0
    %3033 = vmatprep.subr.mxu0 0.0
    %3034 = vmatpush1.msra.mxu0 0.0
    %3035 = vmatprep.subr.mxu0 0.0
    %3036 = vmatpush1.msra.mxu0 0.0
    %3037 = vmatprep.subr.mxu0 0.0
    %3038 = vmatpush1.msra.mxu0 0.0
    %3039 = vmatprep.subr.mxu0 0.0
    %3040 = vmatpush1.msra.mxu0 0.0
    %3041 = vmatprep.subr.mxu0 0.0
    %3042 = vmatpush1.msra.mxu0 0.0
    %3043 = vmatprep.subr.mxu0 0.0
    %3044 = vmatpush1.msra.mxu0 0.0
    %3045 = vmatprep.subr.mxu0 0.0
    %3046 = vmatpush1.msra.mxu0 0.0
    %3047 = vmatprep.subr.mxu0 0.0
    %3048 = vmatpush1.msra.mxu0 0.0
    %3049 = vmatprep.subr.mxu0 0.0
    %3050 = vmatpush1.msra.mxu0 0.0
    %3051 = vmatprep.subr.mxu0 0.0
    %3052 = vmatpush1.msra.mxu0 0.0
    %3053 = vmatprep.mubr.f32.mxu0 0.0
    %v3054 = vand.u32 %v156, 4294901760
    %3055 = vmatmul.mubr.f32.gmra.mrb[0].mxu0 %v3054
    %v3056 = vpop.f32.mrb[0].mxu0
    %v3057 = vadd.f32 %v2985, %v3056
    %v3058 = vpop.f32.mrb[0].mxu0
    %3059 = vdwg.mxu0
    %v3060 = vmul.f32 %v2613, %v3057
    %v3061 = vadd.f32 %v2447, %v3060
    %v3063 = vcombine.high %v2603, %v2603
    %v3065 = vunpack.c.l.s4 1966171168
    %v3066 = vunpack.c.0.s8 %v3065
    %v3067 = vlaneseq
    %v3068 = vshrl.u32 %v3067, 7
    %v3069 = vsub.s32 %v3066, %v3068
    %v3070 = vrot.slane %v2603, %v3069
    %v3072 = vunpack.c.l.s4 1966171168
    %v3073 = vunpack.c.0.s8 %v3072
    %v3074 = vlaneseq
    %v3075 = vshrl.u32 %v3074, 7
    %v3076 = vsub.s32 %v3073, %v3075
    %v3077 = vrot.slane %v3063, %v3076
    %v3078 = vcombine.high %v3070, %v3070
    %v3079 = vcombine.high %v3077, %v3077
    %v3081 = vunpack.c.l.s4 1966171168
    %v3082 = vunpack.c.0.s8 %v3081
    %v3083 = vlaneseq
    %v3084 = vshrl.u32 %v3083, 7
    %v3085 = vsub.s32 %v3082, %v3084
    %v3086 = vrot.slane %v3070, %v3085
    %v3088 = vunpack.c.l.s4 1966171168
    %v3089 = vunpack.c.0.s8 %v3088
    %v3090 = vlaneseq
    %v3091 = vshrl.u32 %v3090, 7
    %v3092 = vsub.s32 %v3089, %v3091
    %v3093 = vrot.slane %v3077, %v3092
    %v3095 = vunpack.c.l.s4 1966171168
    %v3096 = vunpack.c.0.s8 %v3095
    %v3097 = vlaneseq
    %v3098 = vshrl.u32 %v3097, 7
    %v3099 = vsub.s32 %v3096, %v3098
    %v3100 = vrot.slane %v3078, %v3099
    %v3102 = vunpack.c.l.s4 1966171168
    %v3103 = vunpack.c.0.s8 %v3102
    %v3104 = vlaneseq
    %v3105 = vshrl.u32 %v3104, 7
    %v3106 = vsub.s32 %v3103, %v3105
    %v3107 = vrot.slane %v3079, %v3106
    %v3108 = vcombine.high %v3086, %v3086
    %v3109 = vcombine.high %v3093, %v3093
    %v3110 = vcombine.high %v3100, %v3100
    %v3111 = vcombine.high %v3107, %v3107
    %v3112 = vlaneseq
    %v3113 = vshrl.u32 %v3112, 7
    %v3114 = vsub.s32 0, %v3113
    %v3115 = vrot.slane %v3086, %v3114
    %v3116 = vlaneseq
    %v3117 = vshrl.u32 %v3116, 7
    %v3118 = vsub.s32 0, %v3117
    %v3119 = vrot.slane %v3100, %v3118
    %v3120 = vlaneseq
    %v3121 = vshrl.u32 %v3120, 7
    %v3122 = vsub.s32 0, %v3121
    %v3123 = vrot.slane %v3108, %v3122
    %v3124 = vlaneseq
    %v3125 = vshrl.u32 %v3124, 7
    %v3126 = vsub.s32 0, %v3125
    %v3127 = vrot.slane %v3110, %v3126
    %v3128 = vlaneseq
    %v3129 = vshrl.u32 %v3128, 7
    %v3130 = vsub.s32 0, %v3129
    %v3131 = vrot.slane %v3093, %v3130
    %v3132 = vlaneseq
    %v3133 = vshrl.u32 %v3132, 7
    %v3134 = vsub.s32 0, %v3133
    %v3135 = vrot.slane %v3107, %v3134
    %v3136 = vlaneseq
    %v3137 = vshrl.u32 %v3136, 7
    %v3138 = vsub.s32 0, %v3137
    %v3139 = vrot.slane %v3109, %v3138
    %v3140 = vlaneseq
    %v3141 = vshrl.u32 %v3140, 7
    %v3142 = vsub.s32 0, %v3141
    %v3143 = vrot.slane %v3111, %v3142
    %v3152 = vadd.f32 %v3115, %v78
    %v3153 = vadd.f32 %v3119, %v85
    %v3154 = vadd.f32 %v3123, %v92
    %v3155 = vadd.f32 %v3127, %v99
    %v3156 = vadd.f32 %v3131, %v106
    %v3157 = vadd.f32 %v3135, %v113
    %v3158 = vadd.f32 %v3139, %v120
    %v3159 = vadd.f32 %v3143, %v127
    %v3160 = vsel %vm154, %v3152, -inf
    %v3161 = vsel %vm154, %v3153, -inf
    %v3162 = vsel %vm154, %v3154, -inf
    %v3163 = vsel %vm154, %v3155, -inf
    %v3164 = vsel %vm154, %v3156, -inf
    %v3165 = vmax.f32 %v3160, %v3164
    %v3166 = vsel %vm154, %v3157, -inf
    %v3167 = vmax.f32 %v3161, %v3166
    %v3168 = vsel %vm154, %v3158, -inf
    %v3169 = vmax.f32 %v3162, %v3168
    %v3170 = vsel %vm154, %v3159, -inf
    %v3171 = vmax.f32 %v3163, %v3170
    %v3172 = vmax.f32 %v3165, %v3167
    %v3173 = vmax.f32 %v3169, %v3171
    %v3174 = vmax.f32 %v3172, %v3173
    %v3175 = vsub.f32 %v3152, %v3174
    %v3176 = vsub.f32 %v3153, %v3174
    %v3177 = vsub.f32 %v3154, %v3174
    %v3178 = vsub.f32 %v3155, %v3174
    %v3179 = vsub.f32 %v3156, %v3174
    %v3180 = vsub.f32 %v3157, %v3174
    %v3181 = vsub.f32 %v3158, %v3174
    %v3182 = vsub.f32 %v3159, %v3174
    %v3183 = vmul.f32 %v3175, 1.442695
    %v3184 = vpow.pop %v3183
    %v3185 = vmul.f32 %v3176, 1.442695
    %v3186 = vpow.pop %v3185
    %v3187 = vmul.f32 %v3177, 1.442695
    %v3188 = vpow.pop %v3187
    %v3189 = vmul.f32 %v3178, 1.442695
    %v3190 = vpow.pop %v3189
    %v3191 = vmul.f32 %v3179, 1.442695
    %v3192 = vpow.pop %v3191
    %v3193 = vmul.f32 %v3180, 1.442695
    %v3194 = vpow.pop %v3193
    %v3195 = vmul.f32 %v3181, 1.442695
    %v3196 = vpow.pop %v3195
    %v3197 = vmul.f32 %v3182, 1.442695
    %v3198 = vpow.pop %v3197
    %v3199 = vsel %vm154, %v3184, 0.0
    %v3200 = vsel %vm154, %v3186, 0.0
    %v3201 = vadd.f32 %v3199, %v3200
    %v3202 = vsel %vm154, %v3188, 0.0
    %v3203 = vadd.f32 %v3201, %v3202
    %v3204 = vsel %vm154, %v3190, 0.0
    %v3205 = vadd.f32 %v3203, %v3204
    %v3206 = vsel %vm154, %v3192, 0.0
    %v3207 = vadd.f32 %v3205, %v3206
    %v3208 = vsel %vm154, %v3194, 0.0
    %v3209 = vadd.f32 %v3207, %v3208
    %v3210 = vsel %vm154, %v3196, 0.0
    %v3211 = vadd.f32 %v3209, %v3210
    %v3212 = vsel %vm154, %v3198, 0.0
    %v3213 = vadd.f32 %v3211, %v3212
    %v3214 = vlog2.pop %v3213
    %v3215 = vmul.f32 %v3214, 0.6931472
    %v3216 = vadd.f32 %v3174, %v3215
    %v3217 = vadd.f32 %v3216, %v2605
    %s3218 = scalar_lea.vmem [#allocation2], 48
    %v3219 = vld [vmem:[%s3218] sm:$0xff]
    %v3220 = vld [vmem:[%s1 + $0x6] sm:$0x1]
    %v3221 = vlaneseq
    %v3222 = vshrl.u32 %v3221, 7
    %v3223 = vsub.s32 0, %v3222
    %v3224 = vrot.slane %v3220, %v3223
    %vm3225 = vcmp.eq.s32.totalorder %v3224, %v39
    %v3226 = vsel %vm3225, 1, 0
    %v3227 = vcvt.s32.f32 %v3226
    %3228 = vmatprep.subr.mxu0 0.0
    %v3229 = vand.u32 %v2613, 4294901760
    %3230 = vmatpush1.msra.mxu0 %v3229
    %3231 = vmatprep.subr.mxu0 0.0
    %3232 = vmatpush1.msra.mxu0 0.0
    %3233 = vmatprep.subr.mxu0 0.0
    %3234 = vmatpush1.msra.mxu0 0.0
    %3235 = vmatprep.subr.mxu0 0.0
    %3236 = vmatpush1.msra.mxu0 0.0
    %3237 = vmatprep.subr.mxu0 0.0
    %3238 = vmatpush1.msra.mxu0 0.0
    %3239 = vmatprep.subr.mxu0 0.0
    %3240 = vmatpush1.msra.mxu0 0.0
    %3241 = vmatprep.subr.mxu0 0.0
    %3242 = vmatpush1.msra.mxu0 0.0
    %3243 = vmatprep.subr.mxu0 0.0
    %3244 = vmatpush1.msra.mxu0 0.0
    %3245 = vmatprep.subr.mxu0 0.0
    %3246 = vmatpush1.msra.mxu0 0.0
    %3247 = vmatprep.subr.mxu0 0.0
    %3248 = vmatpush1.msra.mxu0 0.0
    %3249 = vmatprep.subr.mxu0 0.0
    %3250 = vmatpush1.msra.mxu0 0.0
    %3251 = vmatprep.subr.mxu0 0.0
    %3252 = vmatpush1.msra.mxu0 0.0
    %3253 = vmatprep.subr.mxu0 0.0
    %3254 = vmatpush1.msra.mxu0 0.0
    %3255 = vmatprep.subr.mxu0 0.0
    %3256 = vmatpush1.msra.mxu0 0.0
    %3257 = vmatprep.subr.mxu0 0.0
    %3258 = vmatpush1.msra.mxu0 0.0
    %3259 = vmatprep.subr.mxu0 0.0
    %3260 = vmatpush1.msra.mxu0 0.0
    %3261 = vmatprep.subr.mxu0 0.0
    %3262 = vmatpush1.msra.mxu0 0.0
    %3263 = vmatprep.subr.mxu0 0.0
    %3264 = vmatpush1.msra.mxu0 0.0
    %3265 = vmatprep.subr.mxu0 0.0
    %3266 = vmatpush1.msra.mxu0 0.0
    %3267 = vmatprep.subr.mxu0 0.0
    %3268 = vmatpush1.msra.mxu0 0.0
    %3269 = vmatprep.subr.mxu0 0.0
    %3270 = vmatpush1.msra.mxu0 0.0
    %3271 = vmatprep.subr.mxu0 0.0
    %3272 = vmatpush1.msra.mxu0 0.0
    %3273 = vmatprep.subr.mxu0 0.0
    %3274 = vmatpush1.msra.mxu0 0.0
    %3275 = vmatprep.subr.mxu0 0.0
    %3276 = vmatpush1.msra.mxu0 0.0
    %3277 = vmatprep.subr.mxu0 0.0
    %3278 = vmatpush1.msra.mxu0 0.0
    %3279 = vmatprep.subr.mxu0 0.0
    %3280 = vmatpush1.msra.mxu0 0.0
    %3281 = vmatprep.subr.mxu0 0.0
    %3282 = vmatpush1.msra.mxu0 0.0
    %3283 = vmatprep.subr.mxu0 0.0
    %3284 = vmatpush1.msra.mxu0 0.0
    %3285 = vmatprep.subr.mxu0 0.0
    %3286 = vmatpush1.msra.mxu0 0.0
    %3287 = vmatprep.subr.mxu0 0.0
    %3288 = vmatpush1.msra.mxu0 0.0
    %3289 = vmatprep.subr.mxu0 0.0
    %3290 = vmatpush1.msra.mxu0 0.0
    %3291 = vmatprep.subr.mxu0 0.0
    %3292 = vmatpush1.msra.mxu0 0.0
    %3293 = vmatprep.mubr.f32.mxu0 0.0
    %v3294 = vand.u32 %v156, 4294901760
    %v3295 = vsub.f32 %v156, %v3294
    %v3296 = vand.u32 %v3295, 4294901760
    %v3297 = vsub.f32 %v3295, %v3296
    %v3298 = vand.u32 %v3297, 4294901760
    %3299 = vmatmul.mubr.f32.gmra.mrb[0].mxu0 %v3298
    %v3300 = vpop.f32.mrb[0].mxu0
    %v3301 = vadd.f32 %v3219, %v3300
    %v3302 = vpop.f32.mrb[0].mxu0
    %3303 = vdwg.mxu0
    %3304 = vmatprep.subr.mxu0 0.0
    %v3305 = vand.u32 %v2613, 4294901760
    %v3306 = vsub.f32 %v2613, %v3305
    %v3307 = vand.u32 %v3306, 4294901760
    %v3308 = vsub.f32 %v3306, %v3307
    %v3309 = vand.u32 %v3308, 4294901760
    %3310 = vmatpush1.msra.mxu0 %v3309
    %3311 = vmatprep.subr.mxu0 0.0
    %3312 = vmatpush1.msra.mxu0 0.0
    %3313 = vmatprep.subr.mxu0 0.0
    %3314 = vmatpush1.msra.mxu0 0.0
    %3315 = vmatprep.subr.mxu0 0.0
    %3316 = vmatpush1.msra.mxu0 0.0
    %3317 = vmatprep.subr.mxu0 0.0
    %3318 = vmatpush1.msra.mxu0 0.0
    %3319 = vmatprep.subr.mxu0 0.0
    %3320 = vmatpush1.msra.mxu0 0.0
    %3321 = vmatprep.subr.mxu0 0.0
    %3322 = vmatpush1.msra.mxu0 0.0
    %3323 = vmatprep.subr.mxu0 0.0
    %3324 = vmatpush1.msra.mxu0 0.0
    %3325 = vmatprep.subr.mxu0 0.0
    %3326 = vmatpush1.msra.mxu0 0.0
    %3327 = vmatprep.subr.mxu0 0.0
    %3328 = vmatpush1.msra.mxu0 0.0
    %3329 = vmatprep.subr.mxu0 0.0
    %3330 = vmatpush1.msra.mxu0 0.0
    %3331 = vmatprep.subr.mxu0 0.0
    %3332 = vmatpush1.msra.mxu0 0.0
    %3333 = vmatprep.subr.mxu0 0.0
    %3334 = vmatpush1.msra.mxu0 0.0
    %3335 = vmatprep.subr.mxu0 0.0
    %3336 = vmatpush1.msra.mxu0 0.0
    %3337 = vmatprep.subr.mxu0 0.0
    %3338 = vmatpush1.msra.mxu0 0.0
    %3339 = vmatprep.subr.mxu0 0.0
    %3340 = vmatpush1.msra.mxu0 0.0
    %3341 = vmatprep.subr.mxu0 0.0
    %3342 = vmatpush1.msra.mxu0 0.0
    %3343 = vmatprep.subr.mxu0 0.0
    %3344 = vmatpush1.msra.mxu0 0.0
    %3345 = vmatprep.subr.mxu0 0.0
    %3346 = vmatpush1.msra.mxu0 0.0
    %3347 = vmatprep.subr.mxu0 0.0
    %3348 = vmatpush1.msra.mxu0 0.0
    %3349 = vmatprep.subr.mxu0 0.0
    %3350 = vmatpush1.msra.mxu0 0.0
    %3351 = vmatprep.subr.mxu0 0.0
    %3352 = vmatpush1.msra.mxu0 0.0
    %3353 = vmatprep.subr.mxu0 0.0
    %3354 = vmatpush1.msra.mxu0 0.0
    %3355 = vmatprep.subr.mxu0 0.0
    %3356 = vmatpush1.msra.mxu0 0.0
    %3357 = vmatprep.subr.mxu0 0.0
    %3358 = vmatpush1.msra.mxu0 0.0
    %3359 = vmatprep.subr.mxu0 0.0
    %3360 = vmatpush1.msra.mxu0 0.0
    %3361 = vmatprep.subr.mxu0 0.0
    %3362 = vmatpush1.msra.mxu0 0.0
    %3363 = vmatprep.subr.mxu0 0.0
    %3364 = vmatpush1.msra.mxu0 0.0
    %3365 = vmatprep.subr.mxu0 0.0
    %3366 = vmatpush1.msra.mxu0 0.0
    %3367 = vmatprep.subr.mxu0 0.0
    %3368 = vmatpush1.msra.mxu0 0.0
    %3369 = vmatprep.subr.mxu0 0.0
    %3370 = vmatpush1.msra.mxu0 0.0
    %3371 = vmatprep.subr.mxu0 0.0
    %3372 = vmatpush1.msra.mxu0 0.0
    %3373 = vmatprep.mubr.f32.mxu0 0.0
    %v3374 = vand.u32 %v156, 4294901760
    %3375 = vmatmul.mubr.f32.gmra.mrb[0].mxu0 %v3374
    %v3376 = vpop.f32.mrb[0].mxu0
    %v3377 = vadd.f32 %v3301, %v3376
    %v3378 = vpop.f32.mrb[0].mxu0
    %3379 = vdwg.mxu0
    %3380 = vmatprep.subr.mxu0 0.0
    %v3381 = vand.u32 %v2613, 4294901760
    %v3382 = vsub.f32 %v2613, %v3381
    %3383 = vmatpush1.msra.mxu0 %v3382
    %3384 = vmatprep.subr.mxu0 0.0
    %3385 = vmatpush1.msra.mxu0 0.0
    %3386 = vmatprep.subr.mxu0 0.0
    %3387 = vmatpush1.msra.mxu0 0.0
    %3388 = vmatprep.subr.mxu0 0.0
    %3389 = vmatpush1.msra.mxu0 0.0
    %3390 = vmatprep.subr.mxu0 0.0
    %3391 = vmatpush1.msra.mxu0 0.0
    %3392 = vmatprep.subr.mxu0 0.0
    %3393 = vmatpush1.msra.mxu0 0.0
    %3394 = vmatprep.subr.mxu0 0.0
    %3395 = vmatpush1.msra.mxu0 0.0
    %3396 = vmatprep.subr.mxu0 0.0
    %3397 = vmatpush1.msra.mxu0 0.0
    %3398 = vmatprep.subr.mxu0 0.0
    %3399 = vmatpush1.msra.mxu0 0.0
    %3400 = vmatprep.subr.mxu0 0.0
    %3401 = vmatpush1.msra.mxu0 0.0
    %3402 = vmatprep.subr.mxu0 0.0
    %3403 = vmatpush1.msra.mxu0 0.0
    %3404 = vmatprep.subr.mxu0 0.0
    %3405 = vmatpush1.msra.mxu0 0.0
    %3406 = vmatprep.subr.mxu0 0.0
    %3407 = vmatpush1.msra.mxu0 0.0
    %3408 = vmatprep.subr.mxu0 0.0
    %3409 = vmatpush1.msra.mxu0 0.0
    %3410 = vmatprep.subr.mxu0 0.0
    %3411 = vmatpush1.msra.mxu0 0.0
    %3412 = vmatprep.subr.mxu0 0.0
    %3413 = vmatpush1.msra.mxu0 0.0
    %3414 = vmatprep.subr.mxu0 0.0
    %3415 = vmatpush1.msra.mxu0 0.0
    %3416 = vmatprep.subr.mxu0 0.0
    %3417 = vmatpush1.msra.mxu0 0.0
    %3418 = vmatprep.subr.mxu0 0.0
    %3419 = vmatpush1.msra.mxu0 0.0
    %3420 = vmatprep.subr.mxu0 0.0
    %3421 = vmatpush1.msra.mxu0 0.0
    %3422 = vmatprep.subr.mxu0 0.0
    %3423 = vmatpush1.msra.mxu0 0.0
    %3424 = vmatprep.subr.mxu0 0.0
    %3425 = vmatpush1.msra.mxu0 0.0
    %3426 = vmatprep.subr.mxu0 0.0
    %3427 = vmatpush1.msra.mxu0 0.0
    %3428 = vmatprep.subr.mxu0 0.0
    %3429 = vmatpush1.msra.mxu0 0.0
    %3430 = vmatprep.subr.mxu0 0.0
    %3431 = vmatpush1.msra.mxu0 0.0
    %3432 = vmatprep.subr.mxu0 0.0
    %3433 = vmatpush1.msra.mxu0 0.0
    %3434 = vmatprep.subr.mxu0 0.0
    %3435 = vmatpush1.msra.mxu0 0.0
    %3436 = vmatprep.subr.mxu0 0.0
    %3437 = vmatpush1.msra.mxu0 0.0
    %3438 = vmatprep.subr.mxu0 0.0
    %3439 = vmatpush1.msra.mxu0 0.0
    %3440 = vmatprep.subr.mxu0 0.0
    %3441 = vmatpush1.msra.mxu0 0.0
    %3442 = vmatprep.subr.mxu0 0.0
    %3443 = vmatpush1.msra.mxu0 0.0
    %3444 = vmatprep.subr.mxu0 0.0
    %3445 = vmatpush1.msra.mxu0 0.0
    %3446 = vmatprep.mubr.f32.mxu0 0.0
    %v3447 = vand.u32 %v156, 4294901760
    %v3448 = vsub.f32 %v156, %v3447
    %3449 = vmatmul.mubr.f32.gmra.mrb[0].mxu0 %v3448
    %v3450 = vpop.f32.mrb[0].mxu0
    %v3451 = vadd.f32 %v3377, %v3450
    %v3452 = vpop.f32.mrb[0].mxu0
    %3453 = vdwg.mxu0
    %3454 = vmatprep.subr.mxu0 0.0
    %v3455 = vand.u32 %v2613, 4294901760
    %3456 = vmatpush1.msra.mxu0 %v3455
    %3457 = vmatprep.subr.mxu0 0.0
    %3458 = vmatpush1.msra.mxu0 0.0
    %3459 = vmatprep.subr.mxu0 0.0
    %3460 = vmatpush1.msra.mxu0 0.0
    %3461 = vmatprep.subr.mxu0 0.0
    %3462 = vmatpush1.msra.mxu0 0.0
    %3463 = vmatprep.subr.mxu0 0.0
    %3464 = vmatpush1.msra.mxu0 0.0
    %3465 = vmatprep.subr.mxu0 0.0
    %3466 = vmatpush1.msra.mxu0 0.0
    %3467 = vmatprep.subr.mxu0 0.0
    %3468 = vmatpush1.msra.mxu0 0.0
    %3469 = vmatprep.subr.mxu0 0.0
    %3470 = vmatpush1.msra.mxu0 0.0
    %3471 = vmatprep.subr.mxu0 0.0
    %3472 = vmatpush1.msra.mxu0 0.0
    %3473 = vmatprep.subr.mxu0 0.0
    %3474 = vmatpush1.msra.mxu0 0.0
    %3475 = vmatprep.subr.mxu0 0.0
    %3476 = vmatpush1.msra.mxu0 0.0
    %3477 = vmatprep.subr.mxu0 0.0
    %3478 = vmatpush1.msra.mxu0 0.0
    %3479 = vmatprep.subr.mxu0 0.0
    %3480 = vmatpush1.msra.mxu0 0.0
    %3481 = vmatprep.subr.mxu0 0.0
    %3482 = vmatpush1.msra.mxu0 0.0
    %3483 = vmatprep.subr.mxu0 0.0
    %3484 = vmatpush1.msra.mxu0 0.0
    %3485 = vmatprep.subr.mxu0 0.0
    %3486 = vmatpush1.msra.mxu0 0.0
    %3487 = vmatprep.subr.mxu0 0.0
    %3488 = vmatpush1.msra.mxu0 0.0
    %3489 = vmatprep.subr.mxu0 0.0
    %3490 = vmatpush1.msra.mxu0 0.0
    %3491 = vmatprep.subr.mxu0 0.0
    %3492 = vmatpush1.msra.mxu0 0.0
    %3493 = vmatprep.subr.mxu0 0.0
    %3494 = vmatpush1.msra.mxu0 0.0
    %3495 = vmatprep.subr.mxu0 0.0
    %3496 = vmatpush1.msra.mxu0 0.0
    %3497 = vmatprep.subr.mxu0 0.0
    %3498 = vmatpush1.msra.mxu0 0.0
    %3499 = vmatprep.subr.mxu0 0.0
    %3500 = vmatpush1.msra.mxu0 0.0
    %3501 = vmatprep.subr.mxu0 0.0
    %3502 = vmatpush1.msra.mxu0 0.0
    %3503 = vmatprep.subr.mxu0 0.0
    %3504 = vmatpush1.msra.mxu0 0.0
    %3505 = vmatprep.subr.mxu0 0.0
    %3506 = vmatpush1.msra.mxu0 0.0
    %3507 = vmatprep.subr.mxu0 0.0
    %3508 = vmatpush1.msra.mxu0 0.0
    %3509 = vmatprep.subr.mxu0 0.0
    %3510 = vmatpush1.msra.mxu0 0.0
    %3511 = vmatprep.subr.mxu0 0.0
    %3512 = vmatpush1.msra.mxu0 0.0
    %3513 = vmatprep.subr.mxu0 0.0
    %3514 = vmatpush1.msra.mxu0 0.0
    %3515 = vmatprep.subr.mxu0 0.0
    %3516 = vmatpush1.msra.mxu0 0.0
    %3517 = vmatprep.subr.mxu0 0.0
    %3518 = vmatpush1.msra.mxu0 0.0
    %3519 = vmatprep.mubr.f32.mxu0 0.0
    %v3520 = vand.u32 %v156, 4294901760
    %v3521 = vsub.f32 %v156, %v3520
    %v3522 = vand.u32 %v3521, 4294901760
    %3523 = vmatmul.mubr.f32.gmra.mrb[0].mxu0 %v3522
    %v3524 = vpop.f32.mrb[0].mxu0
    %v3525 = vadd.f32 %v3451, %v3524
    %v3526 = vpop.f32.mrb[0].mxu0
    %3527 = vdwg.mxu0
    %3528 = vmatprep.subr.mxu0 0.0
    %v3529 = vand.u32 %v2613, 4294901760
    %v3530 = vsub.f32 %v2613, %v3529
    %v3531 = vand.u32 %v3530, 4294901760
    %3532 = vmatpush1.msra.mxu0 %v3531
    %3533 = vmatprep.subr.mxu0 0.0
    %3534 = vmatpush1.msra.mxu0 0.0
    %3535 = vmatprep.subr.mxu0 0.0
    %3536 = vmatpush1.msra.mxu0 0.0
    %3537 = vmatprep.subr.mxu0 0.0
    %3538 = vmatpush1.msra.mxu0 0.0
    %3539 = vmatprep.subr.mxu0 0.0
    %3540 = vmatpush1.msra.mxu0 0.0
    %3541 = vmatprep.subr.mxu0 0.0
    %3542 = vmatpush1.msra.mxu0 0.0
    %3543 = vmatprep.subr.mxu0 0.0
    %3544 = vmatpush1.msra.mxu0 0.0
    %3545 = vmatprep.subr.mxu0 0.0
    %3546 = vmatpush1.msra.mxu0 0.0
    %3547 = vmatprep.subr.mxu0 0.0
    %3548 = vmatpush1.msra.mxu0 0.0
    %3549 = vmatprep.subr.mxu0 0.0
    %3550 = vmatpush1.msra.mxu0 0.0
    %3551 = vmatprep.subr.mxu0 0.0
    %3552 = vmatpush1.msra.mxu0 0.0
    %3553 = vmatprep.subr.mxu0 0.0
    %3554 = vmatpush1.msra.mxu0 0.0
    %3555 = vmatprep.subr.mxu0 0.0
    %3556 = vmatpush1.msra.mxu0 0.0
    %3557 = vmatprep.subr.mxu0 0.0
    %3558 = vmatpush1.msra.mxu0 0.0
    %3559 = vmatprep.subr.mxu0 0.0
    %3560 = vmatpush1.msra.mxu0 0.0
    %3561 = vmatprep.subr.mxu0 0.0
    %3562 = vmatpush1.msra.mxu0 0.0
    %3563 = vmatprep.subr.mxu0 0.0
    %3564 = vmatpush1.msra.mxu0 0.0
    %3565 = vmatprep.subr.mxu0 0.0
    %3566 = vmatpush1.msra.mxu0 0.0
    %3567 = vmatprep.subr.mxu0 0.0
    %3568 = vmatpush1.msra.mxu0 0.0
    %3569 = vmatprep.subr.mxu0 0.0
    %3570 = vmatpush1.msra.mxu0 0.0
    %3571 = vmatprep.subr.mxu0 0.0
    %3572 = vmatpush1.msra.mxu0 0.0
    %3573 = vmatprep.subr.mxu0 0.0
    %3574 = vmatpush1.msra.mxu0 0.0
    %3575 = vmatprep.subr.mxu0 0.0
    %3576 = vmatpush1.msra.mxu0 0.0
    %3577 = vmatprep.subr.mxu0 0.0
    %3578 = vmatpush1.msra.mxu0 0.0
    %3579 = vmatprep.subr.mxu0 0.0
    %3580 = vmatpush1.msra.mxu0 0.0
    %3581 = vmatprep.subr.mxu0 0.0
    %3582 = vmatpush1.msra.mxu0 0.0
    %3583 = vmatprep.subr.mxu0 0.0
    %3584 = vmatpush1.msra.mxu0 0.0
    %3585 = vmatprep.subr.mxu0 0.0
    %3586 = vmatpush1.msra.mxu0 0.0
    %3587 = vmatprep.subr.mxu0 0.0
    %3588 = vmatpush1.msra.mxu0 0.0
    %3589 = vmatprep.subr.mxu0 0.0
    %3590 = vmatpush1.msra.mxu0 0.0
    %3591 = vmatprep.subr.mxu0 0.0
    %3592 = vmatpush1.msra.mxu0 0.0
    %3593 = vmatprep.subr.mxu0 0.0
    %3594 = vmatpush1.msra.mxu0 0.0
    %3595 = vmatprep.mubr.f32.mxu0 0.0
    %v3596 = vand.u32 %v156, 4294901760
    %3597 = vmatmul.mubr.f32.gmra.mrb[0].mxu0 %v3596
    %v3598 = vpop.f32.mrb[0].mxu0
    %v3599 = vadd.f32 %v3525, %v3598
    %v3600 = vpop.f32.mrb[0].mxu0
    %3601 = vdwg.mxu0
    %3602 = vmatprep.subr.mxu0 0.0
    %v3603 = vand.u32 %v2613, 4294901760
    %3604 = vmatpush1.msra.mxu0 %v3603
    %3605 = vmatprep.subr.mxu0 0.0
    %3606 = vmatpush1.msra.mxu0 0.0
    %3607 = vmatprep.subr.mxu0 0.0
    %3608 = vmatpush1.msra.mxu0 0.0
    %3609 = vmatprep.subr.mxu0 0.0
    %3610 = vmatpush1.msra.mxu0 0.0
    %3611 = vmatprep.subr.mxu0 0.0
    %3612 = vmatpush1.msra.mxu0 0.0
    %3613 = vmatprep.subr.mxu0 0.0
    %3614 = vmatpush1.msra.mxu0 0.0
    %3615 = vmatprep.subr.mxu0 0.0
    %3616 = vmatpush1.msra.mxu0 0.0
    %3617 = vmatprep.subr.mxu0 0.0
    %3618 = vmatpush1.msra.mxu0 0.0
    %3619 = vmatprep.subr.mxu0 0.0
    %3620 = vmatpush1.msra.mxu0 0.0
    %3621 = vmatprep.subr.mxu0 0.0
    %3622 = vmatpush1.msra.mxu0 0.0
    %3623 = vmatprep.subr.mxu0 0.0
    %3624 = vmatpush1.msra.mxu0 0.0
    %3625 = vmatprep.subr.mxu0 0.0
    %3626 = vmatpush1.msra.mxu0 0.0
    %3627 = vmatprep.subr.mxu0 0.0
    %3628 = vmatpush1.msra.mxu0 0.0
    %3629 = vmatprep.subr.mxu0 0.0
    %3630 = vmatpush1.msra.mxu0 0.0
    %3631 = vmatprep.subr.mxu0 0.0
    %3632 = vmatpush1.msra.mxu0 0.0
    %3633 = vmatprep.subr.mxu0 0.0
    %3634 = vmatpush1.msra.mxu0 0.0
    %3635 = vmatprep.subr.mxu0 0.0
    %3636 = vmatpush1.msra.mxu0 0.0
    %3637 = vmatprep.subr.mxu0 0.0
    %3638 = vmatpush1.msra.mxu0 0.0
    %3639 = vmatprep.subr.mxu0 0.0
    %3640 = vmatpush1.msra.mxu0 0.0
    %3641 = vmatprep.subr.mxu0 0.0
    %3642 = vmatpush1.msra.mxu0 0.0
    %3643 = vmatprep.subr.mxu0 0.0
    %3644 = vmatpush1.msra.mxu0 0.0
    %3645 = vmatprep.subr.mxu0 0.0
    %3646 = vmatpush1.msra.mxu0 0.0
    %3647 = vmatprep.subr.mxu0 0.0
    %3648 = vmatpush1.msra.mxu0 0.0
    %3649 = vmatprep.subr.mxu0 0.0
    %3650 = vmatpush1.msra.mxu0 0.0
    %3651 = vmatprep.subr.mxu0 0.0
    %3652 = vmatpush1.msra.mxu0 0.0
    %3653 = vmatprep.subr.mxu0 0.0
    %3654 = vmatpush1.msra.mxu0 0.0
    %3655 = vmatprep.subr.mxu0 0.0
    %3656 = vmatpush1.msra.mxu0 0.0
    %3657 = vmatprep.subr.mxu0 0.0
    %3658 = vmatpush1.msra.mxu0 0.0
    %3659 = vmatprep.subr.mxu0 0.0
    %3660 = vmatpush1.msra.mxu0 0.0
    %3661 = vmatprep.subr.mxu0 0.0
    %3662 = vmatpush1.msra.mxu0 0.0
    %3663 = vmatprep.subr.mxu0 0.0
    %3664 = vmatpush1.msra.mxu0 0.0
    %3665 = vmatprep.subr.mxu0 0.0
    %3666 = vmatpush1.msra.mxu0 0.0
    %3667 = vmatprep.mubr.f32.mxu0 0.0
    %v3668 = vand.u32 %v156, 4294901760
    %3669 = vmatmul.mubr.f32.gmra.mrb[0].mxu0 %v3668
    %v3670 = vpop.f32.mrb[0].mxu0
    %v3671 = vadd.f32 %v3599, %v3670
    %v3672 = vpop.f32.mrb[0].mxu0
    %3673 = vdwg.mxu0
    %v3674 = vmul.f32 %v3227, %v3671
    %v3675 = vadd.f32 %v3061, %v3674
    %v3677 = vcombine.high %v3217, %v3217
    %v3679 = vunpack.c.l.s4 1966171168
    %v3680 = vunpack.c.0.s8 %v3679
    %v3681 = vlaneseq
    %v3682 = vshrl.u32 %v3681, 7
    %v3683 = vsub.s32 %v3680, %v3682
    %v3684 = vrot.slane %v3217, %v3683
    %v3686 = vunpack.c.l.s4 1966171168
    %v3687 = vunpack.c.0.s8 %v3686
    %v3688 = vlaneseq
    %v3689 = vshrl.u32 %v3688, 7
    %v3690 = vsub.s32 %v3687, %v3689
    %v3691 = vrot.slane %v3677, %v3690
    %v3692 = vcombine.high %v3684, %v3684
    %v3693 = vcombine.high %v3691, %v3691
    %v3695 = vunpack.c.l.s4 1966171168
    %v3696 = vunpack.c.0.s8 %v3695
    %v3697 = vlaneseq
    %v3698 = vshrl.u32 %v3697, 7
    %v3699 = vsub.s32 %v3696, %v3698
    %v3700 = vrot.slane %v3684, %v3699
    %v3702 = vunpack.c.l.s4 1966171168
    %v3703 = vunpack.c.0.s8 %v3702
    %v3704 = vlaneseq
    %v3705 = vshrl.u32 %v3704, 7
    %v3706 = vsub.s32 %v3703, %v3705
    %v3707 = vrot.slane %v3691, %v3706
    %v3709 = vunpack.c.l.s4 1966171168
    %v3710 = vunpack.c.0.s8 %v3709
    %v3711 = vlaneseq
    %v3712 = vshrl.u32 %v3711, 7
    %v3713 = vsub.s32 %v3710, %v3712
    %v3714 = vrot.slane %v3692, %v3713
    %v3716 = vunpack.c.l.s4 1966171168
    %v3717 = vunpack.c.0.s8 %v3716
    %v3718 = vlaneseq
    %v3719 = vshrl.u32 %v3718, 7
    %v3720 = vsub.s32 %v3717, %v3719
    %v3721 = vrot.slane %v3693, %v3720
    %v3722 = vcombine.high %v3700, %v3700
    %v3723 = vcombine.high %v3707, %v3707
    %v3724 = vcombine.high %v3714, %v3714
    %v3725 = vcombine.high %v3721, %v3721
    %v3726 = vlaneseq
    %v3727 = vshrl.u32 %v3726, 7
    %v3728 = vsub.s32 0, %v3727
    %v3729 = vrot.slane %v3700, %v3728
    %v3730 = vlaneseq
    %v3731 = vshrl.u32 %v3730, 7
    %v3732 = vsub.s32 0, %v3731
    %v3733 = vrot.slane %v3714, %v3732
    %v3734 = vlaneseq
    %v3735 = vshrl.u32 %v3734, 7
    %v3736 = vsub.s32 0, %v3735
    %v3737 = vrot.slane %v3722, %v3736
    %v3738 = vlaneseq
    %v3739 = vshrl.u32 %v3738, 7
    %v3740 = vsub.s32 0, %v3739
    %v3741 = vrot.slane %v3724, %v3740
    %v3742 = vlaneseq
    %v3743 = vshrl.u32 %v3742, 7
    %v3744 = vsub.s32 0, %v3743
    %v3745 = vrot.slane %v3707, %v3744
    %v3746 = vlaneseq
    %v3747 = vshrl.u32 %v3746, 7
    %v3748 = vsub.s32 0, %v3747
    %v3749 = vrot.slane %v3721, %v3748
    %v3750 = vlaneseq
    %v3751 = vshrl.u32 %v3750, 7
    %v3752 = vsub.s32 0, %v3751
    %v3753 = vrot.slane %v3723, %v3752
    %v3754 = vlaneseq
    %v3755 = vshrl.u32 %v3754, 7
    %v3756 = vsub.s32 0, %v3755
    %v3757 = vrot.slane %v3725, %v3756
    %v3766 = vadd.f32 %v3729, %v78
    %v3767 = vadd.f32 %v3733, %v85
    %v3768 = vadd.f32 %v3737, %v92
    %v3769 = vadd.f32 %v3741, %v99
    %v3770 = vadd.f32 %v3745, %v106
    %v3771 = vadd.f32 %v3749, %v113
    %v3772 = vadd.f32 %v3753, %v120
    %v3773 = vadd.f32 %v3757, %v127
    %v3774 = vsel %vm154, %v3766, -inf
    %v3775 = vsel %vm154, %v3767, -inf
    %v3776 = vsel %vm154, %v3768, -inf
    %v3777 = vsel %vm154, %v3769, -inf
    %v3778 = vsel %vm154, %v3770, -inf
    %v3779 = vmax.f32 %v3774, %v3778
    %v3780 = vsel %vm154, %v3771, -inf
    %v3781 = vmax.f32 %v3775, %v3780
    %v3782 = vsel %vm154, %v3772, -inf
    %v3783 = vmax.f32 %v3776, %v3782
    %v3784 = vsel %vm154, %v3773, -inf
    %v3785 = vmax.f32 %v3777, %v3784
    %v3786 = vmax.f32 %v3779, %v3781
    %v3787 = vmax.f32 %v3783, %v3785
    %v3788 = vmax.f32 %v3786, %v3787
    %v3789 = vsub.f32 %v3766, %v3788
    %v3790 = vsub.f32 %v3767, %v3788
    %v3791 = vsub.f32 %v3768, %v3788
    %v3792 = vsub.f32 %v3769, %v3788
    %v3793 = vsub.f32 %v3770, %v3788
    %v3794 = vsub.f32 %v3771, %v3788
    %v3795 = vsub.f32 %v3772, %v3788
    %v3796 = vsub.f32 %v3773, %v3788
    %v3797 = vmul.f32 %v3789, 1.442695
    %v3798 = vpow.pop %v3797
    %v3799 = vmul.f32 %v3790, 1.442695
    %v3800 = vpow.pop %v3799
    %v3801 = vmul.f32 %v3791, 1.442695
    %v3802 = vpow.pop %v3801
    %v3803 = vmul.f32 %v3792, 1.442695
    %v3804 = vpow.pop %v3803
    %v3805 = vmul.f32 %v3793, 1.442695
    %v3806 = vpow.pop %v3805
    %v3807 = vmul.f32 %v3794, 1.442695
    %v3808 = vpow.pop %v3807
    %v3809 = vmul.f32 %v3795, 1.442695
    %v3810 = vpow.pop %v3809
    %v3811 = vmul.f32 %v3796, 1.442695
    %v3812 = vpow.pop %v3811
    %v3813 = vsel %vm154, %v3798, 0.0
    %v3814 = vsel %vm154, %v3800, 0.0
    %v3815 = vadd.f32 %v3813, %v3814
    %v3816 = vsel %vm154, %v3802, 0.0
    %v3817 = vadd.f32 %v3815, %v3816
    %v3818 = vsel %vm154, %v3804, 0.0
    %v3819 = vadd.f32 %v3817, %v3818
    %v3820 = vsel %vm154, %v3806, 0.0
    %v3821 = vadd.f32 %v3819, %v3820
    %v3822 = vsel %vm154, %v3808, 0.0
    %v3823 = vadd.f32 %v3821, %v3822
    %v3824 = vsel %vm154, %v3810, 0.0
    %v3825 = vadd.f32 %v3823, %v3824
    %v3826 = vsel %vm154, %v3812, 0.0
    %v3827 = vadd.f32 %v3825, %v3826
    %v3828 = vlog2.pop %v3827
    %v3829 = vmul.f32 %v3828, 0.6931472
    %v3830 = vadd.f32 %v3788, %v3829
    %v3831 = vadd.f32 %v3830, %v3219
    %s3832 = scalar_lea.vmem [#allocation2], 56
    %v3833 = vld [vmem:[%s3832] sm:$0xff]
    %v3834 = vld [vmem:[%s1 + $0x7] sm:$0x1]
    %v3835 = vlaneseq
    %v3836 = vshrl.u32 %v3835, 7
    %v3837 = vsub.s32 0, %v3836
    %v3838 = vrot.slane %v3834, %v3837
    %vm3839 = vcmp.eq.s32.totalorder %v3838, %v39
    %v3840 = vsel %vm3839, 1, 0
    %v3841 = vcvt.s32.f32 %v3840
    %3842 = vmatprep.subr.mxu0 0.0
    %v3843 = vand.u32 %v3227, 4294901760
    %3844 = vmatpush1.msra.mxu0 %v3843
    %3845 = vmatprep.subr.mxu0 0.0
    %3846 = vmatpush1.msra.mxu0 0.0
    %3847 = vmatprep.subr.mxu0 0.0
    %3848 = vmatpush1.msra.mxu0 0.0
    %3849 = vmatprep.subr.mxu0 0.0
    %3850 = vmatpush1.msra.mxu0 0.0
    %3851 = vmatprep.subr.mxu0 0.0
    %3852 = vmatpush1.msra.mxu0 0.0
    %3853 = vmatprep.subr.mxu0 0.0
    %3854 = vmatpush1.msra.mxu0 0.0
    %3855 = vmatprep.subr.mxu0 0.0
    %3856 = vmatpush1.msra.mxu0 0.0
    %3857 = vmatprep.subr.mxu0 0.0
    %3858 = vmatpush1.msra.mxu0 0.0
    %3859 = vmatprep.subr.mxu0 0.0
    %3860 = vmatpush1.msra.mxu0 0.0
    %3861 = vmatprep.subr.mxu0 0.0
    %3862 = vmatpush1.msra.mxu0 0.0
    %3863 = vmatprep.subr.mxu0 0.0
    %3864 = vmatpush1.msra.mxu0 0.0
    %3865 = vmatprep.subr.mxu0 0.0
    %3866 = vmatpush1.msra.mxu0 0.0
    %3867 = vmatprep.subr.mxu0 0.0
    %3868 = vmatpush1.msra.mxu0 0.0
    %3869 = vmatprep.subr.mxu0 0.0
    %3870 = vmatpush1.msra.mxu0 0.0
    %3871 = vmatprep.subr.mxu0 0.0
    %3872 = vmatpush1.msra.mxu0 0.0
    %3873 = vmatprep.subr.mxu0 0.0
    %3874 = vmatpush1.msra.mxu0 0.0
    %3875 = vmatprep.subr.mxu0 0.0
    %3876 = vmatpush1.msra.mxu0 0.0
    %3877 = vmatprep.subr.mxu0 0.0
    %3878 = vmatpush1.msra.mxu0 0.0
    %3879 = vmatprep.subr.mxu0 0.0
    %3880 = vmatpush1.msra.mxu0 0.0
    %3881 = vmatprep.subr.mxu0 0.0
    %3882 = vmatpush1.msra.mxu0 0.0
    %3883 = vmatprep.subr.mxu0 0.0
    %3884 = vmatpush1.msra.mxu0 0.0
    %3885 = vmatprep.subr.mxu0 0.0
    %3886 = vmatpush1.msra.mxu0 0.0
    %3887 = vmatprep.subr.mxu0 0.0
    %3888 = vmatpush1.msra.mxu0 0.0
    %3889 = vmatprep.subr.mxu0 0.0
    %3890 = vmatpush1.msra.mxu0 0.0
    %3891 = vmatprep.subr.mxu0 0.0
    %3892 = vmatpush1.msra.mxu0 0.0
    %3893 = vmatprep.subr.mxu0 0.0
    %3894 = vmatpush1.msra.mxu0 0.0
    %3895 = vmatprep.subr.mxu0 0.0
    %3896 = vmatpush1.msra.mxu0 0.0
    %3897 = vmatprep.subr.mxu0 0.0
    %3898 = vmatpush1.msra.mxu0 0.0
    %3899 = vmatprep.subr.mxu0 0.0
    %3900 = vmatpush1.msra.mxu0 0.0
    %3901 = vmatprep.subr.mxu0 0.0
    %3902 = vmatpush1.msra.mxu0 0.0
    %3903 = vmatprep.subr.mxu0 0.0
    %3904 = vmatpush1.msra.mxu0 0.0
    %3905 = vmatprep.subr.mxu0 0.0
    %3906 = vmatpush1.msra.mxu0 0.0
    %3907 = vmatprep.mubr.f32.mxu0 0.0
    %v3908 = vand.u32 %v156, 4294901760
    %v3909 = vsub.f32 %v156, %v3908
    %v3910 = vand.u32 %v3909, 4294901760
    %v3911 = vsub.f32 %v3909, %v3910
    %v3912 = vand.u32 %v3911, 4294901760
    %3913 = vmatmul.mubr.f32.gmra.mrb[0].mxu0 %v3912
    %v3914 = vpop.f32.mrb[0].mxu0
    %v3915 = vadd.f32 %v3833, %v3914
    %v3916 = vpop.f32.mrb[0].mxu0
    %3917 = vdwg.mxu0
    %3918 = vmatprep.subr.mxu0 0.0
    %v3919 = vand.u32 %v3227, 4294901760
    %v3920 = vsub.f32 %v3227, %v3919
    %v3921 = vand.u32 %v3920, 4294901760
    %v3922 = vsub.f32 %v3920, %v3921
    %v3923 = vand.u32 %v3922, 4294901760
    %3924 = vmatpush1.msra.mxu0 %v3923
    %3925 = vmatprep.subr.mxu0 0.0
    %3926 = vmatpush1.msra.mxu0 0.0
    %3927 = vmatprep.subr.mxu0 0.0
    %3928 = vmatpush1.msra.mxu0 0.0
    %3929 = vmatprep.subr.mxu0 0.0
    %3930 = vmatpush1.msra.mxu0 0.0
    %3931 = vmatprep.subr.mxu0 0.0
    %3932 = vmatpush1.msra.mxu0 0.0
    %3933 = vmatprep.subr.mxu0 0.0
    %3934 = vmatpush1.msra.mxu0 0.0
    %3935 = vmatprep.subr.mxu0 0.0
    %3936 = vmatpush1.msra.mxu0 0.0
    %3937 = vmatprep.subr.mxu0 0.0
    %3938 = vmatpush1.msra.mxu0 0.0
    %3939 = vmatprep.subr.mxu0 0.0
    %3940 = vmatpush1.msra.mxu0 0.0
    %3941 = vmatprep.subr.mxu0 0.0
    %3942 = vmatpush1.msra.mxu0 0.0
    %3943 = vmatprep.subr.mxu0 0.0
    %3944 = vmatpush1.msra.mxu0 0.0
    %3945 = vmatprep.subr.mxu0 0.0
    %3946 = vmatpush1.msra.mxu0 0.0
    %3947 = vmatprep.subr.mxu0 0.0
    %3948 = vmatpush1.msra.mxu0 0.0
    %3949 = vmatprep.subr.mxu0 0.0
    %3950 = vmatpush1.msra.mxu0 0.0
    %3951 = vmatprep.subr.mxu0 0.0
    %3952 = vmatpush1.msra.mxu0 0.0
    %3953 = vmatprep.subr.mxu0 0.0
    %3954 = vmatpush1.msra.mxu0 0.0
    %3955 = vmatprep.subr.mxu0 0.0
    %3956 = vmatpush1.msra.mxu0 0.0
    %3957 = vmatprep.subr.mxu0 0.0
    %3958 = vmatpush1.msra.mxu0 0.0
    %3959 = vmatprep.subr.mxu0 0.0
    %3960 = vmatpush1.msra.mxu0 0.0
    %3961 = vmatprep.subr.mxu0 0.0
    %3962 = vmatpush1.msra.mxu0 0.0
    %3963 = vmatprep.subr.mxu0 0.0
    %3964 = vmatpush1.msra.mxu0 0.0
    %3965 = vmatprep.subr.mxu0 0.0
    %3966 = vmatpush1.msra.mxu0 0.0
    %3967 = vmatprep.subr.mxu0 0.0
    %3968 = vmatpush1.msra.mxu0 0.0
    %3969 = vmatprep.subr.mxu0 0.0
    %3970 = vmatpush1.msra.mxu0 0.0
    %3971 = vmatprep.subr.mxu0 0.0
    %3972 = vmatpush1.msra.mxu0 0.0
    %3973 = vmatprep.subr.mxu0 0.0
    %3974 = vmatpush1.msra.mxu0 0.0
    %3975 = vmatprep.subr.mxu0 0.0
    %3976 = vmatpush1.msra.mxu0 0.0
    %3977 = vmatprep.subr.mxu0 0.0
    %3978 = vmatpush1.msra.mxu0 0.0
    %3979 = vmatprep.subr.mxu0 0.0
    %3980 = vmatpush1.msra.mxu0 0.0
    %3981 = vmatprep.subr.mxu0 0.0
    %3982 = vmatpush1.msra.mxu0 0.0
    %3983 = vmatprep.subr.mxu0 0.0
    %3984 = vmatpush1.msra.mxu0 0.0
    %3985 = vmatprep.subr.mxu0 0.0
    %3986 = vmatpush1.msra.mxu0 0.0
    %3987 = vmatprep.mubr.f32.mxu0 0.0
    %v3988 = vand.u32 %v156, 4294901760
    %3989 = vmatmul.mubr.f32.gmra.mrb[0].mxu0 %v3988
    %v3990 = vpop.f32.mrb[0].mxu0
    %v3991 = vadd.f32 %v3915, %v3990
    %v3992 = vpop.f32.mrb[0].mxu0
    %3993 = vdwg.mxu0
    %3994 = vmatprep.subr.mxu0 0.0
    %v3995 = vand.u32 %v3227, 4294901760
    %v3996 = vsub.f32 %v3227, %v3995
    %3997 = vmatpush1.msra.mxu0 %v3996
    %3998 = vmatprep.subr.mxu0 0.0
    %3999 = vmatpush1.msra.mxu0 0.0
    %4000 = vmatprep.subr.mxu0 0.0
    %4001 = vmatpush1.msra.mxu0 0.0
    %4002 = vmatprep.subr.mxu0 0.0
    %4003 = vmatpush1.msra.mxu0 0.0
    %4004 = vmatprep.subr.mxu0 0.0
    %4005 = vmatpush1.msra.mxu0 0.0
    %4006 = vmatprep.subr.mxu0 0.0
    %4007 = vmatpush1.msra.mxu0 0.0
    %4008 = vmatprep.subr.mxu0 0.0
    %4009 = vmatpush1.msra.mxu0 0.0
    %4010 = vmatprep.subr.mxu0 0.0
    %4011 = vmatpush1.msra.mxu0 0.0
    %4012 = vmatprep.subr.mxu0 0.0
    %4013 = vmatpush1.msra.mxu0 0.0
    %4014 = vmatprep.subr.mxu0 0.0
    %4015 = vmatpush1.msra.mxu0 0.0
    %4016 = vmatprep.subr.mxu0 0.0
    %4017 = vmatpush1.msra.mxu0 0.0
    %4018 = vmatprep.subr.mxu0 0.0
    %4019 = vmatpush1.msra.mxu0 0.0
    %4020 = vmatprep.subr.mxu0 0.0
    %4021 = vmatpush1.msra.mxu0 0.0
    %4022 = vmatprep.subr.mxu0 0.0
    %4023 = vmatpush1.msra.mxu0 0.0
    %4024 = vmatprep.subr.mxu0 0.0
    %4025 = vmatpush1.msra.mxu0 0.0
    %4026 = vmatprep.subr.mxu0 0.0
    %4027 = vmatpush1.msra.mxu0 0.0
    %4028 = vmatprep.subr.mxu0 0.0
    %4029 = vmatpush1.msra.mxu0 0.0
    %4030 = vmatprep.subr.mxu0 0.0
    %4031 = vmatpush1.msra.mxu0 0.0
    %4032 = vmatprep.subr.mxu0 0.0
    %4033 = vmatpush1.msra.mxu0 0.0
    %4034 = vmatprep.subr.mxu0 0.0
    %4035 = vmatpush1.msra.mxu0 0.0
    %4036 = vmatprep.subr.mxu0 0.0
    %4037 = vmatpush1.msra.mxu0 0.0
    %4038 = vmatprep.subr.mxu0 0.0
    %4039 = vmatpush1.msra.mxu0 0.0
    %4040 = vmatprep.subr.mxu0 0.0
    %4041 = vmatpush1.msra.mxu0 0.0
    %4042 = vmatprep.subr.mxu0 0.0
    %4043 = vmatpush1.msra.mxu0 0.0
    %4044 = vmatprep.subr.mxu0 0.0
    %4045 = vmatpush1.msra.mxu0 0.0
    %4046 = vmatprep.subr.mxu0 0.0
    %4047 = vmatpush1.msra.mxu0 0.0
    %4048 = vmatprep.subr.mxu0 0.0
    %4049 = vmatpush1.msra.mxu0 0.0
    %4050 = vmatprep.subr.mxu0 0.0
    %4051 = vmatpush1.msra.mxu0 0.0
    %4052 = vmatprep.subr.mxu0 0.0
    %4053 = vmatpush1.msra.mxu0 0.0
    %4054 = vmatprep.subr.mxu0 0.0
    %4055 = vmatpush1.msra.mxu0 0.0
    %4056 = vmatprep.subr.mxu0 0.0
    %4057 = vmatpush1.msra.mxu0 0.0
    %4058 = vmatprep.subr.mxu0 0.0
    %4059 = vmatpush1.msra.mxu0 0.0
    %4060 = vmatprep.mubr.f32.mxu0 0.0
    %v4061 = vand.u32 %v156, 4294901760
    %v4062 = vsub.f32 %v156, %v4061
    %4063 = vmatmul.mubr.f32.gmra.mrb[0].mxu0 %v4062
    %v4064 = vpop.f32.mrb[0].mxu0
    %v4065 = vadd.f32 %v3991, %v4064
    %v4066 = vpop.f32.mrb[0].mxu0
    %4067 = vdwg.mxu0
    %4068 = vmatprep.subr.mxu0 0.0
    %v4069 = vand.u32 %v3227, 4294901760
    %4070 = vmatpush1.msra.mxu0 %v4069
    %4071 = vmatprep.subr.mxu0 0.0
    %4072 = vmatpush1.msra.mxu0 0.0
    %4073 = vmatprep.subr.mxu0 0.0
    %4074 = vmatpush1.msra.mxu0 0.0
    %4075 = vmatprep.subr.mxu0 0.0
    %4076 = vmatpush1.msra.mxu0 0.0
    %4077 = vmatprep.subr.mxu0 0.0
    %4078 = vmatpush1.msra.mxu0 0.0
    %4079 = vmatprep.subr.mxu0 0.0
    %4080 = vmatpush1.msra.mxu0 0.0
    %4081 = vmatprep.subr.mxu0 0.0
    %4082 = vmatpush1.msra.mxu0 0.0
    %4083 = vmatprep.subr.mxu0 0.0
    %4084 = vmatpush1.msra.mxu0 0.0
    %4085 = vmatprep.subr.mxu0 0.0
    %4086 = vmatpush1.msra.mxu0 0.0
    %4087 = vmatprep.subr.mxu0 0.0
    %4088 = vmatpush1.msra.mxu0 0.0
    %4089 = vmatprep.subr.mxu0 0.0
    %4090 = vmatpush1.msra.mxu0 0.0
    %4091 = vmatprep.subr.mxu0 0.0
    %4092 = vmatpush1.msra.mxu0 0.0
    %4093 = vmatprep.subr.mxu0 0.0
    %4094 = vmatpush1.msra.mxu0 0.0
    %4095 = vmatprep.subr.mxu0 0.0
    %4096 = vmatpush1.msra.mxu0 0.0
    %4097 = vmatprep.subr.mxu0 0.0
    %4098 = vmatpush1.msra.mxu0 0.0
    %4099 = vmatprep.subr.mxu0 0.0
    %4100 = vmatpush1.msra.mxu0 0.0
    %4101 = vmatprep.subr.mxu0 0.0
    %4102 = vmatpush1.msra.mxu0 0.0
    %4103 = vmatprep.subr.mxu0 0.0
    %4104 = vmatpush1.msra.mxu0 0.0
    %4105 = vmatprep.subr.mxu0 0.0
    %4106 = vmatpush1.msra.mxu0 0.0
    %4107 = vmatprep.subr.mxu0 0.0
    %4108 = vmatpush1.msra.mxu0 0.0
    %4109 = vmatprep.subr.mxu0 0.0
    %4110 = vmatpush1.msra.mxu0 0.0
    %4111 = vmatprep.subr.mxu0 0.0
    %4112 = vmatpush1.msra.mxu0 0.0
    %4113 = vmatprep.subr.mxu0 0.0
    %4114 = vmatpush1.msra.mxu0 0.0
    %4115 = vmatprep.subr.mxu0 0.0
    %4116 = vmatpush1.msra.mxu0 0.0
    %4117 = vmatprep.subr.mxu0 0.0
    %4118 = vmatpush1.msra.mxu0 0.0
    %4119 = vmatprep.subr.mxu0 0.0
    %4120 = vmatpush1.msra.mxu0 0.0
    %4121 = vmatprep.subr.mxu0 0.0
    %4122 = vmatpush1.msra.mxu0 0.0
    %4123 = vmatprep.subr.mxu0 0.0
    %4124 = vmatpush1.msra.mxu0 0.0
    %4125 = vmatprep.subr.mxu0 0.0
    %4126 = vmatpush1.msra.mxu0 0.0
    %4127 = vmatprep.subr.mxu0 0.0
    %4128 = vmatpush1.msra.mxu0 0.0
    %4129 = vmatprep.subr.mxu0 0.0
    %4130 = vmatpush1.msra.mxu0 0.0
    %4131 = vmatprep.subr.mxu0 0.0
    %4132 = vmatpush1.msra.mxu0 0.0
    %4133 = vmatprep.mubr.f32.mxu0 0.0
    %v4134 = vand.u32 %v156, 4294901760
    %v4135 = vsub.f32 %v156, %v4134
    %v4136 = vand.u32 %v4135, 4294901760
    %4137 = vmatmul.mubr.f32.gmra.mrb[0].mxu0 %v4136
    %v4138 = vpop.f32.mrb[0].mxu0
    %v4139 = vadd.f32 %v4065, %v4138
    %v4140 = vpop.f32.mrb[0].mxu0
    %4141 = vdwg.mxu0
    %4142 = vmatprep.subr.mxu0 0.0
    %v4143 = vand.u32 %v3227, 4294901760
    %v4144 = vsub.f32 %v3227, %v4143
    %v4145 = vand.u32 %v4144, 4294901760
    %4146 = vmatpush1.msra.mxu0 %v4145
    %4147 = vmatprep.subr.mxu0 0.0
    %4148 = vmatpush1.msra.mxu0 0.0
    %4149 = vmatprep.subr.mxu0 0.0
    %4150 = vmatpush1.msra.mxu0 0.0
    %4151 = vmatprep.subr.mxu0 0.0
    %4152 = vmatpush1.msra.mxu0 0.0
    %4153 = vmatprep.subr.mxu0 0.0
    %4154 = vmatpush1.msra.mxu0 0.0
    %4155 = vmatprep.subr.mxu0 0.0
    %4156 = vmatpush1.msra.mxu0 0.0
    %4157 = vmatprep.subr.mxu0 0.0
    %4158 = vmatpush1.msra.mxu0 0.0
    %4159 = vmatprep.subr.mxu0 0.0
    %4160 = vmatpush1.msra.mxu0 0.0
    %4161 = vmatprep.subr.mxu0 0.0
    %4162 = vmatpush1.msra.mxu0 0.0
    %4163 = vmatprep.subr.mxu0 0.0
    %4164 = vmatpush1.msra.mxu0 0.0
    %4165 = vmatprep.subr.mxu0 0.0
    %4166 = vmatpush1.msra.mxu0 0.0
    %4167 = vmatprep.subr.mxu0 0.0
    %4168 = vmatpush1.msra.mxu0 0.0
    %4169 = vmatprep.subr.mxu0 0.0
    %4170 = vmatpush1.msra.mxu0 0.0
    %4171 = vmatprep.subr.mxu0 0.0
    %4172 = vmatpush1.msra.mxu0 0.0
    %4173 = vmatprep.subr.mxu0 0.0
    %4174 = vmatpush1.msra.mxu0 0.0
    %4175 = vmatprep.subr.mxu0 0.0
    %4176 = vmatpush1.msra.mxu0 0.0
    %4177 = vmatprep.subr.mxu0 0.0
    %4178 = vmatpush1.msra.mxu0 0.0
    %4179 = vmatprep.subr.mxu0 0.0
    %4180 = vmatpush1.msra.mxu0 0.0
    %4181 = vmatprep.subr.mxu0 0.0
    %4182 = vmatpush1.msra.mxu0 0.0
    %4183 = vmatprep.subr.mxu0 0.0
    %4184 = vmatpush1.msra.mxu0 0.0
    %4185 = vmatprep.subr.mxu0 0.0
    %4186 = vmatpush1.msra.mxu0 0.0
    %4187 = vmatprep.subr.mxu0 0.0
    %4188 = vmatpush1.msra.mxu0 0.0
    %4189 = vmatprep.subr.mxu0 0.0
    %4190 = vmatpush1.msra.mxu0 0.0
    %4191 = vmatprep.subr.mxu0 0.0
    %4192 = vmatpush1.msra.mxu0 0.0
    %4193 = vmatprep.subr.mxu0 0.0
    %4194 = vmatpush1.msra.mxu0 0.0
    %4195 = vmatprep.subr.mxu0 0.0
    %4196 = vmatpush1.msra.mxu0 0.0
    %4197 = vmatprep.subr.mxu0 0.0
    %4198 = vmatpush1.msra.mxu0 0.0
    %4199 = vmatprep.subr.mxu0 0.0
    %4200 = vmatpush1.msra.mxu0 0.0
    %4201 = vmatprep.subr.mxu0 0.0
    %4202 = vmatpush1.msra.mxu0 0.0
    %4203 = vmatprep.subr.mxu0 0.0
    %4204 = vmatpush1.msra.mxu0 0.0
    %4205 = vmatprep.subr.mxu0 0.0
    %4206 = vmatpush1.msra.mxu0 0.0
    %4207 = vmatprep.subr.mxu0 0.0
    %4208 = vmatpush1.msra.mxu0 0.0
    %4209 = vmatprep.mubr.f32.mxu0 0.0
    %v4210 = vand.u32 %v156, 4294901760
    %4211 = vmatmul.mubr.f32.gmra.mrb[0].mxu0 %v4210
    %v4212 = vpop.f32.mrb[0].mxu0
    %v4213 = vadd.f32 %v4139, %v4212
    %v4214 = vpop.f32.mrb[0].mxu0
    %4215 = vdwg.mxu0
    %4216 = vmatprep.subr.mxu0 0.0
    %v4217 = vand.u32 %v3227, 4294901760
    %4218 = vmatpush1.msra.mxu0 %v4217
    %4219 = vmatprep.subr.mxu0 0.0
    %4220 = vmatpush1.msra.mxu0 0.0
    %4221 = vmatprep.subr.mxu0 0.0
    %4222 = vmatpush1.msra.mxu0 0.0
    %4223 = vmatprep.subr.mxu0 0.0
    %4224 = vmatpush1.msra.mxu0 0.0
    %4225 = vmatprep.subr.mxu0 0.0
    %4226 = vmatpush1.msra.mxu0 0.0
    %4227 = vmatprep.subr.mxu0 0.0
    %4228 = vmatpush1.msra.mxu0 0.0
    %4229 = vmatprep.subr.mxu0 0.0
    %4230 = vmatpush1.msra.mxu0 0.0
    %4231 = vmatprep.subr.mxu0 0.0
    %4232 = vmatpush1.msra.mxu0 0.0
    %4233 = vmatprep.subr.mxu0 0.0
    %4234 = vmatpush1.msra.mxu0 0.0
    %4235 = vmatprep.subr.mxu0 0.0
    %4236 = vmatpush1.msra.mxu0 0.0
    %4237 = vmatprep.subr.mxu0 0.0
    %4238 = vmatpush1.msra.mxu0 0.0
    %4239 = vmatprep.subr.mxu0 0.0
    %4240 = vmatpush1.msra.mxu0 0.0
    %4241 = vmatprep.subr.mxu0 0.0
    %4242 = vmatpush1.msra.mxu0 0.0
    %4243 = vmatprep.subr.mxu0 0.0
    %4244 = vmatpush1.msra.mxu0 0.0
    %4245 = vmatprep.subr.mxu0 0.0
    %4246 = vmatpush1.msra.mxu0 0.0
    %4247 = vmatprep.subr.mxu0 0.0
    %4248 = vmatpush1.msra.mxu0 0.0
    %4249 = vmatprep.subr.mxu0 0.0
    %4250 = vmatpush1.msra.mxu0 0.0
    %4251 = vmatprep.subr.mxu0 0.0
    %4252 = vmatpush1.msra.mxu0 0.0
    %4253 = vmatprep.subr.mxu0 0.0
    %4254 = vmatpush1.msra.mxu0 0.0
    %4255 = vmatprep.subr.mxu0 0.0
    %4256 = vmatpush1.msra.mxu0 0.0
    %4257 = vmatprep.subr.mxu0 0.0
    %4258 = vmatpush1.msra.mxu0 0.0
    %4259 = vmatprep.subr.mxu0 0.0
    %4260 = vmatpush1.msra.mxu0 0.0
    %4261 = vmatprep.subr.mxu0 0.0
    %4262 = vmatpush1.msra.mxu0 0.0
    %4263 = vmatprep.subr.mxu0 0.0
    %4264 = vmatpush1.msra.mxu0 0.0
    %4265 = vmatprep.subr.mxu0 0.0
    %4266 = vmatpush1.msra.mxu0 0.0
    %4267 = vmatprep.subr.mxu0 0.0
    %4268 = vmatpush1.msra.mxu0 0.0
    %4269 = vmatprep.subr.mxu0 0.0
    %4270 = vmatpush1.msra.mxu0 0.0
    %4271 = vmatprep.subr.mxu0 0.0
    %4272 = vmatpush1.msra.mxu0 0.0
    %4273 = vmatprep.subr.mxu0 0.0
    %4274 = vmatpush1.msra.mxu0 0.0
    %4275 = vmatprep.subr.mxu0 0.0
    %4276 = vmatpush1.msra.mxu0 0.0
    %4277 = vmatprep.subr.mxu0 0.0
    %4278 = vmatpush1.msra.mxu0 0.0
    %4279 = vmatprep.subr.mxu0 0.0
    %4280 = vmatpush1.msra.mxu0 0.0
    %4281 = vmatprep.mubr.f32.mxu0 0.0
    %v4282 = vand.u32 %v156, 4294901760
    %4283 = vmatmul.mubr.f32.gmra.mrb[0].mxu0 %v4282
    %v4284 = vpop.f32.mrb[0].mxu0
    %v4285 = vadd.f32 %v4213, %v4284
    %v4286 = vpop.f32.mrb[0].mxu0
    %4287 = vdwg.mxu0
    %v4288 = vmul.f32 %v3841, %v4285
    %v4289 = vadd.f32 %v3675, %v4288
    %v4291 = vcombine.high %v3831, %v3831
    %v4293 = vunpack.c.l.s4 1966171168
    %v4294 = vunpack.c.0.s8 %v4293
    %v4295 = vlaneseq
    %v4296 = vshrl.u32 %v4295, 7
    %v4297 = vsub.s32 %v4294, %v4296
    %v4298 = vrot.slane %v3831, %v4297
    %v4300 = vunpack.c.l.s4 1966171168
    %v4301 = vunpack.c.0.s8 %v4300
    %v4302 = vlaneseq
    %v4303 = vshrl.u32 %v4302, 7
    %v4304 = vsub.s32 %v4301, %v4303
    %v4305 = vrot.slane %v4291, %v4304
    %v4306 = vcombine.high %v4298, %v4298
    %v4307 = vcombine.high %v4305, %v4305
    %v4309 = vunpack.c.l.s4 1966171168
    %v4310 = vunpack.c.0.s8 %v4309
    %v4311 = vlaneseq
    %v4312 = vshrl.u32 %v4311, 7
    %v4313 = vsub.s32 %v4310, %v4312
    %v4314 = vrot.slane %v4298, %v4313
    %v4316 = vunpack.c.l.s4 1966171168
    %v4317 = vunpack.c.0.s8 %v4316
    %v4318 = vlaneseq
    %v4319 = vshrl.u32 %v4318, 7
    %v4320 = vsub.s32 %v4317, %v4319
    %v4321 = vrot.slane %v4305, %v4320
    %v4323 = vunpack.c.l.s4 1966171168
    %v4324 = vunpack.c.0.s8 %v4323
    %v4325 = vlaneseq
    %v4326 = vshrl.u32 %v4325, 7
    %v4327 = vsub.s32 %v4324, %v4326
    %v4328 = vrot.slane %v4306, %v4327
    %v4330 = vunpack.c.l.s4 1966171168
    %v4331 = vunpack.c.0.s8 %v4330
    %v4332 = vlaneseq
    %v4333 = vshrl.u32 %v4332, 7
    %v4334 = vsub.s32 %v4331, %v4333
    %v4335 = vrot.slane %v4307, %v4334
    %v4336 = vcombine.high %v4314, %v4314
    %v4337 = vcombine.high %v4321, %v4321
    %v4338 = vcombine.high %v4328, %v4328
    %v4339 = vcombine.high %v4335, %v4335
    %v4340 = vlaneseq
    %v4341 = vshrl.u32 %v4340, 7
    %v4342 = vsub.s32 0, %v4341
    %v4343 = vrot.slane %v4314, %v4342
    %v4344 = vlaneseq
    %v4345 = vshrl.u32 %v4344, 7
    %v4346 = vsub.s32 0, %v4345
    %v4347 = vrot.slane %v4328, %v4346
    %v4348 = vlaneseq
    %v4349 = vshrl.u32 %v4348, 7
    %v4350 = vsub.s32 0, %v4349
    %v4351 = vrot.slane %v4336, %v4350
    %v4352 = vlaneseq
    %v4353 = vshrl.u32 %v4352, 7
    %v4354 = vsub.s32 0, %v4353
    %v4355 = vrot.slane %v4338, %v4354
    %v4356 = vlaneseq
    %v4357 = vshrl.u32 %v4356, 7
    %v4358 = vsub.s32 0, %v4357
    %v4359 = vrot.slane %v4321, %v4358
    %v4360 = vlaneseq
    %v4361 = vshrl.u32 %v4360, 7
    %v4362 = vsub.s32 0, %v4361
    %v4363 = vrot.slane %v4335, %v4362
    %v4364 = vlaneseq
    %v4365 = vshrl.u32 %v4364, 7
    %v4366 = vsub.s32 0, %v4365
    %v4367 = vrot.slane %v4337, %v4366
    %v4368 = vlaneseq
    %v4369 = vshrl.u32 %v4368, 7
    %v4370 = vsub.s32 0, %v4369
    %v4371 = vrot.slane %v4339, %v4370
    %v4380 = vadd.f32 %v4343, %v78
    %v4381 = vadd.f32 %v4347, %v85
    %v4382 = vadd.f32 %v4351, %v92
    %v4383 = vadd.f32 %v4355, %v99
    %v4384 = vadd.f32 %v4359, %v106
    %v4385 = vadd.f32 %v4363, %v113
    %v4386 = vadd.f32 %v4367, %v120
    %v4387 = vadd.f32 %v4371, %v127
    %v4388 = vsel %vm154, %v4380, -inf
    %v4389 = vsel %vm154, %v4381, -inf
    %v4390 = vsel %vm154, %v4382, -inf
    %v4391 = vsel %vm154, %v4383, -inf
    %v4392 = vsel %vm154, %v4384, -inf
    %v4393 = vmax.f32 %v4388, %v4392
    %v4394 = vsel %vm154, %v4385, -inf
    %v4395 = vmax.f32 %v4389, %v4394
    %v4396 = vsel %vm154, %v4386, -inf
    %v4397 = vmax.f32 %v4390, %v4396
    %v4398 = vsel %vm154, %v4387, -inf
    %v4399 = vmax.f32 %v4391, %v4398
    %v4400 = vmax.f32 %v4393, %v4395
    %v4401 = vmax.f32 %v4397, %v4399
    %v4402 = vmax.f32 %v4400, %v4401
    %v4403 = vsub.f32 %v4380, %v4402
    %v4404 = vsub.f32 %v4381, %v4402
    %v4405 = vsub.f32 %v4382, %v4402
    %v4406 = vsub.f32 %v4383, %v4402
    %v4407 = vsub.f32 %v4384, %v4402
    %v4408 = vsub.f32 %v4385, %v4402
    %v4409 = vsub.f32 %v4386, %v4402
    %v4410 = vsub.f32 %v4387, %v4402
    %v4411 = vmul.f32 %v4403, 1.442695
    %v4412 = vpow.pop %v4411
    %v4413 = vmul.f32 %v4404, 1.442695
    %v4414 = vpow.pop %v4413
    %v4415 = vmul.f32 %v4405, 1.442695
    %v4416 = vpow.pop %v4415
    %v4417 = vmul.f32 %v4406, 1.442695
    %v4418 = vpow.pop %v4417
    %v4419 = vmul.f32 %v4407, 1.442695
    %v4420 = vpow.pop %v4419
    %v4421 = vmul.f32 %v4408, 1.442695
    %v4422 = vpow.pop %v4421
    %v4423 = vmul.f32 %v4409, 1.442695
    %v4424 = vpow.pop %v4423
    %v4425 = vmul.f32 %v4410, 1.442695
    %v4426 = vpow.pop %v4425
    %v4427 = vsel %vm154, %v4412, 0.0
    %v4428 = vsel %vm154, %v4414, 0.0
    %v4429 = vadd.f32 %v4427, %v4428
    %v4430 = vsel %vm154, %v4416, 0.0
    %v4431 = vadd.f32 %v4429, %v4430
    %v4432 = vsel %vm154, %v4418, 0.0
    %v4433 = vadd.f32 %v4431, %v4432
    %v4434 = vsel %vm154, %v4420, 0.0
    %v4435 = vadd.f32 %v4433, %v4434
    %v4436 = vsel %vm154, %v4422, 0.0
    %v4437 = vadd.f32 %v4435, %v4436
    %v4438 = vsel %vm154, %v4424, 0.0
    %v4439 = vadd.f32 %v4437, %v4438
    %v4440 = vsel %vm154, %v4426, 0.0
    %v4441 = vadd.f32 %v4439, %v4440
    %v4442 = vlog2.pop %v4441
    %v4443 = vmul.f32 %v4442, 0.6931472
    %v4444 = vadd.f32 %v4402, %v4443
    %v4445 = vadd.f32 %v4444, %v3833
    %4447 = vset.pattern.permute.xlu0 0
    %4448 = vperm.xlu0 %4447, %v37
    %v4449 = vpop.permute.xlu0 %4448
    %v4451 = vmul.f32 %v3841, %v4449
    %v4452 = vadd.f32 %v4289, %v4451
    %v4453 = vsel %vm154, %v4452, 0.0
    %v4454 = vrot.slane %v4453, 4
    %v4455 = vadd.f32 %v4453, %v4454
    %v4456 = vrot.slane %v4455, 2
    %v4457 = vadd.f32 %v4455, %v4456
    %v4458 = vrot.slane %v4457, 1
    %v4459 = vadd.f32 %v4457, %v4458
    %v4460 = vadd.f32 %v4445, %v4449
    %v4461 = vsel %vm154, %v4460, -inf
    %v4462 = vrot.slane %v4461, 4
    %v4463 = vmax.f32 %v4461, %v4462
    %v4464 = vrot.slane %v4463, 2
    %v4465 = vmax.f32 %v4463, %v4464
    %v4466 = vrot.slane %v4465, 1
    %v4467 = vmax.f32 %v4465, %v4466
    %v4468 = vsub.f32 %v4460, %v4467
    %v4469 = vmul.f32 %v4468, 1.442695
    %v4470 = vpow.pop %v4469
    %v4471 = vsel %vm154, %v4470, 0.0
    %v4472 = vrot.slane %v4471, 4
    %v4473 = vadd.f32 %v4471, %v4472
    %v4474 = vrot.slane %v4473, 2
    %v4475 = vadd.f32 %v4473, %v4474
    %v4476 = vrot.slane %v4475, 1
    %v4477 = vadd.f32 %v4475, %v4476
    %v4478 = vlog2.pop %v4477
    %v4479 = vmul.f32 %v4478, 0.6931472
    %v4480 = vadd.f32 %v4467, %v4479
    %v4481 = vsub.f32 %v4480, %v4459
    %vm4482 = vcmask 57344
    %4483 = vst.msk [vmem:[#allocation5] sm:$0x1] %vm4482, %v4481
    // Predicated region
    $region26: #{tpu_custom_call.1} parent=1 // pred_check
      _
    $region27: #{tpu_custom_call.1} parent=1 // pred_check_branch
      %4485 = sbr.rel (0) target = $region29
    $region28: #{tpu_custom_call.1} parent=1 // pred_region
      %s4487 = ssub.s32 16, 16
      %4488 = vsyncadd [#allocation4], %s4487
      %s4490 = sshll.u32 [#allocation5], 4
      %s4491 = int_to_ptr.vmem [resolvable:$true] %s4490
      %4493 = dma.vmem_to_hbm [thread:$0]  %s4491, 16, %s5, [#allocation4]
    $region29: #{tpu_custom_call.1} parent=1 // pred_fallthru
      _
    // Predicated region
    $region30: #{tpu_custom_call.1} parent=1 // pred_check
      _
    $region31: #{tpu_custom_call.1} parent=1 // pred_check_branch
      %4495 = sbr.rel (0) target = $region33
    $region32: #{tpu_custom_call.1} parent=1 // pred_region
      %4496 = dma.done [#allocation4], 16
    $region33: #{tpu_custom_call.1} parent=1 // pred_fallthru
      _
    %4497 = vsyncpa [#allocation3], 1
    %4498 = vsyncpa [#allocation4], 1

</llo_original>
